<compile_context>
chip_gen: v5e
topology: v5e:2x2
jax: 0.10.0
libtpu: 0.0.40
codegen_flags: <defaults>
</compile_context>

<pallas_src>
import functools
import math

import jax
import jax.numpy as jnp
from jax.experimental import pallas as pl
from jax.experimental.pallas import tpu as pltpu


ROW_TILE_TARGET = 256                       # token rows per block for the matmul kernels
VMEM_LIMIT_BYTES = 48 * 1024 * 1024         # > default scoped VMEM, < 64 MiB v7x physical

_MOSAIC_1D_PARALLEL = pltpu.CompilerParams(
    dimension_semantics=("parallel",), vmem_limit_bytes=VMEM_LIMIT_BYTES)


def _pick_row_tile(rows, target=ROW_TILE_TARGET):
    """Largest tile <= target that divides `rows`.

    Multiples of 16 keep both f32 (8,128) and bf16 (16,128) tilings legal for
    the row-tiled blocks; if nothing divides we fall back to the full extent
    (always legal)."""
    if rows <= target:
        return rows
    t = (target // 16) * 16
    while t >= 16:
        if rows % t == 0:
            return t
        t -= 16
    return rows   # single full block fallback


# ----------------------------------------------------------------------------
# In-kernel helpers
# ----------------------------------------------------------------------------
def _erf(x):
    # Abramowitz & Stegun 7.1.26 polynomial erf (abs err ~1.5e-7, f32-level).
    a1, a2, a3, a4, a5 = 0.254829592, -0.284496736, 1.421413741, -1.453152027, 1.061405429
    p = 0.3275911
    sign = jnp.where(x >= 0.0, 1.0, -1.0)
    ax = jnp.abs(x)
    t = 1.0 / (1.0 + p * ax)
    poly = ((((a5 * t + a4) * t + a3) * t + a2) * t + a1) * t
    return sign * (1.0 - poly * jnp.exp(-ax * ax))


def _gelu_exact(x):
    # nn.GELU default (exact, erf-based)
    return 0.5 * x * (1.0 + _erf(x * 0.7071067811865476))


def _softmax_lanes(x):
    # softmax over the last (lane) axis; divide goes to the EUP via reciprocal
    m = jnp.max(x, axis=-1, keepdims=True)
    e = jnp.exp(x - m)
    return e * pl.reciprocal(jnp.sum(e, axis=-1, keepdims=True), approx=True)


def _softmax_sublanes(x):
    # softmax over axis 0 (sublane axis) of a 2-D tile
    m = jnp.max(x, axis=0, keepdims=True)
    e = jnp.exp(x - m)
    return e * pl.reciprocal(jnp.sum(e, axis=0, keepdims=True), approx=True)


def _layernorm(x, g, b):
    mu = jnp.mean(x, axis=-1, keepdims=True)
    xc = x - mu
    var = jnp.mean(xc * xc, axis=-1, keepdims=True)
    return xc * jax.lax.rsqrt(var + 1e-5) * g + b


# ----------------------------------------------------------------------------
# Pallas kernels
# ----------------------------------------------------------------------------
def _ln_qkv_kernel(x_ref, g_ref, b_ref, wq_ref, wk_ref, wv_ref,
                   q_ref, k_ref, v_ref):
    xn = _layernorm(x_ref[...], g_ref[...], b_ref[...]).astype(jnp.bfloat16)
    q_ref[...] = jnp.dot(xn, wq_ref[...],
                         preferred_element_type=jnp.float32).astype(jnp.bfloat16)
    k_ref[...] = jnp.dot(xn, wk_ref[...],
                         preferred_element_type=jnp.float32).astype(jnp.bfloat16)
    v_ref[...] = jnp.dot(xn, wv_ref[...],
                         preferred_element_type=jnp.float32).astype(jnp.bfloat16)


def _dwconv_kernel(xp_ref, w_ref, b_ref, o_ref, *, H, W):
    xp = xp_ref[...].astype(jnp.float32)               # (1, H+2, W+2, C)
    wgt = w_ref[...]                                   # (3, 3, C) f32
    # init accumulator from the (0,0) tap + bias (saves two full-size adds)
    acc = xp[:, 0:H, 0:W, :] * wgt[0, 0, :] + b_ref[...]
    for ky in range(3):
        for kx in range(3):
            if ky == 0 and kx == 0:
                continue
            acc = acc + xp[:, ky:ky + H, kx:kx + W, :] * wgt[ky, kx, :]
    o_ref[...] = acc.astype(o_ref.dtype)


def _attn_proj_kernel(q_ref, k_ref, v_ref, conv_ref, xin_ref, pool_ref,
                      b1_ref, b2t_ref, pw_ref, pb_ref, o_ref,
                      *, num_heads, head_dim):
    q = q_ref[0]          # (N, C) bf16 -- sqrt(scale) already folded into q and k
    k = k_ref[0]          # (N, C) bf16
    v = v_ref[0]          # (N, C) bf16

    # AdaptiveAvgPool2d of q as a (FN, N) @ (N, C) MXU matmul (pooling matrix
    # has 1/window_area entries); fused tokens inherit sqrt(scale) by linearity.
    ft = jnp.dot(pool_ref[...], q,
                 preferred_element_type=jnp.float32).astype(jnp.bfloat16)  # (FN, C)

    outs = []
    for hh in range(num_heads):               # statically unrolled over heads
        lo = hh * head_dim
        hi = lo + head_dim
        qh = q[:, lo:hi]                          # (N, HD)
        kh = k[:, lo:hi]                          # (N, HD)
        vh = v[:, lo:hi]                          # (N, HD)
        fth = ft[:, lo:hi]                        # (FN, HD)
        b1 = b1_ref[hh]                           # (FN, N) bf16
        b2t = b2t_ref[hh]                         # (FN, N) bf16

        # stage 1: fused tokens attend to all tokens (softmax over lanes, N)
        s1 = jax.lax.dot_general(fth, kh, (((1,), (1,)), ((), ())),
                                 preferred_element_type=jnp.float32) + b1
        a1 = _softmax_lanes(s1)
        fused_v = jnp.dot(a1.astype(jnp.bfloat16), vh,
                          preferred_element_type=jnp.float32)            # (FN, HD)

        # stage 2, computed transposed: (FN, N) so softmax over FN runs on
        # sublanes instead of a narrow lane axis.
        s2t = jax.lax.dot_general(fth, qh, (((1,), (1,)), ((), ())),
                                  preferred_element_type=jnp.float32) + b2t
        a2t = _softmax_sublanes(s2t)                                      # (FN, N)
        out_h = jax.lax.dot_general(a2t.astype(jnp.bfloat16),
                                    fused_v.astype(jnp.bfloat16),
                                    (((0,), (0,)), ((), ())),
                                    preferred_element_type=jnp.float32)   # (N, HD)
        outs.append(out_h)

    attn = jnp.concatenate(outs, axis=-1)                                 # (N, C) f32
    # proj(attn + dwconv(v)) + bias + residual, all fused -> single lane-dense
    # (N, C) store and no HBM round-trip of the attention output.
    y = (attn + conv_ref[0].astype(jnp.float32)).astype(jnp.bfloat16)
    o_ref[0] = (jnp.dot(y, pw_ref[...], preferred_element_type=jnp.float32)
                + pb_ref[...] + xin_ref[0])


def _ln_mlp_kernel(x_ref, g_ref, b_ref, w1_ref, b1_ref, w2_ref, b2_ref, o_ref):
    x = x_ref[...]
    xn = _layernorm(x, g_ref[...], b_ref[...])
    h = jnp.dot(xn.astype(jnp.bfloat16), w1_ref[...],
                preferred_element_type=jnp.float32) + b1_ref[...]
    h = _gelu_exact(h)
    o_ref[...] = (jnp.dot(h.astype(jnp.bfloat16), w2_ref[...],
                          preferred_element_type=jnp.float32)
                  + b2_ref[...] + x)


# ----------------------------------------------------------------------------
# Pallas wrappers (row-tiled / per-batch, parallel grids)
# ----------------------------------------------------------------------------
def ln_qkv(x2, g2, b2, wq, wk, wv):
    rows, c = x2.shape
    tm = _pick_row_tile(rows)
    spec_rows = pl.BlockSpec((tm, c), lambda i: (i, 0))
    spec_vec = pl.BlockSpec((1, c), lambda i: (0, 0))
    spec_w = pl.BlockSpec((c, c), lambda i: (0, 0))
    out_sds = jax.ShapeDtypeStruct((rows, c), jnp.bfloat16)
    return pl.pallas_call(
        _ln_qkv_kernel,
        grid=(rows // tm,),
        in_specs=[spec_rows, spec_vec, spec_vec, spec_w, spec_w, spec_w],
        out_specs=(spec_rows, spec_rows, spec_rows),
        out_shape=(out_sds, out_sds, out_sds),
        compiler_params=_MOSAIC_1D_PARALLEL,
    )(x2, g2, b2, wq, wk, wv)


def dwconv3x3(x_nhwc, w, bias4):
    # TODO(synk): fold the jnp.pad into the kernel and row-tile H for very large
    # images (v7x 64 MiB VMEM); at these shapes the whole image fits comfortably.
    b, H, W, C = x_nhwc.shape
    xp = jnp.pad(x_nhwc, ((0, 0), (1, 1), (1, 1), (0, 0)))
    kern = functools.partial(_dwconv_kernel, H=H, W=W)
    return pl.pallas_call(
        kern,
        grid=(b,),
        in_specs=[
            pl.BlockSpec((1, H + 2, W + 2, C), lambda i: (i, 0, 0, 0)),
            pl.BlockSpec((3, 3, C), lambda i: (0, 0, 0)),
            pl.BlockSpec((1, 1, 1, C), lambda i: (0, 0, 0, 0)),
        ],
        out_specs=pl.BlockSpec((1, H, W, C), lambda i: (i, 0, 0, 0)),
        out_shape=jax.ShapeDtypeStruct((b, H, W, C), jnp.bfloat16),
        compiler_params=_MOSAIC_1D_PARALLEL,
    )(xp, w, bias4)


def attention_proj(q, k, v, conv, xin, pool, bias1, bias2t, pw, pb, *, num_heads):
    b, n, c = q.shape
    fn = pool.shape[0]
    nh = num_heads
    kern = functools.partial(_attn_proj_kernel,
                             num_heads=num_heads, head_dim=c // num_heads)
    tok_spec = pl.BlockSpec((1, n, c), lambda i: (i, 0, 0))
    return pl.pallas_call(
        kern,
        grid=(b,),
        in_specs=[
            tok_spec,                                          # q
            tok_spec,                                          # k
            tok_spec,                                          # v
            tok_spec,                                          # dwconv(v)
            tok_spec,                                          # residual x
            pl.BlockSpec((fn, n), lambda i: (0, 0)),           # pooling matrix
            pl.BlockSpec((nh, fn, n), lambda i: (0, 0, 0)),    # bias1
            pl.BlockSpec((nh, fn, n), lambda i: (0, 0, 0)),    # bias2 (transposed)
            pl.BlockSpec((c, c), lambda i: (0, 0)),            # proj W
            pl.BlockSpec((1, c), lambda i: (0, 0)),            # proj b
        ],
        out_specs=tok_spec,
        out_shape=jax.ShapeDtypeStruct((b, n, c), jnp.float32),
        compiler_params=_MOSAIC_1D_PARALLEL,
    )(q, k, v, conv, xin, pool, bias1, bias2t, pw, pb)


def ln_mlp_residual(x2, g2, b2, w1_bf16, b1_2, w2_bf16, b2_2):
    rows, c = x2.shape
    hidden = w1_bf16.shape[1]
    tm = _pick_row_tile(rows)
    return pl.pallas_call(
        _ln_mlp_kernel,
        grid=(rows // tm,),
        in_specs=[
            pl.BlockSpec((tm, c), lambda i: (i, 0)),
            pl.BlockSpec((1, c), lambda i: (0, 0)),
            pl.BlockSpec((1, c), lambda i: (0, 0)),
            pl.BlockSpec((c, hidden), lambda i: (0, 0)),
            pl.BlockSpec((1, hidden), lambda i: (0, 0)),
            pl.BlockSpec((hidden, c), lambda i: (0, 0)),
            pl.BlockSpec((1, c), lambda i: (0, 0)),
        ],
        out_specs=pl.BlockSpec((tm, c), lambda i: (i, 0)),
        out_shape=jax.ShapeDtypeStruct((rows, c), jnp.float32),
        compiler_params=_MOSAIC_1D_PARALLEL,
    )(x2, g2, b2, w1_bf16, b1_2, w2_bf16, b2_2)


# ----------------------------------------------------------------------------
# Plain-JAX glue (parameter-only; runs once in prepare_params)
# ----------------------------------------------------------------------------
def _resize_axis_weights(in_size, out_size):
    i = jnp.arange(out_size, dtype=jnp.float32)
    src = (i + 0.5) * (float(in_size) / float(out_size)) - 0.5
    src = jnp.clip(src, 0.0, float(in_size - 1))
    i0 = jnp.floor(src).astype(jnp.int32)
    i1 = jnp.minimum(i0 + 1, in_size - 1)
    w1 = src - i0.astype(jnp.float32)
    w0 = 1.0 - w1
    return i0, i1, w0, w1


def bilinear_resize(x, out_hw):
    # Matches F.interpolate(..., mode='bilinear', align_corners=False)
    H, W = x.shape[-2], x.shape[-1]
    oh, ow = out_hw
    i0, i1, wh0, wh1 = _resize_axis_weights(H, oh)
    xh = x[..., i0, :] * wh0[:, None] + x[..., i1, :] * wh1[:, None]
    j0, j1, ww0, ww1 = _resize_axis_weights(W, ow)
    return xh[..., j0] * ww0 + xh[..., j1] * ww1


def _pooling_matrix(h, w, fused_num):
    """(fused_num, h*w) matrix implementing AdaptiveAvgPool2d (uniform windows)."""
    ps = int(round(fused_num ** 0.5))
    wh, ww = h // ps, w // ps
    fy = jnp.arange(h, dtype=jnp.int32) // wh
    fx = jnp.arange(w, dtype=jnp.int32) // ww
    fidx = (fy[:, None] * ps + fx[None, :]).reshape(-1)            # (n,)
    onehot = (jnp.arange(fused_num, dtype=jnp.int32)[:, None] == fidx[None, :])
    return onehot.astype(jnp.float32) / float(wh * ww)


def prepare_params(raw, *, dim, num_heads, fused_num, window, n_tokens):
    """One-time conversion of module parameters into kernel-ready tensors."""
    hd = dim // num_heads
    scale = hd ** (-0.5)
    sqrt_scale = scale ** 0.5
    ww = window * window
    h = int(round(n_tokens ** 0.5))

    p = {}
    p["ln1_g"] = raw["ln1_g"].reshape(1, dim)
    p["ln1_b"] = raw["ln1_b"].reshape(1, dim)
    p["ln2_g"] = raw["ln2_g"].reshape(1, dim)
    p["ln2_b"] = raw["ln2_b"].reshape(1, dim)

    # fold sqrt(scale) into Q and K weight columns (exact: stage1 = scale*ft@k^T,
    # stage2 = scale*q@ft^T; fused tokens inherit the factor through pooling).
    qkv_w = raw["qkv_w"]                                   # (dim, 3*dim)
    p["wq"] = (qkv_w[:, :dim] * sqrt_scale).astype(jnp.bfloat16)
    p["wk"] = (qkv_w[:, dim:2 * dim] * sqrt_scale).astype(jnp.bfloat16)
    p["wv"] = qkv_w[:, 2 * dim:].astype(jnp.bfloat16)

    p["proj_w"] = raw["proj_w"].astype(jnp.bfloat16)
    p["proj_b"] = raw["proj_b"].reshape(1, dim)
    p["fc1_w"] = raw["fc1_w"].astype(jnp.bfloat16)
    p["fc1_b"] = raw["fc1_b"].reshape(1, -1)
    p["fc2_w"] = raw["fc2_w"].astype(jnp.bfloat16)
    p["fc2_b"] = raw["fc2_b"].reshape(1, dim)
    p["dwc_w"] = raw["dwc_w"]
    p["dwc_b"] = raw["dwc_b"].reshape(1, 1, 1, dim)

    # adaptive-avg-pool as a matmul inside the attention kernel
    p["pool"] = _pooling_matrix(h, h, fused_num).astype(jnp.bfloat16)      # (fn, n)

    # position bias for fused-token -> tokens attention (batch independent)
    pb1 = bilinear_resize(raw["an_bias"], (window, window)).reshape(num_heads, fused_num, ww)
    pb2 = (raw["ah_bias"] + raw["aw_bias"]).reshape(num_heads, fused_num, ww)
    p["bias1"] = bilinear_resize(pb1 + pb2, (fused_num, n_tokens)).astype(jnp.bfloat16)

    # position bias for tokens -> fused-token attention, stored transposed
    fb1 = bilinear_resize(raw["na_bias"], (window, window)).reshape(num_heads, fused_num, ww)
    fb1 = jnp.transpose(fb1, (0, 2, 1))                                    # (nh, ww, fn)
    fb2 = (raw["ha_bias"] + raw["wa_bias"]).reshape(num_heads, ww, fused_num)
    fb = jnp.concatenate([raw["ca_bias"].reshape(num_heads, 1, fused_num), fb1 + fb2], axis=1)
    bias2 = bilinear_resize(fb, (n_tokens, fused_num))                     # (nh, n, fn)
    p["bias2t"] = jnp.transpose(bias2, (0, 2, 1)).astype(jnp.bfloat16)     # (nh, fn, n)
    return p


# ----------------------------------------------------------------------------
# FusedBlock forward
# ----------------------------------------------------------------------------
def fused_block_forward(x, p, *, num_heads, fused_num, window):
    b, n, c = x.shape
    h = int(math.floor(n ** 0.5))
    w = h
    # TODO(synk): the PyTorch non-square-N fallback uses torch.randint token
    # resampling (runtime RNG); not implemented — we require h*w == n.
    assert h * w == n
    ps = int(math.floor(fused_num ** 0.5))
    assert ps * ps == fused_num and h % ps == 0

    rows = b * n
    x2 = x.reshape(rows, c)

    # ---- attention branch ----
    q2, k2, v2 = ln_qkv(x2, p["ln1_g"], p["ln1_b"], p["wq"], p["wk"], p["wv"])
    qb = q2.reshape(b, n, c)
    kb = k2.reshape(b, n, c)
    vb = v2.reshape(b, n, c)

    conv = dwconv3x3(vb.reshape(b, h, w, c), p["dwc_w"], p["dwc_b"])       # (b,h,w,c) bf16

    # attention (pooling + both softmax stages) + add conv + proj + residual,
    # all fused in one per-batch kernel
    x1 = attention_proj(qb, kb, vb, conv.reshape(b, n, c), x,
                        p["pool"], p["bias1"], p["bias2t"],
                        p["proj_w"], p["proj_b"], num_heads=num_heads)      # (b, n, c)

    # ---- MLP branch (LN2 + fc1 + GELU + fc2 + residual, fused) ----
    out = ln_mlp_residual(x1.reshape(rows, c), p["ln2_g"], p["ln2_b"],
                          p["fc1_w"], p["fc1_b"], p["fc2_w"], p["fc2_b"])
    return out.reshape(b, n, c)


# ----------------------------------------------------------------------------
# Deterministic synthetic parameter init (shapes follow the module __init__)
# ----------------------------------------------------------------------------
def init_params(key, dim, num_heads, fused_num, window, mlp_ratio=4.0):
    hidden = int(dim * mlp_ratio)
    ks = jax.random.split(key, 16)

    def nrm(k, shape, std=0.02):
        return std * jax.random.normal(k, shape, dtype=jnp.float32)

    p = {}
    p["ln1_g"] = jnp.ones((dim,), jnp.float32)
    p["ln1_b"] = jnp.zeros((dim,), jnp.float32)
    p["ln2_g"] = jnp.ones((dim,), jnp.float32)
    p["ln2_b"] = jnp.zeros((dim,), jnp.float32)
    p["qkv_w"] = nrm(ks[0], (dim, 3 * dim))            # qkv_bias=False
    p["proj_w"] = nrm(ks[1], (dim, dim))
    p["proj_b"] = jnp.zeros((dim,), jnp.float32)
    p["dwc_w"] = nrm(ks[2], (3, 3, dim))               # depthwise (KH, KW, C)
    p["dwc_b"] = jnp.zeros((dim,), jnp.float32)
    p["an_bias"] = nrm(ks[3], (num_heads, fused_num, 7, 7))
    p["na_bias"] = nrm(ks[4], (num_heads, fused_num, 7, 7))
    p["ah_bias"] = nrm(ks[5], (1, num_heads, fused_num, window, 1))
    p["aw_bias"] = nrm(ks[6], (1, num_heads, fused_num, 1, window))
    p["ha_bias"] = nrm(ks[7], (1, num_heads, window, 1, fused_num))
    p["wa_bias"] = nrm(ks[8], (1, num_heads, 1, window, fused_num))
    p["ac_bias"] = nrm(ks[9], (1, num_heads, fused_num, 1))   # unused in forward
    p["ca_bias"] = nrm(ks[10], (1, num_heads, 1, fused_num))
    p["fc1_w"] = nrm(ks[11], (dim, hidden))
    p["fc1_b"] = jnp.zeros((hidden,), jnp.float32)
    p["fc2_w"] = nrm(ks[12], (hidden, dim))
    p["fc2_b"] = jnp.zeros((dim,), jnp.float32)
    return p


if __name__ == "__main__":
    B, N, C = 2, 64, 32            # N must be a perfect square (h = w = 8)
    NUM_HEADS, FUSED_NUM, WINDOW = 2, 4, 4

    key = jax.random.PRNGKey(0)
    kx, kp = jax.random.split(key)
    x = jax.random.normal(kx, (B, N, C), dtype=jnp.float32)
    raw = init_params(kp, C, NUM_HEADS, FUSED_NUM, WINDOW)
    params = prepare_params(raw, dim=C, num_heads=NUM_HEADS,
                            fused_num=FUSED_NUM, window=WINDOW, n_tokens=N)

    fwd = jax.jit(functools.partial(fused_block_forward,
                                    num_heads=NUM_HEADS,
                                    fused_num=FUSED_NUM,
                                    window=WINDOW))
    out = fwd(x, params)
    jax.block_until_ready(out)
    assert out.shape == (B, N, C) and out.dtype == jnp.float32
    assert bool(jnp.all(jnp.isfinite(out)))
    print("KERNEL_OK")
</pallas_src>

<mosaic_0001>
module attributes {stable_mosaic.version = 11 : i64} {
  func.func @_dwconv_kernel(%arg0: i32, %arg1: memref<1x10x10x32xbf16, #tpu.memory_space<vmem>>, %arg2: memref<3x3x32xf32, #tpu.memory_space<vmem>>, %arg3: memref<1x1x1x32xf32, #tpu.memory_space<vmem>>, %arg4: memref<1x8x8x32xbf16, #tpu.memory_space<vmem>>) attributes {dimension_semantics = [#tpu.dimension_semantics<parallel>], iteration_bounds = array<i64: 2>, scalar_prefetch = 0 : i64, scratch_operands = 0 : i64, tpu.core_type = #tpu.core_type<tc>, window_params = [{transform_indices = @transform_0, window_bounds = array<i64: 1, 10, 10, 32>}, {pipeline_mode = #tpu.pipeline_mode<synchronous>, transform_indices = @transform_1, window_bounds = array<i64: 3, 3, 32>}, {pipeline_mode = #tpu.pipeline_mode<synchronous>, transform_indices = @transform_2, window_bounds = array<i64: 1, 1, 1, 32>}, {transform_indices = @transform_3, window_bounds = array<i64: 1, 8, 8, 32>}]} {
    %c0 = arith.constant 0 : index
    %c0_0 = arith.constant 0 : index
    %c0_1 = arith.constant 0 : index
    %c0_2 = arith.constant 0 : index
    %0 = vector.load %arg1[%c0, %c0_0, %c0_1, %c0_2] : memref<1x10x10x32xbf16, #tpu.memory_space<vmem>>, vector<1x10x10x32xbf16>
    %1 = arith.extf %0 : vector<1x10x10x32xbf16> to vector<1x10x10x32xf32>
    %c0_3 = arith.constant 0 : index
    %c0_4 = arith.constant 0 : index
    %c0_5 = arith.constant 0 : index
    %2 = vector.load %arg2[%c0_3, %c0_4, %c0_5] : memref<3x3x32xf32, #tpu.memory_space<vmem>>, vector<3x3x32xf32>
    %3 = vector.extract_strided_slice %1 {offsets = [0, 0, 0, 0], sizes = [1, 8, 8, 32], strides = [1, 1, 1, 1]} : vector<1x10x10x32xf32> to vector<1x8x8x32xf32>
    %4 = vector.extract_strided_slice %2 {offsets = [0, 0, 0], sizes = [1, 1, 32], strides = [1, 1, 1]} : vector<3x3x32xf32> to vector<1x1x32xf32>
    %5 = vector.shape_cast %4 : vector<1x1x32xf32> to vector<32xf32>
    %6 = vector.shape_cast %5 : vector<32xf32> to vector<1x1x1x32xf32>
    %7 = vector.broadcast %6 : vector<1x1x1x32xf32> to vector<1x8x8x32xf32>
    %8 = arith.mulf %3, %7 : vector<1x8x8x32xf32>
    %c0_6 = arith.constant 0 : index
    %c0_7 = arith.constant 0 : index
    %c0_8 = arith.constant 0 : index
    %c0_9 = arith.constant 0 : index
    %9 = vector.load %arg3[%c0_6, %c0_7, %c0_8, %c0_9] : memref<1x1x1x32xf32, #tpu.memory_space<vmem>>, vector<1x1x1x32xf32>
    %10 = vector.broadcast %9 : vector<1x1x1x32xf32> to vector<1x8x8x32xf32>
    %11 = arith.addf %8, %10 : vector<1x8x8x32xf32>
    %12 = vector.extract_strided_slice %1 {offsets = [0, 0, 1, 0], sizes = [1, 8, 8, 32], strides = [1, 1, 1, 1]} : vector<1x10x10x32xf32> to vector<1x8x8x32xf32>
    %13 = vector.extract_strided_slice %2 {offsets = [0, 1, 0], sizes = [1, 1, 32], strides = [1, 1, 1]} : vector<3x3x32xf32> to vector<1x1x32xf32>
    %14 = vector.shape_cast %13 : vector<1x1x32xf32> to vector<32xf32>
    %15 = vector.shape_cast %14 : vector<32xf32> to vector<1x1x1x32xf32>
    %16 = vector.broadcast %15 : vector<1x1x1x32xf32> to vector<1x8x8x32xf32>
    %17 = arith.mulf %12, %16 : vector<1x8x8x32xf32>
    %18 = arith.addf %11, %17 : vector<1x8x8x32xf32>
    %19 = vector.extract_strided_slice %1 {offsets = [0, 0, 2, 0], sizes = [1, 8, 8, 32], strides = [1, 1, 1, 1]} : vector<1x10x10x32xf32> to vector<1x8x8x32xf32>
    %20 = vector.extract_strided_slice %2 {offsets = [0, 2, 0], sizes = [1, 1, 32], strides = [1, 1, 1]} : vector<3x3x32xf32> to vector<1x1x32xf32>
    %21 = vector.shape_cast %20 : vector<1x1x32xf32> to vector<32xf32>
    %22 = vector.shape_cast %21 : vector<32xf32> to vector<1x1x1x32xf32>
    %23 = vector.broadcast %22 : vector<1x1x1x32xf32> to vector<1x8x8x32xf32>
    %24 = arith.mulf %19, %23 : vector<1x8x8x32xf32>
    %25 = arith.addf %18, %24 : vector<1x8x8x32xf32>
    %26 = vector.extract_strided_slice %1 {offsets = [0, 1, 0, 0], sizes = [1, 8, 8, 32], strides = [1, 1, 1, 1]} : vector<1x10x10x32xf32> to vector<1x8x8x32xf32>
    %27 = vector.extract_strided_slice %2 {offsets = [1, 0, 0], sizes = [1, 1, 32], strides = [1, 1, 1]} : vector<3x3x32xf32> to vector<1x1x32xf32>
    %28 = vector.shape_cast %27 : vector<1x1x32xf32> to vector<32xf32>
    %29 = vector.shape_cast %28 : vector<32xf32> to vector<1x1x1x32xf32>
    %30 = vector.broadcast %29 : vector<1x1x1x32xf32> to vector<1x8x8x32xf32>
    %31 = arith.mulf %26, %30 : vector<1x8x8x32xf32>
    %32 = arith.addf %25, %31 : vector<1x8x8x32xf32>
    %33 = vector.extract_strided_slice %1 {offsets = [0, 1, 1, 0], sizes = [1, 8, 8, 32], strides = [1, 1, 1, 1]} : vector<1x10x10x32xf32> to vector<1x8x8x32xf32>
    %34 = vector.extract_strided_slice %2 {offsets = [1, 1, 0], sizes = [1, 1, 32], strides = [1, 1, 1]} : vector<3x3x32xf32> to vector<1x1x32xf32>
    %35 = vector.shape_cast %34 : vector<1x1x32xf32> to vector<32xf32>
    %36 = vector.shape_cast %35 : vector<32xf32> to vector<1x1x1x32xf32>
    %37 = vector.broadcast %36 : vector<1x1x1x32xf32> to vector<1x8x8x32xf32>
    %38 = arith.mulf %33, %37 : vector<1x8x8x32xf32>
    %39 = arith.addf %32, %38 : vector<1x8x8x32xf32>
    %40 = vector.extract_strided_slice %1 {offsets = [0, 1, 2, 0], sizes = [1, 8, 8, 32], strides = [1, 1, 1, 1]} : vector<1x10x10x32xf32> to vector<1x8x8x32xf32>
    %41 = vector.extract_strided_slice %2 {offsets = [1, 2, 0], sizes = [1, 1, 32], strides = [1, 1, 1]} : vector<3x3x32xf32> to vector<1x1x32xf32>
    %42 = vector.shape_cast %41 : vector<1x1x32xf32> to vector<32xf32>
    %43 = vector.shape_cast %42 : vector<32xf32> to vector<1x1x1x32xf32>
    %44 = vector.broadcast %43 : vector<1x1x1x32xf32> to vector<1x8x8x32xf32>
    %45 = arith.mulf %40, %44 : vector<1x8x8x32xf32>
    %46 = arith.addf %39, %45 : vector<1x8x8x32xf32>
    %47 = vector.extract_strided_slice %1 {offsets = [0, 2, 0, 0], sizes = [1, 8, 8, 32], strides = [1, 1, 1, 1]} : vector<1x10x10x32xf32> to vector<1x8x8x32xf32>
    %48 = vector.extract_strided_slice %2 {offsets = [2, 0, 0], sizes = [1, 1, 32], strides = [1, 1, 1]} : vector<3x3x32xf32> to vector<1x1x32xf32>
    %49 = vector.shape_cast %48 : vector<1x1x32xf32> to vector<32xf32>
    %50 = vector.shape_cast %49 : vector<32xf32> to vector<1x1x1x32xf32>
    %51 = vector.broadcast %50 : vector<1x1x1x32xf32> to vector<1x8x8x32xf32>
    %52 = arith.mulf %47, %51 : vector<1x8x8x32xf32>
    %53 = arith.addf %46, %52 : vector<1x8x8x32xf32>
    %54 = vector.extract_strided_slice %1 {offsets = [0, 2, 1, 0], sizes = [1, 8, 8, 32], strides = [1, 1, 1, 1]} : vector<1x10x10x32xf32> to vector<1x8x8x32xf32>
    %55 = vector.extract_strided_slice %2 {offsets = [2, 1, 0], sizes = [1, 1, 32], strides = [1, 1, 1]} : vector<3x3x32xf32> to vector<1x1x32xf32>
    %56 = vector.shape_cast %55 : vector<1x1x32xf32> to vector<32xf32>
    %57 = vector.shape_cast %56 : vector<32xf32> to vector<1x1x1x32xf32>
    %58 = vector.broadcast %57 : vector<1x1x1x32xf32> to vector<1x8x8x32xf32>
    %59 = arith.mulf %54, %58 : vector<1x8x8x32xf32>
    %60 = arith.addf %53, %59 : vector<1x8x8x32xf32>
    %61 = vector.extract_strided_slice %1 {offsets = [0, 2, 2, 0], sizes = [1, 8, 8, 32], strides = [1, 1, 1, 1]} : vector<1x10x10x32xf32> to vector<1x8x8x32xf32>
    %62 = vector.extract_strided_slice %2 {offsets = [2, 2, 0], sizes = [1, 1, 32], strides = [1, 1, 1]} : vector<3x3x32xf32> to vector<1x1x32xf32>
    %63 = vector.shape_cast %62 : vector<1x1x32xf32> to vector<32xf32>
    %64 = vector.shape_cast %63 : vector<32xf32> to vector<1x1x1x32xf32>
    %65 = vector.broadcast %64 : vector<1x1x1x32xf32> to vector<1x8x8x32xf32>
    %66 = arith.mulf %61, %65 : vector<1x8x8x32xf32>
    %67 = arith.addf %60, %66 : vector<1x8x8x32xf32>
    %68 = arith.truncf %67 : vector<1x8x8x32xf32> to vector<1x8x8x32xbf16>
    %c0_10 = arith.constant 0 : index
    %c0_11 = arith.constant 0 : index
    %c0_12 = arith.constant 0 : index
    %c0_13 = arith.constant 0 : index
    %69 = vector.load %arg4[%c0_10, %c0_11, %c0_12, %c0_13] : memref<1x8x8x32xbf16, #tpu.memory_space<vmem>>, vector<1x8x8x32xbf16>
    tpu.vector_store %arg4[%c0_10, %c0_11, %c0_12, %c0_13], %68 {strides = array<i32>} : memref<1x8x8x32xbf16, #tpu.memory_space<vmem>>, vector<1x8x8x32xbf16>,
    return
  }
  func.func @transform_0(%arg0: i32) -> (i32, i32, i32, i32) {
    %c0_i32 = arith.constant 0 : i32
    %c0_i32_0 = arith.constant 0 : i32
    %c0_i32_1 = arith.constant 0 : i32
    %c0_i32_2 = arith.constant 0 : i32
    return %arg0, %c0_i32, %c0_i32_0, %c0_i32_1 : i32, i32, i32, i32
  }
  func.func @transform_1(%arg0: i32) -> (i32, i32, i32) {
    %c0_i32 = arith.constant 0 : i32
    %c0_i32_0 = arith.constant 0 : i32
    %c0_i32_1 = arith.constant 0 : i32
    %c0_i32_2 = arith.constant 0 : i32
    return %c0_i32, %c0_i32_0, %c0_i32_1 : i32, i32, i32
  }
  func.func @transform_2(%arg0: i32) -> (i32, i32, i32, i32) {
    %c0_i32 = arith.constant 0 : i32
    %c0_i32_0 = arith.constant 0 : i32
    %c0_i32_1 = arith.constant 0 : i32
    %c0_i32_2 = arith.constant 0 : i32
    %c0_i32_3 = arith.constant 0 : i32
    return %c0_i32, %c0_i32_0, %c0_i32_1, %c0_i32_2 : i32, i32, i32, i32
  }
  func.func @transform_3(%arg0: i32) -> (i32, i32, i32, i32) {
    %c0_i32 = arith.constant 0 : i32
    %c0_i32_0 = arith.constant 0 : i32
    %c0_i32_1 = arith.constant 0 : i32
    %c0_i32_2 = arith.constant 0 : i32
    return %arg0, %c0_i32, %c0_i32_0, %c0_i32_1 : i32, i32, i32, i32
  }
}

module attributes {stable_mosaic.version = 11 : i64} {
  func.func @_ln_qkv_kernel(%arg0: i32, %arg1: memref<128x32xf32, #tpu.memory_space<vmem>>, %arg2: memref<1x32xf32, #tpu.memory_space<vmem>>, %arg3: memref<1x32xf32, #tpu.memory_space<vmem>>, %arg4: memref<32x32xbf16, #tpu.memory_space<vmem>>, %arg5: memref<32x32xbf16, #tpu.memory_space<vmem>>, %arg6: memref<32x32xbf16, #tpu.memory_space<vmem>>, %arg7: memref<128x32xbf16, #tpu.memory_space<vmem>>, %arg8: memref<128x32xbf16, #tpu.memory_space<vmem>>, %arg9: memref<128x32xbf16, #tpu.memory_space<vmem>>) attributes {dimension_semantics = [#tpu.dimension_semantics<parallel>], iteration_bounds = array<i64: 1>, scalar_prefetch = 0 : i64, scratch_operands = 0 : i64, tpu.core_type = #tpu.core_type<tc>, window_params = [{transform_indices = @transform_0, window_bounds = array<i64: 128, 32>}, {pipeline_mode = #tpu.pipeline_mode<synchronous>, transform_indices = @transform_1, window_bounds = array<i64: 1, 32>}, {pipeline_mode = #tpu.pipeline_mode<synchronous>, transform_indices = @transform_2, window_bounds = array<i64: 1, 32>}, {pipeline_mode = #tpu.pipeline_mode<synchronous>, transform_indices = @transform_3, window_bounds = array<i64: 32, 32>}, {pipeline_mode = #tpu.pipeline_mode<synchronous>, transform_indices = @transform_4, window_bounds = array<i64: 32, 32>}, {pipeline_mode = #tpu.pipeline_mode<synchronous>, transform_indices = @transform_5, window_bounds = array<i64: 32, 32>}, {transform_indices = @transform_6, window_bounds = array<i64: 128, 32>}, {transform_indices = @transform_7, window_bounds = array<i64: 128, 32>}, {transform_indices = @transform_8, window_bounds = array<i64: 128, 32>}]} {
    %c0 = arith.constant 0 : index
    %c0_0 = arith.constant 0 : index
    %0 = vector.load %arg1[%c0, %c0_0] : memref<128x32xf32, #tpu.memory_space<vmem>>, vector<128x32xf32>
    %c0_1 = arith.constant 0 : index
    %c0_2 = arith.constant 0 : index
    %1 = vector.load %arg2[%c0_1, %c0_2] : memref<1x32xf32, #tpu.memory_space<vmem>>, vector<1x32xf32>
    %c0_3 = arith.constant 0 : index
    %c0_4 = arith.constant 0 : index
    %2 = vector.load %arg3[%c0_3, %c0_4] : memref<1x32xf32, #tpu.memory_space<vmem>>, vector<1x32xf32>
    %cst = arith.constant dense<0.000000e+00> : vector<128xf32>
    %3 = vector.multi_reduction <add>, %0, %cst [1] : vector<128x32xf32> to vector<128xf32>
    %4 = vector.shape_cast %3 : vector<128xf32> to vector<128x1xf32>
    %cst_5 = arith.constant 3.200000e+01 : f32
    %5 = vector.broadcast %cst_5 : f32 to vector<128x1xf32>
    %6 = arith.divf %4, %5 : vector<128x1xf32>
    %7 = vector.broadcast %6 : vector<128x1xf32> to vector<128x32xf32>
    %8 = arith.subf %0, %7 : vector<128x32xf32>
    %9 = arith.mulf %8, %8 : vector<128x32xf32>
    %cst_6 = arith.constant dense<0.000000e+00> : vector<128xf32>
    %10 = vector.multi_reduction <add>, %9, %cst_6 [1] : vector<128x32xf32> to vector<128xf32>
    %11 = vector.shape_cast %10 : vector<128xf32> to vector<128x1xf32>
    %cst_7 = arith.constant 3.200000e+01 : f32
    %12 = vector.broadcast %cst_7 : f32 to vector<128x1xf32>
    %13 = arith.divf %11, %12 : vector<128x1xf32>
    %cst_8 = arith.constant 9.99999974E-6 : f32
    %14 = vector.broadcast %cst_8 : f32 to vector<128x1xf32>
    %15 = arith.addf %13, %14 : vector<128x1xf32>
    %16 = math.rsqrt %15 : vector<128x1xf32>
    %17 = vector.broadcast %16 : vector<128x1xf32> to vector<128x32xf32>
    %18 = arith.mulf %8, %17 : vector<128x32xf32>
    %19 = vector.broadcast %1 : vector<1x32xf32> to vector<128x32xf32>
    %20 = arith.mulf %18, %19 : vector<128x32xf32>
    %21 = vector.broadcast %2 : vector<1x32xf32> to vector<128x32xf32>
    %22 = arith.addf %20, %21 : vector<128x32xf32>
    %23 = arith.truncf %22 : vector<128x32xf32> to vector<128x32xbf16>
    %c0_9 = arith.constant 0 : index
    %c0_10 = arith.constant 0 : index
    %24 = vector.load %arg4[%c0_9, %c0_10] : memref<32x32xbf16, #tpu.memory_space<vmem>>, vector<32x32xbf16>
    %cst_11 = arith.constant dense<0.000000e+00> : vector<128x32xf32>
    %25 = tpu.matmul %23, %24, %cst_11 {dimension_numbers = #tpu.dot_dimension_numbers<[1], [0], [0], [1], [0, 0, 1, 1], [], []>} : vector<128x32xbf16>, vector<32x32xbf16>, vector<128x32xf32> -> vector<128x32xf32>
    %26 = arith.truncf %25 : vector<128x32xf32> to vector<128x32xbf16>
    %c0_12 = arith.constant 0 : index
    %c0_13 = arith.constant 0 : index
    %27 = vector.load %arg7[%c0_12, %c0_13] : memref<128x32xbf16, #tpu.memory_space<vmem>>, vector<128x32xbf16>
    tpu.vector_store %arg7[%c0_12, %c0_13], %26 {strides = array<i32>} : memref<128x32xbf16, #tpu.memory_space<vmem>>, vector<128x32xbf16>,
    %c0_14 = arith.constant 0 : index
    %c0_15 = arith.constant 0 : index
    %28 = vector.load %arg5[%c0_14, %c0_15] : memref<32x32xbf16, #tpu.memory_space<vmem>>, vector<32x32xbf16>
    %cst_16 = arith.constant dense<0.000000e+00> : vector<128x32xf32>
    %29 = tpu.matmul %23, %28, %cst_16 {dimension_numbers = #tpu.dot_dimension_numbers<[1], [0], [0], [1], [0, 0, 1, 1], [], []>} : vector<128x32xbf16>, vector<32x32xbf16>, vector<128x32xf32> -> vector<128x32xf32>
    %30 = arith.truncf %29 : vector<128x32xf32> to vector<128x32xbf16>
    %c0_17 = arith.constant 0 : index
    %c0_18 = arith.constant 0 : index
    %31 = vector.load %arg8[%c0_17, %c0_18] : memref<128x32xbf16, #tpu.memory_space<vmem>>, vector<128x32xbf16>
    tpu.vector_store %arg8[%c0_17, %c0_18], %30 {strides = array<i32>} : memref<128x32xbf16, #tpu.memory_space<vmem>>, vector<128x32xbf16>,
    %c0_19 = arith.constant 0 : index
    %c0_20 = arith.constant 0 : index
    %32 = vector.load %arg6[%c0_19, %c0_20] : memref<32x32xbf16, #tpu.memory_space<vmem>>, vector<32x32xbf16>
    %cst_21 = arith.constant dense<0.000000e+00> : vector<128x32xf32>
    %33 = tpu.matmul %23, %32, %cst_21 {dimension_numbers = #tpu.dot_dimension_numbers<[1], [0], [0], [1], [0, 0, 1, 1], [], []>} : vector<128x32xbf16>, vector<32x32xbf16>, vector<128x32xf32> -> vector<128x32xf32>
    %34 = arith.truncf %33 : vector<128x32xf32> to vector<128x32xbf16>
    %c0_22 = arith.constant 0 : index
    %c0_23 = arith.constant 0 : index
    %35 = vector.load %arg9[%c0_22, %c0_23] : memref<128x32xbf16, #tpu.memory_space<vmem>>, vector<128x32xbf16>
    tpu.vector_store %arg9[%c0_22, %c0_23], %34 {strides = array<i32>} : memref<128x32xbf16, #tpu.memory_space<vmem>>, vector<128x32xbf16>,
    return
  }
  func.func @transform_0(%arg0: i32) -> (i32, i32) {
    %c0_i32 = arith.constant 0 : i32
    %c0_i32_0 = arith.constant 0 : i32
    return %arg0, %c0_i32 : i32, i32
  }
  func.func @transform_1(%arg0: i32) -> (i32, i32) {
    %c0_i32 = arith.constant 0 : i32
    %c0_i32_0 = arith.constant 0 : i32
    %c0_i32_1 = arith.constant 0 : i32
    return %c0_i32, %c0_i32_0 : i32, i32
  }
  func.func @transform_2(%arg0: i32) -> (i32, i32) {
    %c0_i32 = arith.constant 0 : i32
    %c0_i32_0 = arith.constant 0 : i32
    %c0_i32_1 = arith.constant 0 : i32
    return %c0_i32, %c0_i32_0 : i32, i32
  }
  func.func @transform_3(%arg0: i32) -> (i32, i32) {
    %c0_i32 = arith.constant 0 : i32
    %c0_i32_0 = arith.constant 0 : i32
    %c0_i32_1 = arith.constant 0 : i32
    return %c0_i32, %c0_i32_0 : i32, i32
  }
  func.func @transform_4(%arg0: i32) -> (i32, i32) {
    %c0_i32 = arith.constant 0 : i32
    %c0_i32_0 = arith.constant 0 : i32
    %c0_i32_1 = arith.constant 0 : i32
    return %c0_i32, %c0_i32_0 : i32, i32
  }
  func.func @transform_5(%arg0: i32) -> (i32, i32) {
    %c0_i32 = arith.constant 0 : i32
    %c0_i32_0 = arith.constant 0 : i32
    %c0_i32_1 = arith.constant 0 : i32
    return %c0_i32, %c0_i32_0 : i32, i32
  }
  func.func @transform_6(%arg0: i32) -> (i32, i32) {
    %c0_i32 = arith.constant 0 : i32
    %c0_i32_0 = arith.constant 0 : i32
    return %arg0, %c0_i32 : i32, i32
  }
  func.func @transform_7(%arg0: i32) -> (i32, i32) {
    %c0_i32 = arith.constant 0 : i32
    %c0_i32_0 = arith.constant 0 : i32
    return %arg0, %c0_i32 : i32, i32
  }
  func.func @transform_8(%arg0: i32) -> (i32, i32) {
    %c0_i32 = arith.constant 0 : i32
    %c0_i32_0 = arith.constant 0 : i32
    return %arg0, %c0_i32 : i32, i32
  }
}

module attributes {stable_mosaic.version = 11 : i64} {
  func.func @_attn_proj_kernel(%arg0: i32, %arg1: memref<1x64x32xbf16, #tpu.memory_space<vmem>>, %arg2: memref<1x64x32xbf16, #tpu.memory_space<vmem>>, %arg3: memref<1x64x32xbf16, #tpu.memory_space<vmem>>, %arg4: memref<1x64x32xbf16, #tpu.memory_space<vmem>>, %arg5: memref<1x64x32xf32, #tpu.memory_space<vmem>>, %arg6: memref<4x64xbf16, #tpu.memory_space<vmem>>, %arg7: memref<2x4x64xbf16, #tpu.memory_space<vmem>>, %arg8: memref<2x4x64xbf16, #tpu.memory_space<vmem>>, %arg9: memref<32x32xbf16, #tpu.memory_space<vmem>>, %arg10: memref<1x32xf32, #tpu.memory_space<vmem>>, %arg11: memref<1x64x32xf32, #tpu.memory_space<vmem>>) attributes {dimension_semantics = [#tpu.dimension_semantics<parallel>], iteration_bounds = array<i64: 2>, scalar_prefetch = 0 : i64, scratch_operands = 0 : i64, tpu.core_type = #tpu.core_type<tc>, window_params = [{transform_indices = @transform_0, window_bounds = array<i64: 1, 64, 32>}, {transform_indices = @transform_1, window_bounds = array<i64: 1, 64, 32>}, {transform_indices = @transform_2, window_bounds = array<i64: 1, 64, 32>}, {transform_indices = @transform_3, window_bounds = array<i64: 1, 64, 32>}, {transform_indices = @transform_4, window_bounds = array<i64: 1, 64, 32>}, {pipeline_mode = #tpu.pipeline_mode<synchronous>, transform_indices = @transform_5, window_bounds = array<i64: 4, 64>}, {pipeline_mode = #tpu.pipeline_mode<synchronous>, transform_indices = @transform_6, window_bounds = array<i64: 2, 4, 64>}, {pipeline_mode = #tpu.pipeline_mode<synchronous>, transform_indices = @transform_7, window_bounds = array<i64: 2, 4, 64>}, {pipeline_mode = #tpu.pipeline_mode<synchronous>, transform_indices = @transform_8, window_bounds = array<i64: 32, 32>}, {pipeline_mode = #tpu.pipeline_mode<synchronous>, transform_indices = @transform_9, window_bounds = array<i64: 1, 32>}, {transform_indices = @transform_10, window_bounds = array<i64: 1, 64, 32>}]} {
    %c0 = arith.constant 0 : index
    %c0_0 = arith.constant 0 : index
    %c0_1 = arith.constant 0 : index
    %0 = vector.load %arg1[%c0, %c0_0, %c0_1] : memref<1x64x32xbf16, #tpu.memory_space<vmem>>, vector<1x64x32xbf16>
    %1 = vector.shape_cast %0 : vector<1x64x32xbf16> to vector<64x32xbf16>
    %c0_2 = arith.constant 0 : index
    %c0_3 = arith.constant 0 : index
    %c0_4 = arith.constant 0 : index
    %2 = vector.load %arg2[%c0_2, %c0_3, %c0_4] : memref<1x64x32xbf16, #tpu.memory_space<vmem>>, vector<1x64x32xbf16>
    %3 = vector.shape_cast %2 : vector<1x64x32xbf16> to vector<64x32xbf16>
    %c0_5 = arith.constant 0 : index
    %c0_6 = arith.constant 0 : index
    %c0_7 = arith.constant 0 : index
    %4 = vector.load %arg3[%c0_5, %c0_6, %c0_7] : memref<1x64x32xbf16, #tpu.memory_space<vmem>>, vector<1x64x32xbf16>
    %5 = vector.shape_cast %4 : vector<1x64x32xbf16> to vector<64x32xbf16>
    %c0_8 = arith.constant 0 : index
    %c0_9 = arith.constant 0 : index
    %6 = vector.load %arg6[%c0_8, %c0_9] : memref<4x64xbf16, #tpu.memory_space<vmem>>, vector<4x64xbf16>
    %cst = arith.constant dense<0.000000e+00> : vector<4x32xf32>
    %7 = tpu.matmul %6, %1, %cst {dimension_numbers = #tpu.dot_dimension_numbers<[1], [0], [0], [1], [0, 0, 1, 1], [], []>} : vector<4x64xbf16>, vector<64x32xbf16>, vector<4x32xf32> -> vector<4x32xf32>
    %8 = arith.truncf %7 : vector<4x32xf32> to vector<4x32xbf16>
    %9 = vector.extract_strided_slice %1 {offsets = [0, 0], sizes = [64, 16], strides = [1, 1]} : vector<64x32xbf16> to vector<64x16xbf16>
    %10 = vector.extract_strided_slice %3 {offsets = [0, 0], sizes = [64, 16], strides = [1, 1]} : vector<64x32xbf16> to vector<64x16xbf16>
    %11 = vector.extract_strided_slice %5 {offsets = [0, 0], sizes = [64, 16], strides = [1, 1]} : vector<64x32xbf16> to vector<64x16xbf16>
    %12 = vector.extract_strided_slice %8 {offsets = [0, 0], sizes = [4, 16], strides = [1, 1]} : vector<4x32xbf16> to vector<4x16xbf16>
    %c0_10 = arith.constant 0 : index
    %c0_11 = arith.constant 0 : index
    %c0_12 = arith.constant 0 : index
    %13 = vector.load %arg7[%c0_10, %c0_11, %c0_12] : memref<2x4x64xbf16, #tpu.memory_space<vmem>>, vector<1x4x64xbf16>
    %14 = vector.shape_cast %13 : vector<1x4x64xbf16> to vector<4x64xbf16>
    %c0_13 = arith.constant 0 : index
    %c0_14 = arith.constant 0 : index
    %c0_15 = arith.constant 0 : index
    %15 = vector.load %arg8[%c0_13, %c0_14, %c0_15] : memref<2x4x64xbf16, #tpu.memory_space<vmem>>, vector<1x4x64xbf16>
    %16 = vector.shape_cast %15 : vector<1x4x64xbf16> to vector<4x64xbf16>
    %cst_16 = arith.constant dense<0.000000e+00> : vector<4x64xf32>
    %17 = tpu.matmul %12, %10, %cst_16 {dimension_numbers = #tpu.dot_dimension_numbers<[1], [1], [0], [0], [0, 0, 1, 0], [], []>} : vector<4x16xbf16>, vector<64x16xbf16>, vector<4x64xf32> -> vector<4x64xf32>
    %18 = arith.extf %14 : vector<4x64xbf16> to vector<4x64xf32>
    %19 = arith.addf %17, %18 : vector<4x64xf32>
    %cst_17 = arith.constant dense<0xFF800000> : vector<4xf32>
    %20 = vector.multi_reduction <maximumf>, %19, %cst_17 [1] : vector<4x64xf32> to vector<4xf32>
    %21 = vector.shape_cast %20 : vector<4xf32> to vector<4x1xf32>
    %22 = vector.broadcast %21 : vector<4x1xf32> to vector<4x64xf32>
    %23 = arith.subf %19, %22 : vector<4x64xf32>
    %24 = math.exp %23 : vector<4x64xf32>
    %cst_18 = arith.constant dense<0.000000e+00> : vector<4xf32>
    %25 = vector.multi_reduction <add>, %24, %cst_18 [1] : vector<4x64xf32> to vector<4xf32>
    %26 = vector.shape_cast %25 : vector<4xf32> to vector<4x1xf32>
    %27 = tpu.reciprocal %26 {approx = true} : vector<4x1xf32> -> vector<4x1xf32>
    %28 = vector.broadcast %27 : vector<4x1xf32> to vector<4x64xf32>
    %29 = arith.mulf %24, %28 : vector<4x64xf32>
    %30 = arith.truncf %29 : vector<4x64xf32> to vector<4x64xbf16>
    %cst_19 = arith.constant dense<0.000000e+00> : vector<4x16xf32>
    %31 = tpu.matmul %30, %11, %cst_19 {dimension_numbers = #tpu.dot_dimension_numbers<[1], [0], [0], [1], [0, 0, 1, 1], [], []>} : vector<4x64xbf16>, vector<64x16xbf16>, vector<4x16xf32> -> vector<4x16xf32>
    %cst_20 = arith.constant dense<0.000000e+00> : vector<4x64xf32>
    %32 = tpu.matmul %12, %9, %cst_20 {dimension_numbers = #tpu.dot_dimension_numbers<[1], [1], [0], [0], [0, 0, 1, 0], [], []>} : vector<4x16xbf16>, vector<64x16xbf16>, vector<4x64xf32> -> vector<4x64xf32>
    %33 = arith.extf %16 : vector<4x64xbf16> to vector<4x64xf32>
    %34 = arith.addf %32, %33 : vector<4x64xf32>
    %cst_21 = arith.constant dense<0xFF800000> : vector<64xf32>
    %35 = vector.multi_reduction <maximumf>, %34, %cst_21 [0] : vector<4x64xf32> to vector<64xf32>
    %36 = vector.shape_cast %35 : vector<64xf32> to vector<1x64xf32>
    %37 = vector.broadcast %36 : vector<1x64xf32> to vector<4x64xf32>
    %38 = arith.subf %34, %37 : vector<4x64xf32>
    %39 = math.exp %38 : vector<4x64xf32>
    %cst_22 = arith.constant dense<0.000000e+00> : vector<64xf32>
    %40 = vector.multi_reduction <add>, %39, %cst_22 [0] : vector<4x64xf32> to vector<64xf32>
    %41 = vector.shape_cast %40 : vector<64xf32> to vector<1x64xf32>
    %42 = tpu.reciprocal %41 {approx = true} : vector<1x64xf32> -> vector<1x64xf32>
    %43 = vector.broadcast %42 : vector<1x64xf32> to vector<4x64xf32>
    %44 = arith.mulf %39, %43 : vector<4x64xf32>
    %45 = arith.truncf %44 : vector<4x64xf32> to vector<4x64xbf16>
    %46 = arith.truncf %31 : vector<4x16xf32> to vector<4x16xbf16>
    %cst_23 = arith.constant dense<0.000000e+00> : vector<64x16xf32>
    %47 = tpu.matmul %45, %46, %cst_23 {dimension_numbers = #tpu.dot_dimension_numbers<[0], [0], [1], [1], [0, 1, 1, 1], [], []>} : vector<4x64xbf16>, vector<4x16xbf16>, vector<64x16xf32> -> vector<64x16xf32>
    %48 = vector.extract_strided_slice %1 {offsets = [0, 16], sizes = [64, 16], strides = [1, 1]} : vector<64x32xbf16> to vector<64x16xbf16>
    %49 = vector.extract_strided_slice %3 {offsets = [0, 16], sizes = [64, 16], strides = [1, 1]} : vector<64x32xbf16> to vector<64x16xbf16>
    %50 = vector.extract_strided_slice %5 {offsets = [0, 16], sizes = [64, 16], strides = [1, 1]} : vector<64x32xbf16> to vector<64x16xbf16>
    %51 = vector.extract_strided_slice %8 {offsets = [0, 16], sizes = [4, 16], strides = [1, 1]} : vector<4x32xbf16> to vector<4x16xbf16>
    %c1 = arith.constant 1 : index
    %c0_24 = arith.constant 0 : index
    %c0_25 = arith.constant 0 : index
    %52 = vector.load %arg7[%c1, %c0_24, %c0_25] : memref<2x4x64xbf16, #tpu.memory_space<vmem>>, vector<1x4x64xbf16>
    %53 = vector.shape_cast %52 : vector<1x4x64xbf16> to vector<4x64xbf16>
    %c1_26 = arith.constant 1 : index
    %c0_27 = arith.constant 0 : index
    %c0_28 = arith.constant 0 : index
    %54 = vector.load %arg8[%c1_26, %c0_27, %c0_28] : memref<2x4x64xbf16, #tpu.memory_space<vmem>>, vector<1x4x64xbf16>
    %55 = vector.shape_cast %54 : vector<1x4x64xbf16> to vector<4x64xbf16>
    %cst_29 = arith.constant dense<0.000000e+00> : vector<4x64xf32>
    %56 = tpu.matmul %51, %49, %cst_29 {dimension_numbers = #tpu.dot_dimension_numbers<[1], [1], [0], [0], [0, 0, 1, 0], [], []>} : vector<4x16xbf16>, vector<64x16xbf16>, vector<4x64xf32> -> vector<4x64xf32>
    %57 = arith.extf %53 : vector<4x64xbf16> to vector<4x64xf32>
    %58 = arith.addf %56, %57 : vector<4x64xf32>
    %cst_30 = arith.constant dense<0xFF800000> : vector<4xf32>
    %59 = vector.multi_reduction <maximumf>, %58, %cst_30 [1] : vector<4x64xf32> to vector<4xf32>
    %60 = vector.shape_cast %59 : vector<4xf32> to vector<4x1xf32>
    %61 = vector.broadcast %60 : vector<4x1xf32> to vector<4x64xf32>
    %62 = arith.subf %58, %61 : vector<4x64xf32>
    %63 = math.exp %62 : vector<4x64xf32>
    %cst_31 = arith.constant dense<0.000000e+00> : vector<4xf32>
    %64 = vector.multi_reduction <add>, %63, %cst_31 [1] : vector<4x64xf32> to vector<4xf32>
    %65 = vector.shape_cast %64 : vector<4xf32> to vector<4x1xf32>
    %66 = tpu.reciprocal %65 {approx = true} : vector<4x1xf32> -> vector<4x1xf32>
    %67 = vector.broadcast %66 : vector<4x1xf32> to vector<4x64xf32>
    %68 = arith.mulf %63, %67 : vector<4x64xf32>
    %69 = arith.truncf %68 : vector<4x64xf32> to vector<4x64xbf16>
    %cst_32 = arith.constant dense<0.000000e+00> : vector<4x16xf32>
    %70 = tpu.matmul %69, %50, %cst_32 {dimension_numbers = #tpu.dot_dimension_numbers<[1], [0], [0], [1], [0, 0, 1, 1], [], []>} : vector<4x64xbf16>, vector<64x16xbf16>, vector<4x16xf32> -> vector<4x16xf32>
    %cst_33 = arith.constant dense<0.000000e+00> : vector<4x64xf32>
    %71 = tpu.matmul %51, %48, %cst_33 {dimension_numbers = #tpu.dot_dimension_numbers<[1], [1], [0], [0], [0, 0, 1, 0], [], []>} : vector<4x16xbf16>, vector<64x16xbf16>, vector<4x64xf32> -> vector<4x64xf32>
    %72 = arith.extf %55 : vector<4x64xbf16> to vector<4x64xf32>
    %73 = arith.addf %71, %72 : vector<4x64xf32>
    %cst_34 = arith.constant dense<0xFF800000> : vector<64xf32>
    %74 = vector.multi_reduction <maximumf>, %73, %cst_34 [0] : vector<4x64xf32> to vector<64xf32>
    %75 = vector.shape_cast %74 : vector<64xf32> to vector<1x64xf32>
    %76 = vector.broadcast %75 : vector<1x64xf32> to vector<4x64xf32>
    %77 = arith.subf %73, %76 : vector<4x64xf32>
    %78 = math.exp %77 : vector<4x64xf32>
    %cst_35 = arith.constant dense<0.000000e+00> : vector<64xf32>
    %79 = vector.multi_reduction <add>, %78, %cst_35 [0] : vector<4x64xf32> to vector<64xf32>
    %80 = vector.shape_cast %79 : vector<64xf32> to vector<1x64xf32>
    %81 = tpu.reciprocal %80 {approx = true} : vector<1x64xf32> -> vector<1x64xf32>
    %82 = vector.broadcast %81 : vector<1x64xf32> to vector<4x64xf32>
    %83 = arith.mulf %78, %82 : vector<4x64xf32>
    %84 = arith.truncf %83 : vector<4x64xf32> to vector<4x64xbf16>
    %85 = arith.truncf %70 : vector<4x16xf32> to vector<4x16xbf16>
    %cst_36 = arith.constant dense<0.000000e+00> : vector<64x16xf32>
    %86 = tpu.matmul %84, %85, %cst_36 {dimension_numbers = #tpu.dot_dimension_numbers<[0], [0], [1], [1], [0, 1, 1, 1], [], []>} : vector<4x64xbf16>, vector<4x16xbf16>, vector<64x16xf32> -> vector<64x16xf32>
    %87 = tpu.concatenate %47, %86 in 1 : vector<64x16xf32>, vector<64x16xf32> -> vector<64x32xf32>
    %c0_37 = arith.constant 0 : index
    %c0_38 = arith.constant 0 : index
    %c0_39 = arith.constant 0 : index
    %88 = vector.load %arg4[%c0_37, %c0_38, %c0_39] : memref<1x64x32xbf16, #tpu.memory_space<vmem>>, vector<1x64x32xbf16>
    %89 = vector.shape_cast %88 : vector<1x64x32xbf16> to vector<64x32xbf16>
    %90 = arith.extf %89 : vector<64x32xbf16> to vector<64x32xf32>
    %91 = arith.addf %87, %90 : vector<64x32xf32>
    %92 = arith.truncf %91 : vector<64x32xf32> to vector<64x32xbf16>
    %c0_40 = arith.constant 0 : index
    %c0_41 = arith.constant 0 : index
    %93 = vector.load %arg9[%c0_40, %c0_41] : memref<32x32xbf16, #tpu.memory_space<vmem>>, vector<32x32xbf16>
    %cst_42 = arith.constant dense<0.000000e+00> : vector<64x32xf32>
    %94 = tpu.matmul %92, %93, %cst_42 {dimension_numbers = #tpu.dot_dimension_numbers<[1], [0], [0], [1], [0, 0, 1, 1], [], []>} : vector<64x32xbf16>, vector<32x32xbf16>, vector<64x32xf32> -> vector<64x32xf32>
    %c0_43 = arith.constant 0 : index
    %c0_44 = arith.constant 0 : index
    %95 = vector.load %arg10[%c0_43, %c0_44] : memref<1x32xf32, #tpu.memory_space<vmem>>, vector<1x32xf32>
    %96 = vector.broadcast %95 : vector<1x32xf32> to vector<64x32xf32>
    %97 = arith.addf %94, %96 : vector<64x32xf32>
    %c0_45 = arith.constant 0 : index
    %c0_46 = arith.constant 0 : index
    %c0_47 = arith.constant 0 : index
    %98 = vector.load %arg5[%c0_45, %c0_46, %c0_47] : memref<1x64x32xf32, #tpu.memory_space<vmem>>, vector<1x64x32xf32>
    %99 = vector.shape_cast %98 : vector<1x64x32xf32> to vector<64x32xf32>
    %100 = arith.addf %97, %99 : vector<64x32xf32>
    %c0_48 = arith.constant 0 : index
    %c0_49 = arith.constant 0 : index
    %c0_50 = arith.constant 0 : index
    %101 = vector.load %arg11[%c0_48, %c0_49, %c0_50] : memref<1x64x32xf32, #tpu.memory_space<vmem>>, vector<1x64x32xf32>
    %102 = vector.shape_cast %101 : vector<1x64x32xf32> to vector<64x32xf32>
    %103 = vector.shape_cast %100 : vector<64x32xf32> to vector<1x64x32xf32>
    tpu.vector_store %arg11[%c0_48, %c0_49, %c0_50], %103 {strides = array<i32>} : memref<1x64x32xf32, #tpu.memory_space<vmem>>, vector<1x64x32xf32>,
    return
  }
  func.func @transform_0(%arg0: i32) -> (i32, i32, i32) {
    %c0_i32 = arith.constant 0 : i32
    %c0_i32_0 = arith.constant 0 : i32
    %c0_i32_1 = arith.constant 0 : i32
    return %arg0, %c0_i32, %c0_i32_0 : i32, i32, i32
  }
  func.func @transform_1(%arg0: i32) -> (i32, i32, i32) {
    %c0_i32 = arith.constant 0 : i32
    %c0_i32_0 = arith.constant 0 : i32
    %c0_i32_1 = arith.constant 0 : i32
    return %arg0, %c0_i32, %c0_i32_0 : i32, i32, i32
  }
  func.func @transform_2(%arg0: i32) -> (i32, i32, i32) {
    %c0_i32 = arith.constant 0 : i32
    %c0_i32_0 = arith.constant 0 : i32
    %c0_i32_1 = arith.constant 0 : i32
    return %arg0, %c0_i32, %c0_i32_0 : i32, i32, i32
  }
  func.func @transform_3(%arg0: i32) -> (i32, i32, i32) {
    %c0_i32 = arith.constant 0 : i32
    %c0_i32_0 = arith.constant 0 : i32
    %c0_i32_1 = arith.constant 0 : i32
    return %arg0, %c0_i32, %c0_i32_0 : i32, i32, i32
  }
  func.func @transform_4(%arg0: i32) -> (i32, i32, i32) {
    %c0_i32 = arith.constant 0 : i32
    %c0_i32_0 = arith.constant 0 : i32
    %c0_i32_1 = arith.constant 0 : i32
    return %arg0, %c0_i32, %c0_i32_0 : i32, i32, i32
  }
  func.func @transform_5(%arg0: i32) -> (i32, i32) {
    %c0_i32 = arith.constant 0 : i32
    %c0_i32_0 = arith.constant 0 : i32
    %c0_i32_1 = arith.constant 0 : i32
    return %c0_i32, %c0_i32_0 : i32, i32
  }
  func.func @transform_6(%arg0: i32) -> (i32, i32, i32) {
    %c0_i32 = arith.constant 0 : i32
    %c0_i32_0 = arith.constant 0 : i32
    %c0_i32_1 = arith.constant 0 : i32
    %c0_i32_2 = arith.constant 0 : i32
    return %c0_i32, %c0_i32_0, %c0_i32_1 : i32, i32, i32
  }
  func.func @transform_7(%arg0: i32) -> (i32, i32, i32) {
    %c0_i32 = arith.constant 0 : i32
    %c0_i32_0 = arith.constant 0 : i32
    %c0_i32_1 = arith.constant 0 : i32
    %c0_i32_2 = arith.constant 0 : i32
    return %c0_i32, %c0_i32_0, %c0_i32_1 : i32, i32, i32
  }
  func.func @transform_8(%arg0: i32) -> (i32, i32) {
    %c0_i32 = arith.constant 0 : i32
    %c0_i32_0 = arith.constant 0 : i32
    %c0_i32_1 = arith.constant 0 : i32
    return %c0_i32, %c0_i32_0 : i32, i32
  }
  func.func @transform_9(%arg0: i32) -> (i32, i32) {
    %c0_i32 = arith.constant 0 : i32
    %c0_i32_0 = arith.constant 0 : i32
    %c0_i32_1 = arith.constant 0 : i32
    return %c0_i32, %c0_i32_0 : i32, i32
  }
  func.func @transform_10(%arg0: i32) -> (i32, i32, i32) {
    %c0_i32 = arith.constant 0 : i32
    %c0_i32_0 = arith.constant 0 : i32
    %c0_i32_1 = arith.constant 0 : i32
    return %arg0, %c0_i32, %c0_i32_0 : i32, i32, i32
  }
}

module attributes {stable_mosaic.version = 11 : i64} {
  func.func @_ln_mlp_kernel(%arg0: i32, %arg1: memref<128x32xf32, #tpu.memory_space<vmem>>, %arg2: memref<1x32xf32, #tpu.memory_space<vmem>>, %arg3: memref<1x32xf32, #tpu.memory_space<vmem>>, %arg4: memref<32x128xbf16, #tpu.memory_space<vmem>>, %arg5: memref<1x128xf32, #tpu.memory_space<vmem>>, %arg6: memref<128x32xbf16, #tpu.memory_space<vmem>>, %arg7: memref<1x32xf32, #tpu.memory_space<vmem>>, %arg8: memref<128x32xf32, #tpu.memory_space<vmem>>) attributes {dimension_semantics = [#tpu.dimension_semantics<parallel>], iteration_bounds = array<i64: 1>, scalar_prefetch = 0 : i64, scratch_operands = 0 : i64, tpu.core_type = #tpu.core_type<tc>, window_params = [{transform_indices = @transform_0, window_bounds = array<i64: 128, 32>}, {pipeline_mode = #tpu.pipeline_mode<synchronous>, transform_indices = @transform_1, window_bounds = array<i64: 1, 32>}, {pipeline_mode = #tpu.pipeline_mode<synchronous>, transform_indices = @transform_2, window_bounds = array<i64: 1, 32>}, {pipeline_mode = #tpu.pipeline_mode<synchronous>, transform_indices = @transform_3, window_bounds = array<i64: 32, 128>}, {pipeline_mode = #tpu.pipeline_mode<synchronous>, transform_indices = @transform_4, window_bounds = array<i64: 1, 128>}, {pipeline_mode = #tpu.pipeline_mode<synchronous>, transform_indices = @transform_5, window_bounds = array<i64: 128, 32>}, {pipeline_mode = #tpu.pipeline_mode<synchronous>, transform_indices = @transform_6, window_bounds = array<i64: 1, 32>}, {transform_indices = @transform_7, window_bounds = array<i64: 128, 32>}]} {
    %c0 = arith.constant 0 : index
    %c0_0 = arith.constant 0 : index
    %0 = vector.load %arg1[%c0, %c0_0] : memref<128x32xf32, #tpu.memory_space<vmem>>, vector<128x32xf32>
    %c0_1 = arith.constant 0 : index
    %c0_2 = arith.constant 0 : index
    %1 = vector.load %arg2[%c0_1, %c0_2] : memref<1x32xf32, #tpu.memory_space<vmem>>, vector<1x32xf32>
    %c0_3 = arith.constant 0 : index
    %c0_4 = arith.constant 0 : index
    %2 = vector.load %arg3[%c0_3, %c0_4] : memref<1x32xf32, #tpu.memory_space<vmem>>, vector<1x32xf32>
    %cst = arith.constant dense<0.000000e+00> : vector<128xf32>
    %3 = vector.multi_reduction <add>, %0, %cst [1] : vector<128x32xf32> to vector<128xf32>
    %4 = vector.shape_cast %3 : vector<128xf32> to vector<128x1xf32>
    %cst_5 = arith.constant 3.200000e+01 : f32
    %5 = vector.broadcast %cst_5 : f32 to vector<128x1xf32>
    %6 = arith.divf %4, %5 : vector<128x1xf32>
    %7 = vector.broadcast %6 : vector<128x1xf32> to vector<128x32xf32>
    %8 = arith.subf %0, %7 : vector<128x32xf32>
    %9 = arith.mulf %8, %8 : vector<128x32xf32>
    %cst_6 = arith.constant dense<0.000000e+00> : vector<128xf32>
    %10 = vector.multi_reduction <add>, %9, %cst_6 [1] : vector<128x32xf32> to vector<128xf32>
    %11 = vector.shape_cast %10 : vector<128xf32> to vector<128x1xf32>
    %cst_7 = arith.constant 3.200000e+01 : f32
    %12 = vector.broadcast %cst_7 : f32 to vector<128x1xf32>
    %13 = arith.divf %11, %12 : vector<128x1xf32>
    %cst_8 = arith.constant 9.99999974E-6 : f32
    %14 = vector.broadcast %cst_8 : f32 to vector<128x1xf32>
    %15 = arith.addf %13, %14 : vector<128x1xf32>
    %16 = math.rsqrt %15 : vector<128x1xf32>
    %17 = vector.broadcast %16 : vector<128x1xf32> to vector<128x32xf32>
    %18 = arith.mulf %8, %17 : vector<128x32xf32>
    %19 = vector.broadcast %1 : vector<1x32xf32> to vector<128x32xf32>
    %20 = arith.mulf %18, %19 : vector<128x32xf32>
    %21 = vector.broadcast %2 : vector<1x32xf32> to vector<128x32xf32>
    %22 = arith.addf %20, %21 : vector<128x32xf32>
    %23 = arith.truncf %22 : vector<128x32xf32> to vector<128x32xbf16>
    %c0_9 = arith.constant 0 : index
    %c0_10 = arith.constant 0 : index
    %24 = vector.load %arg4[%c0_9, %c0_10] : memref<32x128xbf16, #tpu.memory_space<vmem>>, vector<32x128xbf16>
    %cst_11 = arith.constant dense<0.000000e+00> : vector<128x128xf32>
    %25 = tpu.matmul %23, %24, %cst_11 {dimension_numbers = #tpu.dot_dimension_numbers<[1], [0], [0], [1], [0, 0, 1, 1], [], []>} : vector<128x32xbf16>, vector<32x128xbf16>, vector<128x128xf32> -> vector<128x128xf32>
    %c0_12 = arith.constant 0 : index
    %c0_13 = arith.constant 0 : index
    %26 = vector.load %arg5[%c0_12, %c0_13] : memref<1x128xf32, #tpu.memory_space<vmem>>, vector<1x128xf32>
    %27 = vector.broadcast %26 : vector<1x128xf32> to vector<128x128xf32>
    %28 = arith.addf %25, %27 : vector<128x128xf32>
    %cst_14 = arith.constant 5.000000e-01 : f32
    %29 = vector.broadcast %cst_14 : f32 to vector<128x128xf32>
    %30 = arith.mulf %29, %28 : vector<128x128xf32>
    %cst_15 = arith.constant 0.707106769 : f32
    %31 = vector.broadcast %cst_15 : f32 to vector<128x128xf32>
    %32 = arith.mulf %28, %31 : vector<128x128xf32>
    %cst_16 = arith.constant 0.000000e+00 : f32
    %33 = vector.broadcast %cst_16 : f32 to vector<128x128xf32>
    %34 = arith.cmpf oge, %32, %33 : vector<128x128xf32>
    %cst_17 = arith.constant 1.000000e+00 : f32
    %cst_18 = arith.constant -1.000000e+00 : f32
    %35 = vector.broadcast %cst_17 : f32 to vector<128x128xf32>
    %36 = vector.broadcast %cst_18 : f32 to vector<128x128xf32>
    %37 = arith.select %34, %35, %36 : vector<128x128xi1>, vector<128x128xf32>
    %38 = math.absf %32 : vector<128x128xf32>
    %cst_19 = arith.constant 0.327591091 : f32
    %39 = vector.broadcast %cst_19 : f32 to vector<128x128xf32>
    %40 = arith.mulf %39, %38 : vector<128x128xf32>
    %cst_20 = arith.constant 1.000000e+00 : f32
    %41 = vector.broadcast %cst_20 : f32 to vector<128x128xf32>
    %42 = arith.addf %41, %40 : vector<128x128xf32>
    %cst_21 = arith.constant 1.000000e+00 : f32
    %43 = vector.broadcast %cst_21 : f32 to vector<128x128xf32>
    %44 = arith.divf %43, %42 : vector<128x128xf32>
    %cst_22 = arith.constant 1.06140542 : f32
    %45 = vector.broadcast %cst_22 : f32 to vector<128x128xf32>
    %46 = arith.mulf %45, %44 : vector<128x128xf32>
    %cst_23 = arith.constant -1.45315206 : f32
    %47 = vector.broadcast %cst_23 : f32 to vector<128x128xf32>
    %48 = arith.addf %46, %47 : vector<128x128xf32>
    %49 = arith.mulf %48, %44 : vector<128x128xf32>
    %cst_24 = arith.constant 1.42141378 : f32
    %50 = vector.broadcast %cst_24 : f32 to vector<128x128xf32>
    %51 = arith.addf %49, %50 : vector<128x128xf32>
    %52 = arith.mulf %51, %44 : vector<128x128xf32>
    %cst_25 = arith.constant -0.284496725 : f32
    %53 = vector.broadcast %cst_25 : f32 to vector<128x128xf32>
    %54 = arith.addf %52, %53 : vector<128x128xf32>
    %55 = arith.mulf %54, %44 : vector<128x128xf32>
    %cst_26 = arith.constant 0.254829586 : f32
    %56 = vector.broadcast %cst_26 : f32 to vector<128x128xf32>
    %57 = arith.addf %55, %56 : vector<128x128xf32>
    %58 = arith.mulf %57, %44 : vector<128x128xf32>
    %cst_27 = arith.constant 0.000000e+00 : f32
    %59 = vector.broadcast %cst_27 : f32 to vector<128x128xf32>
    %60 = arith.subf %59, %38 : vector<128x128xf32>
    %61 = arith.mulf %60, %38 : vector<128x128xf32>
    %62 = math.exp %61 : vector<128x128xf32>
    %63 = arith.mulf %58, %62 : vector<128x128xf32>
    %cst_28 = arith.constant 1.000000e+00 : f32
    %64 = vector.broadcast %cst_28 : f32 to vector<128x128xf32>
    %65 = arith.subf %64, %63 : vector<128x128xf32>
    %66 = arith.mulf %37, %65 : vector<128x128xf32>
    %cst_29 = arith.constant 1.000000e+00 : f32
    %67 = vector.broadcast %cst_29 : f32 to vector<128x128xf32>
    %68 = arith.addf %67, %66 : vector<128x128xf32>
    %69 = arith.mulf %30, %68 : vector<128x128xf32>
    %70 = arith.truncf %69 : vector<128x128xf32> to vector<128x128xbf16>
    %c0_30 = arith.constant 0 : index
    %c0_31 = arith.constant 0 : index
    %71 = vector.load %arg6[%c0_30, %c0_31] : memref<128x32xbf16, #tpu.memory_space<vmem>>, vector<128x32xbf16>
    %cst_32 = arith.constant dense<0.000000e+00> : vector<128x32xf32>
    %72 = tpu.matmul %70, %71, %cst_32 {dimension_numbers = #tpu.dot_dimension_numbers<[1], [0], [0], [1], [0, 0, 1, 1], [], []>} : vector<128x128xbf16>, vector<128x32xbf16>, vector<128x32xf32> -> vector<128x32xf32>
    %c0_33 = arith.constant 0 : index
    %c0_34 = arith.constant 0 : index
    %73 = vector.load %arg7[%c0_33, %c0_34] : memref<1x32xf32, #tpu.memory_space<vmem>>, vector<1x32xf32>
    %74 = vector.broadcast %73 : vector<1x32xf32> to vector<128x32xf32>
    %75 = arith.addf %72, %74 : vector<128x32xf32>
    %76 = arith.addf %75, %0 : vector<128x32xf32>
    %c0_35 = arith.constant 0 : index
    %c0_36 = arith.constant 0 : index
    %77 = vector.load %arg8[%c0_35, %c0_36] : memref<128x32xf32, #tpu.memory_space<vmem>>, vector<128x32xf32>
    tpu.vector_store %arg8[%c0_35, %c0_36], %76 {strides = array<i32>} : memref<128x32xf32, #tpu.memory_space<vmem>>, vector<128x32xf32>,
    return
  }
  func.func @transform_0(%arg0: i32) -> (i32, i32) {
    %c0_i32 = arith.constant 0 : i32
    %c0_i32_0 = arith.constant 0 : i32
    return %arg0, %c0_i32 : i32, i32
  }
  func.func @transform_1(%arg0: i32) -> (i32, i32) {
    %c0_i32 = arith.constant 0 : i32
    %c0_i32_0 = arith.constant 0 : i32
    %c0_i32_1 = arith.constant 0 : i32
    return %c0_i32, %c0_i32_0 : i32, i32
  }
  func.func @transform_2(%arg0: i32) -> (i32, i32) {
    %c0_i32 = arith.constant 0 : i32
    %c0_i32_0 = arith.constant 0 : i32
    %c0_i32_1 = arith.constant 0 : i32
    return %c0_i32, %c0_i32_0 : i32, i32
  }
  func.func @transform_3(%arg0: i32) -> (i32, i32) {
    %c0_i32 = arith.constant 0 : i32
    %c0_i32_0 = arith.constant 0 : i32
    %c0_i32_1 = arith.constant 0 : i32
    return %c0_i32, %c0_i32_0 : i32, i32
  }
  func.func @transform_4(%arg0: i32) -> (i32, i32) {
    %c0_i32 = arith.constant 0 : i32
    %c0_i32_0 = arith.constant 0 : i32
    %c0_i32_1 = arith.constant 0 : i32
    return %c0_i32, %c0_i32_0 : i32, i32
  }
  func.func @transform_5(%arg0: i32) -> (i32, i32) {
    %c0_i32 = arith.constant 0 : i32
    %c0_i32_0 = arith.constant 0 : i32
    %c0_i32_1 = arith.constant 0 : i32
    return %c0_i32, %c0_i32_0 : i32, i32
  }
  func.func @transform_6(%arg0: i32) -> (i32, i32) {
    %c0_i32 = arith.constant 0 : i32
    %c0_i32_0 = arith.constant 0 : i32
    %c0_i32_1 = arith.constant 0 : i32
    return %c0_i32, %c0_i32_0 : i32, i32
  }
  func.func @transform_7(%arg0: i32) -> (i32, i32) {
    %c0_i32 = arith.constant 0 : i32
    %c0_i32_0 = arith.constant 0 : i32
    return %arg0, %c0_i32 : i32, i32
  }
}

</mosaic_0001>

<llo_original>
// kernel: fused_block_forward.5
$region0: #{fused_block_forward.5}
  #allocation0 [shape = 'u32[]', space=smem, size = 0x4, offset = 0x4, fixed_abs, tag = 'smem constant byte address 0x4 - core index']
  #allocation1 [shape = 'u32[72,128]{1,0:T(1,128)}', space=vmem, size = 0x9000, scoped, tag = 'internal scratch']
  %s0 = inlined_call_operand.vmem [shape: bf16[2,10,10,32], index: 0, kind: input, shape index: {}]
  %s1 = inlined_call_operand.vmem [shape: f32[3,3,32], index: 1, kind: input, shape index: {}]
  %s2 = inlined_call_operand.vmem [shape: f32[1,1,1,32], index: 2, kind: input, shape index: {}]
  %s3 = inlined_call_operand.vmem [shape: bf16[2,8,8,32], index: 3, kind: output, shape index: {}]
  %s4 = sld [smem:[#allocation0]]
  $region45: #{fused_block_forward.5} parent=0
    _
  %s6 = ssub.s32 1, %s4
  %s7 = scalar_select 0, %s6, %s4
  loop: start=0, step=1, limit=4
  $region2: #{fused_block_forward.5} parent=0 // loop_pre_header
    _
  $region3: #{fused_block_forward.5} parent=0 // loop_header
    %s9 = sphi 0, %s13
    %p10 = scmp.ge.s32.totalorder %s9, 4
    %s19 = sphi 0, %s21
    %s22 = sphi 0, %s19
    %s23 = sphi 0, %s22
    %s39 = sphi 0, %s23
    %s43 = sphi 0, %s43
    %s45 = sphi 0, %s43
    %s46 = sphi 0, %s45
    %s60 = sphi 0, %s46
    %s64 = sphi 0, %s64
    %s66 = sphi 0, %s64
    %s67 = sphi 0, %s66
    %s81 = sphi 0, %s67
    %s87 = sphi 0, %s89
    %s90 = sphi 0, %s87
    %s91 = sphi 0, %s90
    %s107 = sphi 0, %s91
  $region4: #{fused_block_forward.5} parent=0 // loop_header_branch
    %12 = sbr.rel (%p10) target = $region8
  $region5: #{fused_block_forward.5} parent=0 // loop_body
    %s14 = ssub.s32 %s9, 1
    %s15 = ssub.s32 %s9, 2
    %s16 = sadd.s32 %s9, 1
    %s17 = ssub.s32 %s9, %s16
    %p18 = scmp.eq.s32.totalorder %s17, 0
    %s20 = sadd.s32 %s19, 1
    %s21 = scalar_select %p18, %s19, %s20
    %p24 = pneg %p18
    %p25 = scmp.eq.s32.totalorder %s9, 1
    %p26 = por %p24, %p25
    %p27 = scmp.ne.s32.totalorder %s19, %s22
    %p28 = scmp.eq.s32.totalorder %s9, 0
    %p29 = por %p27, %p28
    %p30 = scmp.ne.s32.totalorder %s19, %s22
    %p31 = scmp.eq.s32.totalorder %s14, 1
    %p32 = por %p30, %p31
    %p33 = scmp.ne.s32.totalorder %s22, %s23
    %p34 = scmp.eq.s32.totalorder %s14, 0
    %p35 = por %p33, %p34
    %p36 = scmp.ne.s32.totalorder %s22, %s23
    %p37 = scmp.eq.s32.totalorder %s15, 1
    %p38 = por %p36, %p37
    %p40 = scmp.ne.s32.totalorder %s23, %s39
    %p41 = scmp.eq.s32.totalorder %s15, 0
    %p42 = por %p40, %p41
    %s44 = sadd.s32 %s43, 1
    %p47 = scmp.eq.s32.totalorder %s9, 1
    %p48 = scmp.ne.s32.totalorder %s43, %s45
    %p49 = scmp.eq.s32.totalorder %s9, 0
    %p50 = por %p48, %p49
    %p51 = scmp.ne.s32.totalorder %s43, %s45
    %p52 = scmp.eq.s32.totalorder %s14, 1
    %p53 = por %p51, %p52
    %p54 = scmp.ne.s32.totalorder %s45, %s46
    %p55 = scmp.eq.s32.totalorder %s14, 0
    %p56 = por %p54, %p55
    %p57 = scmp.ne.s32.totalorder %s45, %s46
    %p58 = scmp.eq.s32.totalorder %s15, 1
    %p59 = por %p57, %p58
    %p61 = scmp.ne.s32.totalorder %s46, %s60
    %p62 = scmp.eq.s32.totalorder %s15, 0
    %p63 = por %p61, %p62
    %s65 = sadd.s32 %s64, 1
    %p68 = scmp.eq.s32.totalorder %s9, 1
    %p69 = scmp.ne.s32.totalorder %s64, %s66
    %p70 = scmp.eq.s32.totalorder %s9, 0
    %p71 = por %p69, %p70
    %p72 = scmp.ne.s32.totalorder %s64, %s66
    %p73 = scmp.eq.s32.totalorder %s14, 1
    %p74 = por %p72, %p73
    %p75 = scmp.ne.s32.totalorder %s66, %s67
    %p76 = scmp.eq.s32.totalorder %s14, 0
    %p77 = por %p75, %p76
    %p78 = scmp.ne.s32.totalorder %s66, %s67
    %p79 = scmp.eq.s32.totalorder %s15, 1
    %p80 = por %p78, %p79
    %p82 = scmp.ne.s32.totalorder %s67, %s81
    %p83 = scmp.eq.s32.totalorder %s15, 0
    %p84 = por %p82, %p83
    %s85 = ssub.s32 %s9, %s16
    %p86 = scmp.eq.s32.totalorder %s85, 0
    %s88 = sadd.s32 %s87, 1
    %s89 = scalar_select %p86, %s87, %s88
    %p92 = pneg %p86
    %p93 = scmp.eq.s32.totalorder %s9, 1
    %p94 = por %p92, %p93
    %p95 = scmp.ne.s32.totalorder %s87, %s90
    %p96 = scmp.eq.s32.totalorder %s9, 0
    %p97 = por %p95, %p96
    %p98 = scmp.ne.s32.totalorder %s87, %s90
    %p99 = scmp.eq.s32.totalorder %s14, 1
    %p100 = por %p98, %p99
    %p101 = scmp.ne.s32.totalorder %s90, %s91
    %p102 = scmp.eq.s32.totalorder %s14, 0
    %p103 = por %p101, %p102
    %p104 = scmp.ne.s32.totalorder %s90, %s91
    %p105 = scmp.eq.s32.totalorder %s15, 1
    %p106 = por %p104, %p105
    %p108 = scmp.ne.s32.totalorder %s91, %s107
    %p109 = scmp.eq.s32.totalorder %s15, 0
    %p110 = por %p108, %p109
    %p111 = scmp.le.s32.totalorder 1, %s9
    %p112 = scmp.lt.s32.totalorder %s9, 3
    %p113 = pnand %p111, %p112
    %p114 = pneg %p113
    // Predicated region
    $region9: #{fused_block_forward.5} parent=5 // pred_check
      _
    $region10: #{fused_block_forward.5} parent=5 // pred_check_branch
      %116 = sbr.rel (%p113) target = $region12
    $region11: #{fused_block_forward.5} parent=5 // pred_region
      %s117 = ssub.s32 %s9, 1
      // Predicated region
      $region13: #{fused_block_forward.5} parent=11 // pred_check
        %p118 = pneg %p56
      $region14: #{fused_block_forward.5} parent=11 // pred_check_branch
        %120 = sbr.rel (%p118) target = $region16
      $region15: #{fused_block_forward.5} parent=11 // pred_region
        _
      $region16: #{fused_block_forward.5} parent=11 // pred_fallthru
        _
      // Predicated region
      $region17: #{fused_block_forward.5} parent=11 // pred_check
        %p121 = pneg %p77
      $region18: #{fused_block_forward.5} parent=11 // pred_check_branch
        %123 = sbr.rel (%p121) target = $region20
      $region19: #{fused_block_forward.5} parent=11 // pred_region
        _
      $region20: #{fused_block_forward.5} parent=11 // pred_fallthru
        _
    $region12: #{fused_block_forward.5} parent=5 // pred_fallthru
      _
    %p124 = scmp.lt.s32.totalorder %s9, 2
    // Predicated region
    $region21: #{fused_block_forward.5} parent=5 // pred_check
      %p125 = pneg %p124
    $region22: #{fused_block_forward.5} parent=5 // pred_check_branch
      %127 = sbr.rel (%p125) target = $region24
    $region23: #{fused_block_forward.5} parent=5 // pred_region
      // Predicated region
      $region25: #{fused_block_forward.5} parent=23 // pred_check
        %p128 = pneg %p29
      $region26: #{fused_block_forward.5} parent=23 // pred_check_branch
        %130 = sbr.rel (%p128) target = $region28
      $region27: #{fused_block_forward.5} parent=23 // pred_region
        %p131 = scmp.lt.s32.totalorder %s9, 1
        %s132 = scalar_select %p131, %s9, 1
        %s133 = smul.addr %s132, 20
        %s134 = smul.addr %s133, 4
        %s135 = scalar_lea.vmem %s0, %s134
      $region28: #{fused_block_forward.5} parent=23 // pred_fallthru
        _
    $region24: #{fused_block_forward.5} parent=5 // pred_fallthru
      _
    %p136 = scmp.le.s32.totalorder 1, %s9
    %p137 = scmp.lt.s32.totalorder %s9, 3
    %p138 = pnand %p136, %p137
    %p139 = pneg %p138
    // Predicated region
    $region29: #{fused_block_forward.5} parent=5 // pred_check
      _
    $region30: #{fused_block_forward.5} parent=5 // pred_check_branch
      %141 = sbr.rel (%p138) target = $region32
    $region31: #{fused_block_forward.5} parent=5 // pred_region
      %s142 = ssub.s32 %s9, 1
      %p143 = scmp.lt.s32.totalorder %s14, 1
      %s144 = scalar_select %p143, %s14, 1
      %s145 = smul.addr %s144, 20
      %s146 = smul.addr %s145, 4
      %s147 = scalar_lea.vmem %s0, %s146
      %p148 = pneg %p35
      %p149 = pneg %p32
      %p150 = pneg %p56
      %p151 = pneg %p53
      %p152 = pneg %p77
      %p153 = pneg %p74
      %p154 = pneg %p103
      %p155 = pneg %p100
      %p156 = scmp.lt.s32.totalorder %s14, 1
      %s157 = scalar_select %p156, %s14, 1
      %s158 = smul.addr %s157, 8
      %s159 = smul.addr %s158, 4
      %s160 = scalar_lea.vmem %s3, %s159
      %p161 = scmp.lt.s32.totalorder %s14, 1
      %s162 = scalar_select %p161, %s14, 1
      %s163 = smul.addr %s162, 20
      %s164 = smul.addr %s163, 4
      %s165 = scalar_lea.vmem %s0, %s164
      %p166 = scmp.lt.s32.totalorder %s14, 1
      %s167 = scalar_select %p166, %s14, 1
      %s168 = smul.addr %s167, 8
      %s169 = smul.addr %s168, 4
      %s170 = scalar_lea.vmem %s3, %s169
      %v171 = vld [vmem:[%s165] sm:$0xf]
      %v172 = vld [vmem:[%s165 + $0x4] sm:$0x1]
      %v173 = vld [vmem:[%s165 + $0x8] sm:$0xf]
      %v174 = vld [vmem:[%s165 + $0xc] sm:$0x1]
      %v175 = vld [vmem:[%s165 + $0x10] sm:$0xf]
      %v176 = vld [vmem:[%s165 + $0x14] sm:$0x1]
      %v177 = vld [vmem:[%s165 + $0x18] sm:$0xf]
      %v178 = vld [vmem:[%s165 + $0x1c] sm:$0x1]
      %v179 = vld [vmem:[%s165 + $0x20] sm:$0xf]
      %v180 = vld [vmem:[%s165 + $0x24] sm:$0x1]
      %v181 = vld [vmem:[%s165 + $0x28] sm:$0xf]
      %v182 = vld [vmem:[%s165 + $0x2c] sm:$0x1]
      %v183 = vld [vmem:[%s165 + $0x30] sm:$0xf]
      %v184 = vld [vmem:[%s165 + $0x34] sm:$0x1]
      %v185 = vld [vmem:[%s165 + $0x38] sm:$0xf]
      %v186 = vld [vmem:[%s165 + $0x3c] sm:$0x1]
      %v187 = vld [vmem:[%s165 + $0x40] sm:$0xf]
      %v188 = vld [vmem:[%s165 + $0x44] sm:$0x1]
      %v189 = vld [vmem:[%s165 + $0x48] sm:$0xf]
      %v190 = vld [vmem:[%s165 + $0x4c] sm:$0x1]
      %v191 = vunpack.c.l.bf16 %v171
      %v192 = vunpack.c.l.bf16 %v172
      %v193 = vunpack.c.l.bf16 %v173
      %v194 = vunpack.c.l.bf16 %v174
      %v195 = vunpack.c.l.bf16 %v175
      %v196 = vunpack.c.l.bf16 %v176
      %v197 = vunpack.c.l.bf16 %v177
      %v198 = vunpack.c.l.bf16 %v178
      %v199 = vunpack.c.l.bf16 %v179
      %v200 = vunpack.c.l.bf16 %v180
      %v201 = vunpack.c.l.bf16 %v181
      %v202 = vunpack.c.l.bf16 %v182
      %v203 = vunpack.c.l.bf16 %v183
      %v204 = vunpack.c.l.bf16 %v184
      %v205 = vunpack.c.l.bf16 %v185
      %v206 = vunpack.c.l.bf16 %v186
      %v207 = vunpack.c.l.bf16 %v187
      %v208 = vunpack.c.l.bf16 %v188
      %v209 = vunpack.c.l.bf16 %v189
      %v210 = vunpack.c.l.bf16 %v190
      %v211 = vld [vmem:[%s1] sm:$0x7]
      %v212 = vld [vmem:[%s1 + $0x4] sm:$0x7]
      %v213 = vld [vmem:[%s1 + $0x8] sm:$0x7]
      %v214 = vperm.slane %v211, 0
      %v215 = vmul.f32 %v191, %v214
      %v216 = vmul.f32 %v193, %v214
      %v217 = vmul.f32 %v195, %v214
      %v218 = vmul.f32 %v197, %v214
      %v219 = vmul.f32 %v199, %v214
      %v220 = vmul.f32 %v201, %v214
      %v221 = vmul.f32 %v203, %v214
      %v222 = vmul.f32 %v205, %v214
      %v223 = vld [vmem:[%s2] sm:$0x1]
      %v225 = vperm.slane %v223, 0
      %v227 = vadd.f32 %v215, %v225
      %v228 = vadd.f32 %v216, %v225
      %v229 = vadd.f32 %v217, %v225
      %v230 = vadd.f32 %v218, %v225
      %v231 = vadd.f32 %v219, %v225
      %v232 = vadd.f32 %v220, %v225
      %v233 = vadd.f32 %v221, %v225
      %v234 = vadd.f32 %v222, %v225
      %v235 = vperm.slane %v211, 1
      %v236 = vmul.f32 %v191, %v235
      %v237 = vmul.f32 %v192, %v235
      %v238 = vmul.f32 %v193, %v235
      %v239 = vmul.f32 %v194, %v235
      %v240 = vmul.f32 %v195, %v235
      %v241 = vmul.f32 %v196, %v235
      %v242 = vmul.f32 %v197, %v235
      %v243 = vmul.f32 %v198, %v235
      %v244 = vmul.f32 %v199, %v235
      %v245 = vmul.f32 %v200, %v235
      %v246 = vmul.f32 %v201, %v235
      %v247 = vmul.f32 %v202, %v235
      %v248 = vmul.f32 %v203, %v235
      %v249 = vmul.f32 %v204, %v235
      %v250 = vmul.f32 %v205, %v235
      %v251 = vmul.f32 %v206, %v235
      %vm268 = vcmask 1046528
      %v269 = vrot.slane %v236, 1
      %v270 = vrot.slane %v237, 1
      %v271 = vsel %vm268, %v269, %v270
      %v272 = vrot.slane %v238, 1
      %v273 = vrot.slane %v239, 1
      %v274 = vsel %vm268, %v272, %v273
      %v275 = vrot.slane %v240, 1
      %v276 = vrot.slane %v241, 1
      %v277 = vsel %vm268, %v275, %v276
      %v278 = vrot.slane %v242, 1
      %v279 = vrot.slane %v243, 1
      %v280 = vsel %vm268, %v278, %v279
      %v281 = vrot.slane %v244, 1
      %v282 = vrot.slane %v245, 1
      %v283 = vsel %vm268, %v281, %v282
      %v284 = vrot.slane %v246, 1
      %v285 = vrot.slane %v247, 1
      %v286 = vsel %vm268, %v284, %v285
      %v287 = vrot.slane %v248, 1
      %v288 = vrot.slane %v249, 1
      %v289 = vsel %vm268, %v287, %v288
      %v290 = vrot.slane %v250, 1
      %v291 = vrot.slane %v251, 1
      %v292 = vsel %vm268, %v290, %v291
      %v301 = vadd.f32 %v227, %v271
      %v302 = vadd.f32 %v228, %v274
      %v303 = vadd.f32 %v229, %v277
      %v304 = vadd.f32 %v230, %v280
      %v305 = vadd.f32 %v231, %v283
      %v306 = vadd.f32 %v232, %v286
      %v307 = vadd.f32 %v233, %v289
      %v308 = vadd.f32 %v234, %v292
      %v309 = vperm.slane %v211, 2
      %v310 = vmul.f32 %v191, %v309
      %v311 = vmul.f32 %v192, %v309
      %v312 = vmul.f32 %v193, %v309
      %v313 = vmul.f32 %v194, %v309
      %v314 = vmul.f32 %v195, %v309
      %v315 = vmul.f32 %v196, %v309
      %v316 = vmul.f32 %v197, %v309
      %v317 = vmul.f32 %v198, %v309
      %v318 = vmul.f32 %v199, %v309
      %v319 = vmul.f32 %v200, %v309
      %v320 = vmul.f32 %v201, %v309
      %v321 = vmul.f32 %v202, %v309
      %v322 = vmul.f32 %v203, %v309
      %v323 = vmul.f32 %v204, %v309
      %v324 = vmul.f32 %v205, %v309
      %v325 = vmul.f32 %v206, %v309
      %vm342 = vcmask 1045504
      %v343 = vrot.slane %v310, 2
      %v344 = vrot.slane %v311, 2
      %v345 = vsel %vm342, %v343, %v344
      %v346 = vrot.slane %v312, 2
      %v347 = vrot.slane %v313, 2
      %v348 = vsel %vm342, %v346, %v347
      %v349 = vrot.slane %v314, 2
      %v350 = vrot.slane %v315, 2
      %v351 = vsel %vm342, %v349, %v350
      %v352 = vrot.slane %v316, 2
      %v353 = vrot.slane %v317, 2
      %v354 = vsel %vm342, %v352, %v353
      %v355 = vrot.slane %v318, 2
      %v356 = vrot.slane %v319, 2
      %v357 = vsel %vm342, %v355, %v356
      %v358 = vrot.slane %v320, 2
      %v359 = vrot.slane %v321, 2
      %v360 = vsel %vm342, %v358, %v359
      %v361 = vrot.slane %v322, 2
      %v362 = vrot.slane %v323, 2
      %v363 = vsel %vm342, %v361, %v362
      %v364 = vrot.slane %v324, 2
      %v365 = vrot.slane %v325, 2
      %v366 = vsel %vm342, %v364, %v365
      %v375 = vadd.f32 %v301, %v345
      %v376 = vadd.f32 %v302, %v348
      %v377 = vadd.f32 %v303, %v351
      %v378 = vadd.f32 %v304, %v354
      %v379 = vadd.f32 %v305, %v357
      %v380 = vadd.f32 %v306, %v360
      %v381 = vadd.f32 %v307, %v363
      %v382 = vadd.f32 %v308, %v366
      %v383 = vperm.slane %v212, 0
      %v384 = vmul.f32 %v193, %v383
      %v385 = vmul.f32 %v195, %v383
      %v386 = vmul.f32 %v197, %v383
      %v387 = vmul.f32 %v199, %v383
      %v388 = vmul.f32 %v201, %v383
      %v389 = vmul.f32 %v203, %v383
      %v390 = vmul.f32 %v205, %v383
      %v391 = vmul.f32 %v207, %v383
      %v392 = vadd.f32 %v375, %v384
      %v393 = vadd.f32 %v376, %v385
      %v394 = vadd.f32 %v377, %v386
      %v395 = vadd.f32 %v378, %v387
      %v396 = vadd.f32 %v379, %v388
      %v397 = vadd.f32 %v380, %v389
      %v398 = vadd.f32 %v381, %v390
      %v399 = vadd.f32 %v382, %v391
      %v400 = vperm.slane %v212, 1
      %v401 = vmul.f32 %v193, %v400
      %v402 = vmul.f32 %v194, %v400
      %v403 = vmul.f32 %v195, %v400
      %v404 = vmul.f32 %v196, %v400
      %v405 = vmul.f32 %v197, %v400
      %v406 = vmul.f32 %v198, %v400
      %v407 = vmul.f32 %v199, %v400
      %v408 = vmul.f32 %v200, %v400
      %v409 = vmul.f32 %v201, %v400
      %v410 = vmul.f32 %v202, %v400
      %v411 = vmul.f32 %v203, %v400
      %v412 = vmul.f32 %v204, %v400
      %v413 = vmul.f32 %v205, %v400
      %v414 = vmul.f32 %v206, %v400
      %v415 = vmul.f32 %v207, %v400
      %v416 = vmul.f32 %v208, %v400
      %v433 = vrot.slane %v401, 1
      %v434 = vrot.slane %v402, 1
      %v435 = vsel %vm268, %v433, %v434
      %v436 = vrot.slane %v403, 1
      %v437 = vrot.slane %v404, 1
      %v438 = vsel %vm268, %v436, %v437
      %v439 = vrot.slane %v405, 1
      %v440 = vrot.slane %v406, 1
      %v441 = vsel %vm268, %v439, %v440
      %v442 = vrot.slane %v407, 1
      %v443 = vrot.slane %v408, 1
      %v444 = vsel %vm268, %v442, %v443
      %v445 = vrot.slane %v409, 1
      %v446 = vrot.slane %v410, 1
      %v447 = vsel %vm268, %v445, %v446
      %v448 = vrot.slane %v411, 1
      %v449 = vrot.slane %v412, 1
      %v450 = vsel %vm268, %v448, %v449
      %v451 = vrot.slane %v413, 1
      %v452 = vrot.slane %v414, 1
      %v453 = vsel %vm268, %v451, %v452
      %v454 = vrot.slane %v415, 1
      %v455 = vrot.slane %v416, 1
      %v456 = vsel %vm268, %v454, %v455
      %v465 = vadd.f32 %v392, %v435
      %v466 = vadd.f32 %v393, %v438
      %v467 = vadd.f32 %v394, %v441
      %v468 = vadd.f32 %v395, %v444
      %v469 = vadd.f32 %v396, %v447
      %v470 = vadd.f32 %v397, %v450
      %v471 = vadd.f32 %v398, %v453
      %v472 = vadd.f32 %v399, %v456
      %v473 = vperm.slane %v212, 2
      %v474 = vmul.f32 %v193, %v473
      %v475 = vmul.f32 %v194, %v473
      %v476 = vmul.f32 %v195, %v473
      %v477 = vmul.f32 %v196, %v473
      %v478 = vmul.f32 %v197, %v473
      %v479 = vmul.f32 %v198, %v473
      %v480 = vmul.f32 %v199, %v473
      %v481 = vmul.f32 %v200, %v473
      %v482 = vmul.f32 %v201, %v473
      %v483 = vmul.f32 %v202, %v473
      %v484 = vmul.f32 %v203, %v473
      %v485 = vmul.f32 %v204, %v473
      %v486 = vmul.f32 %v205, %v473
      %v487 = vmul.f32 %v206, %v473
      %v488 = vmul.f32 %v207, %v473
      %v489 = vmul.f32 %v208, %v473
      %v506 = vrot.slane %v474, 2
      %v507 = vrot.slane %v475, 2
      %v508 = vsel %vm342, %v506, %v507
      %v509 = vrot.slane %v476, 2
      %v510 = vrot.slane %v477, 2
      %v511 = vsel %vm342, %v509, %v510
      %v512 = vrot.slane %v478, 2
      %v513 = vrot.slane %v479, 2
      %v514 = vsel %vm342, %v512, %v513
      %v515 = vrot.slane %v480, 2
      %v516 = vrot.slane %v481, 2
      %v517 = vsel %vm342, %v515, %v516
      %v518 = vrot.slane %v482, 2
      %v519 = vrot.slane %v483, 2
      %v520 = vsel %vm342, %v518, %v519
      %v521 = vrot.slane %v484, 2
      %v522 = vrot.slane %v485, 2
      %v523 = vsel %vm342, %v521, %v522
      %v524 = vrot.slane %v486, 2
      %v525 = vrot.slane %v487, 2
      %v526 = vsel %vm342, %v524, %v525
      %v527 = vrot.slane %v488, 2
      %v528 = vrot.slane %v489, 2
      %v529 = vsel %vm342, %v527, %v528
      %v538 = vadd.f32 %v465, %v508
      %v539 = vadd.f32 %v466, %v511
      %v540 = vadd.f32 %v467, %v514
      %v541 = vadd.f32 %v468, %v517
      %v542 = vadd.f32 %v469, %v520
      %v543 = vadd.f32 %v470, %v523
      %v544 = vadd.f32 %v471, %v526
      %v545 = vadd.f32 %v472, %v529
      %v546 = vperm.slane %v213, 0
      %v547 = vmul.f32 %v195, %v546
      %v548 = vmul.f32 %v197, %v546
      %v549 = vmul.f32 %v199, %v546
      %v550 = vmul.f32 %v201, %v546
      %v551 = vmul.f32 %v203, %v546
      %v552 = vmul.f32 %v205, %v546
      %v553 = vmul.f32 %v207, %v546
      %v554 = vmul.f32 %v209, %v546
      %v555 = vadd.f32 %v538, %v547
      %v556 = vadd.f32 %v539, %v548
      %v557 = vadd.f32 %v540, %v549
      %v558 = vadd.f32 %v541, %v550
      %v559 = vadd.f32 %v542, %v551
      %v560 = vadd.f32 %v543, %v552
      %v561 = vadd.f32 %v544, %v553
      %v562 = vadd.f32 %v545, %v554
      %v563 = vperm.slane %v213, 1
      %v564 = vmul.f32 %v195, %v563
      %v565 = vmul.f32 %v196, %v563
      %v566 = vmul.f32 %v197, %v563
      %v567 = vmul.f32 %v198, %v563
      %v568 = vmul.f32 %v199, %v563
      %v569 = vmul.f32 %v200, %v563
      %v570 = vmul.f32 %v201, %v563
      %v571 = vmul.f32 %v202, %v563
      %v572 = vmul.f32 %v203, %v563
      %v573 = vmul.f32 %v204, %v563
      %v574 = vmul.f32 %v205, %v563
      %v575 = vmul.f32 %v206, %v563
      %v576 = vmul.f32 %v207, %v563
      %v577 = vmul.f32 %v208, %v563
      %v578 = vmul.f32 %v209, %v563
      %v579 = vmul.f32 %v210, %v563
      %v596 = vrot.slane %v564, 1
      %v597 = vrot.slane %v565, 1
      %v598 = vsel %vm268, %v596, %v597
      %v599 = vrot.slane %v566, 1
      %v600 = vrot.slane %v567, 1
      %v601 = vsel %vm268, %v599, %v600
      %v602 = vrot.slane %v568, 1
      %v603 = vrot.slane %v569, 1
      %v604 = vsel %vm268, %v602, %v603
      %v605 = vrot.slane %v570, 1
      %v606 = vrot.slane %v571, 1
      %v607 = vsel %vm268, %v605, %v606
      %v608 = vrot.slane %v572, 1
      %v609 = vrot.slane %v573, 1
      %v610 = vsel %vm268, %v608, %v609
      %v611 = vrot.slane %v574, 1
      %v612 = vrot.slane %v575, 1
      %v613 = vsel %vm268, %v611, %v612
      %v614 = vrot.slane %v576, 1
      %v615 = vrot.slane %v577, 1
      %v616 = vsel %vm268, %v614, %v615
      %v617 = vrot.slane %v578, 1
      %v618 = vrot.slane %v579, 1
      %v619 = vsel %vm268, %v617, %v618
      %v628 = vadd.f32 %v555, %v598
      %v629 = vadd.f32 %v556, %v601
      %v630 = vadd.f32 %v557, %v604
      %v631 = vadd.f32 %v558, %v607
      %v632 = vadd.f32 %v559, %v610
      %v633 = vadd.f32 %v560, %v613
      %v634 = vadd.f32 %v561, %v616
      %v635 = vadd.f32 %v562, %v619
      %v636 = vperm.slane %v213, 2
      %v637 = vmul.f32 %v195, %v636
      %v638 = vmul.f32 %v196, %v636
      %v639 = vmul.f32 %v197, %v636
      %v640 = vmul.f32 %v198, %v636
      %v641 = vmul.f32 %v199, %v636
      %v642 = vmul.f32 %v200, %v636
      %v643 = vmul.f32 %v201, %v636
      %v644 = vmul.f32 %v202, %v636
      %v645 = vmul.f32 %v203, %v636
      %v646 = vmul.f32 %v204, %v636
      %v647 = vmul.f32 %v205, %v636
      %v648 = vmul.f32 %v206, %v636
      %v649 = vmul.f32 %v207, %v636
      %v650 = vmul.f32 %v208, %v636
      %v651 = vmul.f32 %v209, %v636
      %v652 = vmul.f32 %v210, %v636
      %v669 = vrot.slane %v637, 2
      %v670 = vrot.slane %v638, 2
      %v671 = vsel %vm342, %v669, %v670
      %v672 = vrot.slane %v639, 2
      %v673 = vrot.slane %v640, 2
      %v674 = vsel %vm342, %v672, %v673
      %v675 = vrot.slane %v641, 2
      %v676 = vrot.slane %v642, 2
      %v677 = vsel %vm342, %v675, %v676
      %v678 = vrot.slane %v643, 2
      %v679 = vrot.slane %v644, 2
      %v680 = vsel %vm342, %v678, %v679
      %v681 = vrot.slane %v645, 2
      %v682 = vrot.slane %v646, 2
      %v683 = vsel %vm342, %v681, %v682
      %v684 = vrot.slane %v647, 2
      %v685 = vrot.slane %v648, 2
      %v686 = vsel %vm342, %v684, %v685
      %v687 = vrot.slane %v649, 2
      %v688 = vrot.slane %v650, 2
      %v689 = vsel %vm342, %v687, %v688
      %v690 = vrot.slane %v651, 2
      %v691 = vrot.slane %v652, 2
      %v692 = vsel %vm342, %v690, %v691
      %v701 = vadd.f32 %v628, %v671
      %v702 = vadd.f32 %v629, %v674
      %v703 = vadd.f32 %v630, %v677
      %v704 = vadd.f32 %v631, %v680
      %v705 = vadd.f32 %v632, %v683
      %v706 = vadd.f32 %v633, %v686
      %v707 = vadd.f32 %v634, %v689
      %v708 = vadd.f32 %v635, %v692
      %v709 = vpack.c.bf16 %v701, %v701
      %v710 = vpack.c.bf16 %v702, %v702
      %v711 = vpack.c.bf16 %v703, %v703
      %v712 = vpack.c.bf16 %v704, %v704
      %v713 = vpack.c.bf16 %v705, %v705
      %v714 = vpack.c.bf16 %v706, %v706
      %v715 = vpack.c.bf16 %v707, %v707
      %v716 = vpack.c.bf16 %v708, %v708
      %vm717 = vcmask 257024
      %718 = vst.msk [vmem:[%s170] sm:$0xf] %vm717, %v709
      %719 = vst.msk [vmem:[%s170 + $0x4] sm:$0xf] %vm717, %v710
      %720 = vst.msk [vmem:[%s170 + $0x8] sm:$0xf] %vm717, %v711
      %721 = vst.msk [vmem:[%s170 + $0xc] sm:$0xf] %vm717, %v712
      %722 = vst.msk [vmem:[%s170 + $0x10] sm:$0xf] %vm717, %v713
      %723 = vst.msk [vmem:[%s170 + $0x14] sm:$0xf] %vm717, %v714
      %724 = vst.msk [vmem:[%s170 + $0x18] sm:$0xf] %vm717, %v715
      %725 = vst.msk [vmem:[%s170 + $0x1c] sm:$0xf] %vm717, %v716
      %p726 = scmp.lt.s32.totalorder %s14, 1
      %s727 = scalar_select %p726, %s14, 1
      %s728 = smul.addr %s727, 8
      %s729 = smul.addr %s728, 4
      %s730 = scalar_lea.vmem %s3, %s729
      // Predicated region
      $region33: #{fused_block_forward.5} parent=31 // pred_check
        %p731 = pneg %p100
      $region34: #{fused_block_forward.5} parent=31 // pred_check_branch
        %733 = sbr.rel (%p731) target = $region36
      $region35: #{fused_block_forward.5} parent=31 // pred_region
        _
      $region36: #{fused_block_forward.5} parent=31 // pred_fallthru
        _
    $region32: #{fused_block_forward.5} parent=5 // pred_fallthru
      _
    %p734 = scmp.le.s32.totalorder 2, %s9
    // Predicated region
    $region37: #{fused_block_forward.5} parent=5 // pred_check
      %p735 = pneg %p734
    $region38: #{fused_block_forward.5} parent=5 // pred_check_branch
      %737 = sbr.rel (%p735) target = $region40
    $region39: #{fused_block_forward.5} parent=5 // pred_region
      %s738 = ssub.s32 %s9, 2
      // Predicated region
      $region41: #{fused_block_forward.5} parent=39 // pred_check
        %p739 = pneg %p106
      $region42: #{fused_block_forward.5} parent=39 // pred_check_branch
        %741 = sbr.rel (%p739) target = $region44
      $region43: #{fused_block_forward.5} parent=39 // pred_region
        %p742 = scmp.lt.s32.totalorder %s15, 1
        %s743 = scalar_select %p742, %s15, 1
        %s744 = smul.addr %s743, 8
        %s745 = smul.addr %s744, 4
        %s746 = scalar_lea.vmem %s3, %s745
      $region44: #{fused_block_forward.5} parent=39 // pred_fallthru
        _
    $region40: #{fused_block_forward.5} parent=5 // pred_fallthru
      _
  $region6: #{fused_block_forward.5} parent=0 // loop_footer
    %s13 = sadd.s32 1, %s9
  $region7: #{fused_block_forward.5} parent=0 // loop_footer_branch
    %8 = sbr.rel target = $region3
  $region8: #{fused_block_forward.5} parent=0 // loop_exit
    _

// kernel: fused_block_forward.4
$region0: #{fused_block_forward.4}
  #allocation0 [shape = 'u32[]', space=smem, size = 0x4, offset = 0x4, fixed_abs, tag = 'smem constant byte address 0x4 - core index']
  #allocation1 [shape = 'u32[72,128]{1,0:T(1,128)}', space=vmem, size = 0x9000, scoped, tag = 'internal scratch']
  %s0 = inlined_call_operand.vmem [shape: f32[128,32], index: 0, kind: input, shape index: {}]
  %s1 = inlined_call_operand.vmem [shape: f32[1,32], index: 1, kind: input, shape index: {}]
  %s2 = inlined_call_operand.vmem [shape: f32[1,32], index: 2, kind: input, shape index: {}]
  %s3 = inlined_call_operand.vmem [shape: bf16[32,32], index: 3, kind: input, shape index: {}]
  %s4 = inlined_call_operand.vmem [shape: bf16[32,32], index: 4, kind: input, shape index: {}]
  %s5 = inlined_call_operand.vmem [shape: bf16[32,32], index: 5, kind: input, shape index: {}]
  %s6 = inlined_call_operand.vmem [shape: bf16[128,32], index: 6, kind: output, shape index: {0}]
  %s7 = inlined_call_operand.vmem [shape: bf16[128,32], index: 7, kind: output, shape index: {1}]
  %s8 = inlined_call_operand.vmem [shape: bf16[128,32], index: 8, kind: output, shape index: {2}]
  %9 = xla_tuple %s6, %s7, %s8
  %s10 = sld [smem:[#allocation0]]
  $region50: #{fused_block_forward.4} parent=0
    _
  %s12 = ssub.s32 1, %s10
  %s13 = scalar_select 0, %s12, %s10
  // Predicated region
  $region2: #{fused_block_forward.4} parent=0 // pred_check
    _
  $region3: #{fused_block_forward.4} parent=0 // pred_check_branch
    %15 = sbr.rel (0) target = $region5
  $region4: #{fused_block_forward.4} parent=0 // pred_region
    _
  $region5: #{fused_block_forward.4} parent=0 // pred_fallthru
    _
  // Predicated region
  $region6: #{fused_block_forward.4} parent=0 // pred_check
    _
  $region7: #{fused_block_forward.4} parent=0 // pred_check_branch
    %17 = sbr.rel (0) target = $region9
  $region8: #{fused_block_forward.4} parent=0 // pred_region
    _
  $region9: #{fused_block_forward.4} parent=0 // pred_fallthru
    _
  // Predicated region
  $region10: #{fused_block_forward.4} parent=0 // pred_check
    _
  $region11: #{fused_block_forward.4} parent=0 // pred_check_branch
    %19 = sbr.rel (0) target = $region13
  $region12: #{fused_block_forward.4} parent=0 // pred_region
    _
  $region13: #{fused_block_forward.4} parent=0 // pred_fallthru
    _
  // Predicated region
  $region14: #{fused_block_forward.4} parent=0 // pred_check
    _
  $region15: #{fused_block_forward.4} parent=0 // pred_check_branch
    %21 = sbr.rel (0) target = $region17
  $region16: #{fused_block_forward.4} parent=0 // pred_region
    _
  $region17: #{fused_block_forward.4} parent=0 // pred_fallthru
    _
  // Predicated region
  $region18: #{fused_block_forward.4} parent=0 // pred_check
    _
  $region19: #{fused_block_forward.4} parent=0 // pred_check_branch
    %23 = sbr.rel (0) target = $region21
  $region20: #{fused_block_forward.4} parent=0 // pred_region
    _
  $region21: #{fused_block_forward.4} parent=0 // pred_fallthru
    _
  // Predicated region
  $region22: #{fused_block_forward.4} parent=0 // pred_check
    _
  $region23: #{fused_block_forward.4} parent=0 // pred_check_branch
    %25 = sbr.rel (0) target = $region25
  $region24: #{fused_block_forward.4} parent=0 // pred_region
    _
  $region25: #{fused_block_forward.4} parent=0 // pred_fallthru
    _
  %v27 = vld [vmem:[%s0] sm:$0xff]
  %v28 = vld [vmem:[%s0 + $0x8] sm:$0xff]
  %v29 = vld [vmem:[%s0 + $0x10] sm:$0xff]
  %v30 = vld [vmem:[%s0 + $0x18] sm:$0xff]
  %v31 = vld [vmem:[%s0 + $0x20] sm:$0xff]
  %v32 = vld [vmem:[%s0 + $0x28] sm:$0xff]
  %v33 = vld [vmem:[%s0 + $0x30] sm:$0xff]
  %v34 = vld [vmem:[%s0 + $0x38] sm:$0xff]
  %v35 = vld [vmem:[%s0 + $0x40] sm:$0xff]
  %v36 = vld [vmem:[%s0 + $0x48] sm:$0xff]
  %v37 = vld [vmem:[%s0 + $0x50] sm:$0xff]
  %v38 = vld [vmem:[%s0 + $0x58] sm:$0xff]
  %v39 = vld [vmem:[%s0 + $0x60] sm:$0xff]
  %v40 = vld [vmem:[%s0 + $0x68] sm:$0xff]
  %v41 = vld [vmem:[%s0 + $0x70] sm:$0xff]
  %v42 = vld [vmem:[%s0 + $0x78] sm:$0xff]
  %v43 = vld [vmem:[%s1] sm:$0x1]
  %v44 = vld [vmem:[%s2] sm:$0x1]
  %vm45 = vcmask 261120
  %v46 = vsel %vm45, %v27, 0.0
  %47 = vadd.xlane.f32.xlu0 %v46
  %v48 = vpop.xlane.xlu0 %47
  %v49 = vsel %vm45, %v28, 0.0
  %50 = vadd.xlane.f32.xlu0 %v49
  %v51 = vpop.xlane.xlu0 %50
  %v52 = vsel %vm45, %v29, 0.0
  %53 = vadd.xlane.f32.xlu0 %v52
  %v54 = vpop.xlane.xlu0 %53
  %v55 = vsel %vm45, %v30, 0.0
  %56 = vadd.xlane.f32.xlu0 %v55
  %v57 = vpop.xlane.xlu0 %56
  %v58 = vsel %vm45, %v31, 0.0
  %59 = vadd.xlane.f32.xlu0 %v58
  %v60 = vpop.xlane.xlu0 %59
  %v61 = vsel %vm45, %v32, 0.0
  %62 = vadd.xlane.f32.xlu0 %v61
  %v63 = vpop.xlane.xlu0 %62
  %v64 = vsel %vm45, %v33, 0.0
  %65 = vadd.xlane.f32.xlu0 %v64
  %v66 = vpop.xlane.xlu0 %65
  %v67 = vsel %vm45, %v34, 0.0
  %68 = vadd.xlane.f32.xlu0 %v67
  %v69 = vpop.xlane.xlu0 %68
  %v70 = vsel %vm45, %v35, 0.0
  %71 = vadd.xlane.f32.xlu0 %v70
  %v72 = vpop.xlane.xlu0 %71
  %v73 = vsel %vm45, %v36, 0.0
  %74 = vadd.xlane.f32.xlu0 %v73
  %v75 = vpop.xlane.xlu0 %74
  %v76 = vsel %vm45, %v37, 0.0
  %77 = vadd.xlane.f32.xlu0 %v76
  %v78 = vpop.xlane.xlu0 %77
  %v79 = vsel %vm45, %v38, 0.0
  %80 = vadd.xlane.f32.xlu0 %v79
  %v81 = vpop.xlane.xlu0 %80
  %v82 = vsel %vm45, %v39, 0.0
  %83 = vadd.xlane.f32.xlu0 %v82
  %v84 = vpop.xlane.xlu0 %83
  %v85 = vsel %vm45, %v40, 0.0
  %86 = vadd.xlane.f32.xlu0 %v85
  %v87 = vpop.xlane.xlu0 %86
  %v88 = vsel %vm45, %v41, 0.0
  %89 = vadd.xlane.f32.xlu0 %v88
  %v90 = vpop.xlane.xlu0 %89
  %v91 = vsel %vm45, %v42, 0.0
  %92 = vadd.xlane.f32.xlu0 %v91
  %v93 = vpop.xlane.xlu0 %92
  %v94 = vrcp.pop 32.0
  %v95 = vmul.f32 32.0, %v94
  %v96 = vsub.f32 1.0, %v95
  %v97 = vmul.f32 %v94, %v96
  %v98 = vadd.f32 %v94, %v97
  %vm99 = vweird.f32 %v94
  %v100 = vsel %vm99, %v94, %v98
  %v101 = vmul.f32 %v48, %v100
  %v102 = vmul.f32 %v51, %v100
  %v103 = vmul.f32 %v54, %v100
  %v104 = vmul.f32 %v57, %v100
  %v105 = vmul.f32 %v60, %v100
  %v106 = vmul.f32 %v63, %v100
  %v107 = vmul.f32 %v66, %v100
  %v108 = vmul.f32 %v69, %v100
  %v109 = vmul.f32 %v72, %v100
  %v110 = vmul.f32 %v75, %v100
  %v111 = vmul.f32 %v78, %v100
  %v112 = vmul.f32 %v81, %v100
  %v113 = vmul.f32 %v84, %v100
  %v114 = vmul.f32 %v87, %v100
  %v115 = vmul.f32 %v90, %v100
  %v116 = vmul.f32 %v93, %v100
  %v117 = vsub.f32 %v27, %v101
  %v118 = vsub.f32 %v28, %v102
  %v119 = vsub.f32 %v29, %v103
  %v120 = vsub.f32 %v30, %v104
  %v121 = vsub.f32 %v31, %v105
  %v122 = vsub.f32 %v32, %v106
  %v123 = vsub.f32 %v33, %v107
  %v124 = vsub.f32 %v34, %v108
  %v125 = vsub.f32 %v35, %v109
  %v126 = vsub.f32 %v36, %v110
  %v127 = vsub.f32 %v37, %v111
  %v128 = vsub.f32 %v38, %v112
  %v129 = vsub.f32 %v39, %v113
  %v130 = vsub.f32 %v40, %v114
  %v131 = vsub.f32 %v41, %v115
  %v132 = vsub.f32 %v42, %v116
  %v133 = vmul.f32 %v117, %v117
  %v134 = vmul.f32 %v118, %v118
  %v135 = vmul.f32 %v119, %v119
  %v136 = vmul.f32 %v120, %v120
  %v137 = vmul.f32 %v121, %v121
  %v138 = vmul.f32 %v122, %v122
  %v139 = vmul.f32 %v123, %v123
  %v140 = vmul.f32 %v124, %v124
  %v141 = vmul.f32 %v125, %v125
  %v142 = vmul.f32 %v126, %v126
  %v143 = vmul.f32 %v127, %v127
  %v144 = vmul.f32 %v128, %v128
  %v145 = vmul.f32 %v129, %v129
  %v146 = vmul.f32 %v130, %v130
  %v147 = vmul.f32 %v131, %v131
  %v148 = vmul.f32 %v132, %v132
  %v149 = vsel %vm45, %v133, 0.0
  %150 = vadd.xlane.f32.xlu0 %v149
  %v151 = vpop.xlane.xlu0 %150
  %v152 = vsel %vm45, %v134, 0.0
  %153 = vadd.xlane.f32.xlu0 %v152
  %v154 = vpop.xlane.xlu0 %153
  %v155 = vsel %vm45, %v135, 0.0
  %156 = vadd.xlane.f32.xlu0 %v155
  %v157 = vpop.xlane.xlu0 %156
  %v158 = vsel %vm45, %v136, 0.0
  %159 = vadd.xlane.f32.xlu0 %v158
  %v160 = vpop.xlane.xlu0 %159
  %v161 = vsel %vm45, %v137, 0.0
  %162 = vadd.xlane.f32.xlu0 %v161
  %v163 = vpop.xlane.xlu0 %162
  %v164 = vsel %vm45, %v138, 0.0
  %165 = vadd.xlane.f32.xlu0 %v164
  %v166 = vpop.xlane.xlu0 %165
  %v167 = vsel %vm45, %v139, 0.0
  %168 = vadd.xlane.f32.xlu0 %v167
  %v169 = vpop.xlane.xlu0 %168
  %v170 = vsel %vm45, %v140, 0.0
  %171 = vadd.xlane.f32.xlu0 %v170
  %v172 = vpop.xlane.xlu0 %171
  %v173 = vsel %vm45, %v141, 0.0
  %174 = vadd.xlane.f32.xlu0 %v173
  %v175 = vpop.xlane.xlu0 %174
  %v176 = vsel %vm45, %v142, 0.0
  %177 = vadd.xlane.f32.xlu0 %v176
  %v178 = vpop.xlane.xlu0 %177
  %v179 = vsel %vm45, %v143, 0.0
  %180 = vadd.xlane.f32.xlu0 %v179
  %v181 = vpop.xlane.xlu0 %180
  %v182 = vsel %vm45, %v144, 0.0
  %183 = vadd.xlane.f32.xlu0 %v182
  %v184 = vpop.xlane.xlu0 %183
  %v185 = vsel %vm45, %v145, 0.0
  %186 = vadd.xlane.f32.xlu0 %v185
  %v187 = vpop.xlane.xlu0 %186
  %v188 = vsel %vm45, %v146, 0.0
  %189 = vadd.xlane.f32.xlu0 %v188
  %v190 = vpop.xlane.xlu0 %189
  %v191 = vsel %vm45, %v147, 0.0
  %192 = vadd.xlane.f32.xlu0 %v191
  %v193 = vpop.xlane.xlu0 %192
  %v194 = vsel %vm45, %v148, 0.0
  %195 = vadd.xlane.f32.xlu0 %v194
  %v196 = vpop.xlane.xlu0 %195
  %v197 = vmul.f32 %v151, %v100
  %v198 = vmul.f32 %v154, %v100
  %v199 = vmul.f32 %v157, %v100
  %v200 = vmul.f32 %v160, %v100
  %v201 = vmul.f32 %v163, %v100
  %v202 = vmul.f32 %v166, %v100
  %v203 = vmul.f32 %v169, %v100
  %v204 = vmul.f32 %v172, %v100
  %v205 = vmul.f32 %v175, %v100
  %v206 = vmul.f32 %v178, %v100
  %v207 = vmul.f32 %v181, %v100
  %v208 = vmul.f32 %v184, %v100
  %v209 = vmul.f32 %v187, %v100
  %v210 = vmul.f32 %v190, %v100
  %v211 = vmul.f32 %v193, %v100
  %v212 = vmul.f32 %v196, %v100
  %v213 = vadd.f32 %v197, 1e-05
  %v214 = vadd.f32 %v198, 1e-05
  %v215 = vadd.f32 %v199, 1e-05
  %v216 = vadd.f32 %v200, 1e-05
  %v217 = vadd.f32 %v201, 1e-05
  %v218 = vadd.f32 %v202, 1e-05
  %v219 = vadd.f32 %v203, 1e-05
  %v220 = vadd.f32 %v204, 1e-05
  %v221 = vadd.f32 %v205, 1e-05
  %v222 = vadd.f32 %v206, 1e-05
  %v223 = vadd.f32 %v207, 1e-05
  %v224 = vadd.f32 %v208, 1e-05
  %v225 = vadd.f32 %v209, 1e-05
  %v226 = vadd.f32 %v210, 1e-05
  %v227 = vadd.f32 %v211, 1e-05
  %v228 = vadd.f32 %v212, 1e-05
  %v229 = vrsqrt.pop %v213
  %v230 = vmul.f32 %v229, %v213
  %v231 = vmul.f32 %v230, %v229
  %v232 = vmul.f32 0.5, %v231
  %v233 = vsub.f32 1.5, %v232
  %v234 = vmul.f32 %v229, %v233
  %vm235 = vweird.f32 %v213
  %vm236 = vweird.f32 %v229
  %vm237 = vmor %vm235, %vm236
  %v238 = vsel %vm237, %v229, %v234
  %v239 = vrsqrt.pop %v214
  %v240 = vmul.f32 %v239, %v214
  %v241 = vmul.f32 %v240, %v239
  %v242 = vmul.f32 0.5, %v241
  %v243 = vsub.f32 1.5, %v242
  %v244 = vmul.f32 %v239, %v243
  %vm245 = vweird.f32 %v214
  %vm246 = vweird.f32 %v239
  %vm247 = vmor %vm245, %vm246
  %v248 = vsel %vm247, %v239, %v244
  %v249 = vrsqrt.pop %v215
  %v250 = vmul.f32 %v249, %v215
  %v251 = vmul.f32 %v250, %v249
  %v252 = vmul.f32 0.5, %v251
  %v253 = vsub.f32 1.5, %v252
  %v254 = vmul.f32 %v249, %v253
  %vm255 = vweird.f32 %v215
  %vm256 = vweird.f32 %v249
  %vm257 = vmor %vm255, %vm256
  %v258 = vsel %vm257, %v249, %v254
  %v259 = vrsqrt.pop %v216
  %v260 = vmul.f32 %v259, %v216
  %v261 = vmul.f32 %v260, %v259
  %v262 = vmul.f32 0.5, %v261
  %v263 = vsub.f32 1.5, %v262
  %v264 = vmul.f32 %v259, %v263
  %vm265 = vweird.f32 %v216
  %vm266 = vweird.f32 %v259
  %vm267 = vmor %vm265, %vm266
  %v268 = vsel %vm267, %v259, %v264
  %v269 = vrsqrt.pop %v217
  %v270 = vmul.f32 %v269, %v217
  %v271 = vmul.f32 %v270, %v269
  %v272 = vmul.f32 0.5, %v271
  %v273 = vsub.f32 1.5, %v272
  %v274 = vmul.f32 %v269, %v273
  %vm275 = vweird.f32 %v217
  %vm276 = vweird.f32 %v269
  %vm277 = vmor %vm275, %vm276
  %v278 = vsel %vm277, %v269, %v274
  %v279 = vrsqrt.pop %v218
  %v280 = vmul.f32 %v279, %v218
  %v281 = vmul.f32 %v280, %v279
  %v282 = vmul.f32 0.5, %v281
  %v283 = vsub.f32 1.5, %v282
  %v284 = vmul.f32 %v279, %v283
  %vm285 = vweird.f32 %v218
  %vm286 = vweird.f32 %v279
  %vm287 = vmor %vm285, %vm286
  %v288 = vsel %vm287, %v279, %v284
  %v289 = vrsqrt.pop %v219
  %v290 = vmul.f32 %v289, %v219
  %v291 = vmul.f32 %v290, %v289
  %v292 = vmul.f32 0.5, %v291
  %v293 = vsub.f32 1.5, %v292
  %v294 = vmul.f32 %v289, %v293
  %vm295 = vweird.f32 %v219
  %vm296 = vweird.f32 %v289
  %vm297 = vmor %vm295, %vm296
  %v298 = vsel %vm297, %v289, %v294
  %v299 = vrsqrt.pop %v220
  %v300 = vmul.f32 %v299, %v220
  %v301 = vmul.f32 %v300, %v299
  %v302 = vmul.f32 0.5, %v301
  %v303 = vsub.f32 1.5, %v302
  %v304 = vmul.f32 %v299, %v303
  %vm305 = vweird.f32 %v220
  %vm306 = vweird.f32 %v299
  %vm307 = vmor %vm305, %vm306
  %v308 = vsel %vm307, %v299, %v304
  %v309 = vrsqrt.pop %v221
  %v310 = vmul.f32 %v309, %v221
  %v311 = vmul.f32 %v310, %v309
  %v312 = vmul.f32 0.5, %v311
  %v313 = vsub.f32 1.5, %v312
  %v314 = vmul.f32 %v309, %v313
  %vm315 = vweird.f32 %v221
  %vm316 = vweird.f32 %v309
  %vm317 = vmor %vm315, %vm316
  %v318 = vsel %vm317, %v309, %v314
  %v319 = vrsqrt.pop %v222
  %v320 = vmul.f32 %v319, %v222
  %v321 = vmul.f32 %v320, %v319
  %v322 = vmul.f32 0.5, %v321
  %v323 = vsub.f32 1.5, %v322
  %v324 = vmul.f32 %v319, %v323
  %vm325 = vweird.f32 %v222
  %vm326 = vweird.f32 %v319
  %vm327 = vmor %vm325, %vm326
  %v328 = vsel %vm327, %v319, %v324
  %v329 = vrsqrt.pop %v223
  %v330 = vmul.f32 %v329, %v223
  %v331 = vmul.f32 %v330, %v329
  %v332 = vmul.f32 0.5, %v331
  %v333 = vsub.f32 1.5, %v332
  %v334 = vmul.f32 %v329, %v333
  %vm335 = vweird.f32 %v223
  %vm336 = vweird.f32 %v329
  %vm337 = vmor %vm335, %vm336
  %v338 = vsel %vm337, %v329, %v334
  %v339 = vrsqrt.pop %v224
  %v340 = vmul.f32 %v339, %v224
  %v341 = vmul.f32 %v340, %v339
  %v342 = vmul.f32 0.5, %v341
  %v343 = vsub.f32 1.5, %v342
  %v344 = vmul.f32 %v339, %v343
  %vm345 = vweird.f32 %v224
  %vm346 = vweird.f32 %v339
  %vm347 = vmor %vm345, %vm346
  %v348 = vsel %vm347, %v339, %v344
  %v349 = vrsqrt.pop %v225
  %v350 = vmul.f32 %v349, %v225
  %v351 = vmul.f32 %v350, %v349
  %v352 = vmul.f32 0.5, %v351
  %v353 = vsub.f32 1.5, %v352
  %v354 = vmul.f32 %v349, %v353
  %vm355 = vweird.f32 %v225
  %vm356 = vweird.f32 %v349
  %vm357 = vmor %vm355, %vm356
  %v358 = vsel %vm357, %v349, %v354
  %v359 = vrsqrt.pop %v226
  %v360 = vmul.f32 %v359, %v226
  %v361 = vmul.f32 %v360, %v359
  %v362 = vmul.f32 0.5, %v361
  %v363 = vsub.f32 1.5, %v362
  %v364 = vmul.f32 %v359, %v363
  %vm365 = vweird.f32 %v226
  %vm366 = vweird.f32 %v359
  %vm367 = vmor %vm365, %vm366
  %v368 = vsel %vm367, %v359, %v364
  %v369 = vrsqrt.pop %v227
  %v370 = vmul.f32 %v369, %v227
  %v371 = vmul.f32 %v370, %v369
  %v372 = vmul.f32 0.5, %v371
  %v373 = vsub.f32 1.5, %v372
  %v374 = vmul.f32 %v369, %v373
  %vm375 = vweird.f32 %v227
  %vm376 = vweird.f32 %v369
  %vm377 = vmor %vm375, %vm376
  %v378 = vsel %vm377, %v369, %v374
  %v379 = vrsqrt.pop %v228
  %v380 = vmul.f32 %v379, %v228
  %v381 = vmul.f32 %v380, %v379
  %v382 = vmul.f32 0.5, %v381
  %v383 = vsub.f32 1.5, %v382
  %v384 = vmul.f32 %v379, %v383
  %vm385 = vweird.f32 %v228
  %vm386 = vweird.f32 %v379
  %vm387 = vmor %vm385, %vm386
  %v388 = vsel %vm387, %v379, %v384
  %v389 = vmul.f32 %v117, %v238
  %v390 = vmul.f32 %v118, %v248
  %v391 = vmul.f32 %v119, %v258
  %v392 = vmul.f32 %v120, %v268
  %v393 = vmul.f32 %v121, %v278
  %v394 = vmul.f32 %v122, %v288
  %v395 = vmul.f32 %v123, %v298
  %v396 = vmul.f32 %v124, %v308
  %v397 = vmul.f32 %v125, %v318
  %v398 = vmul.f32 %v126, %v328
  %v399 = vmul.f32 %v127, %v338
  %v400 = vmul.f32 %v128, %v348
  %v401 = vmul.f32 %v129, %v358
  %v402 = vmul.f32 %v130, %v368
  %v403 = vmul.f32 %v131, %v378
  %v404 = vmul.f32 %v132, %v388
  %v406 = vperm.slane %v43, 0
  %v408 = vmul.f32 %v389, %v406
  %v409 = vmul.f32 %v390, %v406
  %v410 = vmul.f32 %v391, %v406
  %v411 = vmul.f32 %v392, %v406
  %v412 = vmul.f32 %v393, %v406
  %v413 = vmul.f32 %v394, %v406
  %v414 = vmul.f32 %v395, %v406
  %v415 = vmul.f32 %v396, %v406
  %v416 = vmul.f32 %v397, %v406
  %v417 = vmul.f32 %v398, %v406
  %v418 = vmul.f32 %v399, %v406
  %v419 = vmul.f32 %v400, %v406
  %v420 = vmul.f32 %v401, %v406
  %v421 = vmul.f32 %v402, %v406
  %v422 = vmul.f32 %v403, %v406
  %v423 = vmul.f32 %v404, %v406
  %v425 = vperm.slane %v44, 0
  %v427 = vadd.f32 %v408, %v425
  %v428 = vadd.f32 %v409, %v425
  %v429 = vadd.f32 %v410, %v425
  %v430 = vadd.f32 %v411, %v425
  %v431 = vadd.f32 %v412, %v425
  %v432 = vadd.f32 %v413, %v425
  %v433 = vadd.f32 %v414, %v425
  %v434 = vadd.f32 %v415, %v425
  %v435 = vadd.f32 %v416, %v425
  %v436 = vadd.f32 %v417, %v425
  %v437 = vadd.f32 %v418, %v425
  %v438 = vadd.f32 %v419, %v425
  %v439 = vadd.f32 %v420, %v425
  %v440 = vadd.f32 %v421, %v425
  %v441 = vadd.f32 %v422, %v425
  %v442 = vadd.f32 %v423, %v425
  %v443 = vpack.c.bf16 %v428, %v427
  %v444 = vpack.c.bf16 %v430, %v429
  %v445 = vpack.c.bf16 %v432, %v431
  %v446 = vpack.c.bf16 %v434, %v433
  %v447 = vpack.c.bf16 %v436, %v435
  %v448 = vpack.c.bf16 %v438, %v437
  %v449 = vpack.c.bf16 %v440, %v439
  %v450 = vpack.c.bf16 %v442, %v441
  %v451 = vld [vmem:[%s3] sm:$0xf]
  %v452 = vld [vmem:[%s3 + $0x4] sm:$0xf]
  %v453 = vld [vmem:[%s3 + $0x8] sm:$0xf]
  %v454 = vld [vmem:[%s3 + $0xc] sm:$0xf]
  %v459 = vunpack.c.l.b16 %v451
  %v460 = vunpack.c.l.b16 %v452
  %v461 = vunpack.c.l.b16 %v453
  %v462 = vunpack.c.l.b16 %v454
  %v463 = vpack.c.b16 %v460, %v459
  %v464 = vpack.c.b16 %v462, %v461
  %v468 = vsel %vm45, %v443, 0
  %v471 = vsel %vm45, %v444, 0
  %v474 = vsel %vm45, %v445, 0
  %v477 = vsel %vm45, %v446, 0
  %v480 = vsel %vm45, %v447, 0
  %v483 = vsel %vm45, %v448, 0
  %v486 = vsel %vm45, %v449, 0
  %v489 = vsel %vm45, %v450, 0
  %491 = vmatpush.bf16.msra.mxu0 0
  %492 = vmatpush.bf16.msra.mxu0 0
  %493 = vmatpush.bf16.msra.mxu0 0
  %494 = vmatpush.bf16.msra.mxu0 0
  %495 = vmatpush.bf16.msra.mxu0 0
  %496 = vmatpush.bf16.msra.mxu0 0
  %497 = vmatpush.bf16.msra.mxu0 %v464
  %498 = vmatpush.bf16.msra.mxu0 %v463
  %499 = vmatmul.bf16.gmra.mxu0 %v468
  %v500 = vpop.f32.mrf.mxu0
  %v501 = vadd.f32 0.0, %v500
  %v502 = vpop.f32.mrf.mxu0
  %v503 = vadd.f32 0.0, %v502
  %504 = vmatmul.bf16.gmra.mxu0 %v471
  %v505 = vpop.f32.mrf.mxu0
  %v506 = vadd.f32 0.0, %v505
  %v507 = vpop.f32.mrf.mxu0
  %v508 = vadd.f32 0.0, %v507
  %509 = vmatmul.bf16.gmra.mxu0 %v474
  %v510 = vpop.f32.mrf.mxu0
  %v511 = vadd.f32 0.0, %v510
  %v512 = vpop.f32.mrf.mxu0
  %v513 = vadd.f32 0.0, %v512
  %514 = vmatmul.bf16.gmra.mxu0 %v477
  %v515 = vpop.f32.mrf.mxu0
  %v516 = vadd.f32 0.0, %v515
  %v517 = vpop.f32.mrf.mxu0
  %v518 = vadd.f32 0.0, %v517
  %519 = vmatmul.bf16.gmra.mxu0 %v480
  %v520 = vpop.f32.mrf.mxu0
  %v521 = vadd.f32 0.0, %v520
  %v522 = vpop.f32.mrf.mxu0
  %v523 = vadd.f32 0.0, %v522
  %524 = vmatmul.bf16.gmra.mxu0 %v483
  %v525 = vpop.f32.mrf.mxu0
  %v526 = vadd.f32 0.0, %v525
  %v527 = vpop.f32.mrf.mxu0
  %v528 = vadd.f32 0.0, %v527
  %529 = vmatmul.bf16.gmra.mxu0 %v486
  %v530 = vpop.f32.mrf.mxu0
  %v531 = vadd.f32 0.0, %v530
  %v532 = vpop.f32.mrf.mxu0
  %v533 = vadd.f32 0.0, %v532
  %534 = vmatmul.bf16.gmra.mxu0 %v489
  %v535 = vpop.f32.mrf.mxu0
  %v536 = vadd.f32 0.0, %v535
  %v537 = vpop.f32.mrf.mxu0
  %v538 = vadd.f32 0.0, %v537
  %539 = vdwg.mxu0
  %v540 = vpack.c.bf16 %v501, %v501
  %v541 = vpack.c.bf16 %v503, %v503
  %v542 = vpack.c.bf16 %v506, %v506
  %v543 = vpack.c.bf16 %v508, %v508
  %v544 = vpack.c.bf16 %v511, %v511
  %v545 = vpack.c.bf16 %v513, %v513
  %v546 = vpack.c.bf16 %v516, %v516
  %v547 = vpack.c.bf16 %v518, %v518
  %v548 = vpack.c.bf16 %v521, %v521
  %v549 = vpack.c.bf16 %v523, %v523
  %v550 = vpack.c.bf16 %v526, %v526
  %v551 = vpack.c.bf16 %v528, %v528
  %v552 = vpack.c.bf16 %v531, %v531
  %v553 = vpack.c.bf16 %v533, %v533
  %v554 = vpack.c.bf16 %v536, %v536
  %v555 = vpack.c.bf16 %v538, %v538
  %vm556 = vcmask 257024
  %557 = vst.msk [vmem:[%s6] sm:$0xf] %vm556, %v540
  %558 = vst.msk [vmem:[%s6 + $0x4] sm:$0xf] %vm556, %v541
  %559 = vst.msk [vmem:[%s6 + $0x8] sm:$0xf] %vm556, %v542
  %560 = vst.msk [vmem:[%s6 + $0xc] sm:$0xf] %vm556, %v543
  %561 = vst.msk [vmem:[%s6 + $0x10] sm:$0xf] %vm556, %v544
  %562 = vst.msk [vmem:[%s6 + $0x14] sm:$0xf] %vm556, %v545
  %563 = vst.msk [vmem:[%s6 + $0x18] sm:$0xf] %vm556, %v546
  %564 = vst.msk [vmem:[%s6 + $0x1c] sm:$0xf] %vm556, %v547
  %565 = vst.msk [vmem:[%s6 + $0x20] sm:$0xf] %vm556, %v548
  %566 = vst.msk [vmem:[%s6 + $0x24] sm:$0xf] %vm556, %v549
  %567 = vst.msk [vmem:[%s6 + $0x28] sm:$0xf] %vm556, %v550
  %568 = vst.msk [vmem:[%s6 + $0x2c] sm:$0xf] %vm556, %v551
  %569 = vst.msk [vmem:[%s6 + $0x30] sm:$0xf] %vm556, %v552
  %570 = vst.msk [vmem:[%s6 + $0x34] sm:$0xf] %vm556, %v553
  %571 = vst.msk [vmem:[%s6 + $0x38] sm:$0xf] %vm556, %v554
  %572 = vst.msk [vmem:[%s6 + $0x3c] sm:$0xf] %vm556, %v555
  %v573 = vld [vmem:[%s4] sm:$0xf]
  %v574 = vld [vmem:[%s4 + $0x4] sm:$0xf]
  %v575 = vld [vmem:[%s4 + $0x8] sm:$0xf]
  %v576 = vld [vmem:[%s4 + $0xc] sm:$0xf]
  %v581 = vunpack.c.l.b16 %v573
  %v582 = vunpack.c.l.b16 %v574
  %v583 = vunpack.c.l.b16 %v575
  %v584 = vunpack.c.l.b16 %v576
  %v585 = vpack.c.b16 %v582, %v581
  %v586 = vpack.c.b16 %v584, %v583
  %589 = vmatpush.bf16.msra.mxu0 0
  %590 = vmatpush.bf16.msra.mxu0 0
  %591 = vmatpush.bf16.msra.mxu0 0
  %592 = vmatpush.bf16.msra.mxu0 0
  %593 = vmatpush.bf16.msra.mxu0 0
  %594 = vmatpush.bf16.msra.mxu0 0
  %595 = vmatpush.bf16.msra.mxu0 %v586
  %596 = vmatpush.bf16.msra.mxu0 %v585
  %597 = vmatmul.bf16.gmra.mxu0 %v468
  %v598 = vpop.f32.mrf.mxu0
  %v599 = vadd.f32 0.0, %v598
  %v600 = vpop.f32.mrf.mxu0
  %v601 = vadd.f32 0.0, %v600
  %602 = vmatmul.bf16.gmra.mxu0 %v471
  %v603 = vpop.f32.mrf.mxu0
  %v604 = vadd.f32 0.0, %v603
  %v605 = vpop.f32.mrf.mxu0
  %v606 = vadd.f32 0.0, %v605
  %607 = vmatmul.bf16.gmra.mxu0 %v474
  %v608 = vpop.f32.mrf.mxu0
  %v609 = vadd.f32 0.0, %v608
  %v610 = vpop.f32.mrf.mxu0
  %v611 = vadd.f32 0.0, %v610
  %612 = vmatmul.bf16.gmra.mxu0 %v477
  %v613 = vpop.f32.mrf.mxu0
  %v614 = vadd.f32 0.0, %v613
  %v615 = vpop.f32.mrf.mxu0
  %v616 = vadd.f32 0.0, %v615
  %617 = vmatmul.bf16.gmra.mxu0 %v480
  %v618 = vpop.f32.mrf.mxu0
  %v619 = vadd.f32 0.0, %v618
  %v620 = vpop.f32.mrf.mxu0
  %v621 = vadd.f32 0.0, %v620
  %622 = vmatmul.bf16.gmra.mxu0 %v483
  %v623 = vpop.f32.mrf.mxu0
  %v624 = vadd.f32 0.0, %v623
  %v625 = vpop.f32.mrf.mxu0
  %v626 = vadd.f32 0.0, %v625
  %627 = vmatmul.bf16.gmra.mxu0 %v486
  %v628 = vpop.f32.mrf.mxu0
  %v629 = vadd.f32 0.0, %v628
  %v630 = vpop.f32.mrf.mxu0
  %v631 = vadd.f32 0.0, %v630
  %632 = vmatmul.bf16.gmra.mxu0 %v489
  %v633 = vpop.f32.mrf.mxu0
  %v634 = vadd.f32 0.0, %v633
  %v635 = vpop.f32.mrf.mxu0
  %v636 = vadd.f32 0.0, %v635
  %637 = vdwg.mxu0
  %v638 = vpack.c.bf16 %v599, %v599
  %v639 = vpack.c.bf16 %v601, %v601
  %v640 = vpack.c.bf16 %v604, %v604
  %v641 = vpack.c.bf16 %v606, %v606
  %v642 = vpack.c.bf16 %v609, %v609
  %v643 = vpack.c.bf16 %v611, %v611
  %v644 = vpack.c.bf16 %v614, %v614
  %v645 = vpack.c.bf16 %v616, %v616
  %v646 = vpack.c.bf16 %v619, %v619
  %v647 = vpack.c.bf16 %v621, %v621
  %v648 = vpack.c.bf16 %v624, %v624
  %v649 = vpack.c.bf16 %v626, %v626
  %v650 = vpack.c.bf16 %v629, %v629
  %v651 = vpack.c.bf16 %v631, %v631
  %v652 = vpack.c.bf16 %v634, %v634
  %v653 = vpack.c.bf16 %v636, %v636
  %654 = vst.msk [vmem:[%s7] sm:$0xf] %vm556, %v638
  %655 = vst.msk [vmem:[%s7 + $0x4] sm:$0xf] %vm556, %v639
  %656 = vst.msk [vmem:[%s7 + $0x8] sm:$0xf] %vm556, %v640
  %657 = vst.msk [vmem:[%s7 + $0xc] sm:$0xf] %vm556, %v641
  %658 = vst.msk [vmem:[%s7 + $0x10] sm:$0xf] %vm556, %v642
  %659 = vst.msk [vmem:[%s7 + $0x14] sm:$0xf] %vm556, %v643
  %660 = vst.msk [vmem:[%s7 + $0x18] sm:$0xf] %vm556, %v644
  %661 = vst.msk [vmem:[%s7 + $0x1c] sm:$0xf] %vm556, %v645
  %662 = vst.msk [vmem:[%s7 + $0x20] sm:$0xf] %vm556, %v646
  %663 = vst.msk [vmem:[%s7 + $0x24] sm:$0xf] %vm556, %v647
  %664 = vst.msk [vmem:[%s7 + $0x28] sm:$0xf] %vm556, %v648
  %665 = vst.msk [vmem:[%s7 + $0x2c] sm:$0xf] %vm556, %v649
  %666 = vst.msk [vmem:[%s7 + $0x30] sm:$0xf] %vm556, %v650
  %667 = vst.msk [vmem:[%s7 + $0x34] sm:$0xf] %vm556, %v651
  %668 = vst.msk [vmem:[%s7 + $0x38] sm:$0xf] %vm556, %v652
  %669 = vst.msk [vmem:[%s7 + $0x3c] sm:$0xf] %vm556, %v653
  %v670 = vld [vmem:[%s5] sm:$0xf]
  %v671 = vld [vmem:[%s5 + $0x4] sm:$0xf]
  %v672 = vld [vmem:[%s5 + $0x8] sm:$0xf]
  %v673 = vld [vmem:[%s5 + $0xc] sm:$0xf]
  %v678 = vunpack.c.l.b16 %v670
  %v679 = vunpack.c.l.b16 %v671
  %v680 = vunpack.c.l.b16 %v672
  %v681 = vunpack.c.l.b16 %v673
  %v682 = vpack.c.b16 %v679, %v678
  %v683 = vpack.c.b16 %v681, %v680
  %686 = vmatpush.bf16.msra.mxu0 0
  %687 = vmatpush.bf16.msra.mxu0 0
  %688 = vmatpush.bf16.msra.mxu0 0
  %689 = vmatpush.bf16.msra.mxu0 0
  %690 = vmatpush.bf16.msra.mxu0 0
  %691 = vmatpush.bf16.msra.mxu0 0
  %692 = vmatpush.bf16.msra.mxu0 %v683
  %693 = vmatpush.bf16.msra.mxu0 %v682
  %694 = vmatmul.bf16.gmra.mxu0 %v468
  %v695 = vpop.f32.mrf.mxu0
  %v696 = vadd.f32 0.0, %v695
  %v697 = vpop.f32.mrf.mxu0
  %v698 = vadd.f32 0.0, %v697
  %699 = vmatmul.bf16.gmra.mxu0 %v471
  %v700 = vpop.f32.mrf.mxu0
  %v701 = vadd.f32 0.0, %v700
  %v702 = vpop.f32.mrf.mxu0
  %v703 = vadd.f32 0.0, %v702
  %704 = vmatmul.bf16.gmra.mxu0 %v474
  %v705 = vpop.f32.mrf.mxu0
  %v706 = vadd.f32 0.0, %v705
  %v707 = vpop.f32.mrf.mxu0
  %v708 = vadd.f32 0.0, %v707
  %709 = vmatmul.bf16.gmra.mxu0 %v477
  %v710 = vpop.f32.mrf.mxu0
  %v711 = vadd.f32 0.0, %v710
  %v712 = vpop.f32.mrf.mxu0
  %v713 = vadd.f32 0.0, %v712
  %714 = vmatmul.bf16.gmra.mxu0 %v480
  %v715 = vpop.f32.mrf.mxu0
  %v716 = vadd.f32 0.0, %v715
  %v717 = vpop.f32.mrf.mxu0
  %v718 = vadd.f32 0.0, %v717
  %719 = vmatmul.bf16.gmra.mxu0 %v483
  %v720 = vpop.f32.mrf.mxu0
  %v721 = vadd.f32 0.0, %v720
  %v722 = vpop.f32.mrf.mxu0
  %v723 = vadd.f32 0.0, %v722
  %724 = vmatmul.bf16.gmra.mxu0 %v486
  %v725 = vpop.f32.mrf.mxu0
  %v726 = vadd.f32 0.0, %v725
  %v727 = vpop.f32.mrf.mxu0
  %v728 = vadd.f32 0.0, %v727
  %729 = vmatmul.bf16.gmra.mxu0 %v489
  %v730 = vpop.f32.mrf.mxu0
  %v731 = vadd.f32 0.0, %v730
  %v732 = vpop.f32.mrf.mxu0
  %v733 = vadd.f32 0.0, %v732
  %734 = vdwg.mxu0
  %v735 = vpack.c.bf16 %v696, %v696
  %v736 = vpack.c.bf16 %v698, %v698
  %v737 = vpack.c.bf16 %v701, %v701
  %v738 = vpack.c.bf16 %v703, %v703
  %v739 = vpack.c.bf16 %v706, %v706
  %v740 = vpack.c.bf16 %v708, %v708
  %v741 = vpack.c.bf16 %v711, %v711
  %v742 = vpack.c.bf16 %v713, %v713
  %v743 = vpack.c.bf16 %v716, %v716
  %v744 = vpack.c.bf16 %v718, %v718
  %v745 = vpack.c.bf16 %v721, %v721
  %v746 = vpack.c.bf16 %v723, %v723
  %v747 = vpack.c.bf16 %v726, %v726
  %v748 = vpack.c.bf16 %v728, %v728
  %v749 = vpack.c.bf16 %v731, %v731
  %v750 = vpack.c.bf16 %v733, %v733
  %751 = vst.msk [vmem:[%s8] sm:$0xf] %vm556, %v735
  %752 = vst.msk [vmem:[%s8 + $0x4] sm:$0xf] %vm556, %v736
  %753 = vst.msk [vmem:[%s8 + $0x8] sm:$0xf] %vm556, %v737
  %754 = vst.msk [vmem:[%s8 + $0xc] sm:$0xf] %vm556, %v738
  %755 = vst.msk [vmem:[%s8 + $0x10] sm:$0xf] %vm556, %v739
  %756 = vst.msk [vmem:[%s8 + $0x14] sm:$0xf] %vm556, %v740
  %757 = vst.msk [vmem:[%s8 + $0x18] sm:$0xf] %vm556, %v741
  %758 = vst.msk [vmem:[%s8 + $0x1c] sm:$0xf] %vm556, %v742
  %759 = vst.msk [vmem:[%s8 + $0x20] sm:$0xf] %vm556, %v743
  %760 = vst.msk [vmem:[%s8 + $0x24] sm:$0xf] %vm556, %v744
  %761 = vst.msk [vmem:[%s8 + $0x28] sm:$0xf] %vm556, %v745
  %762 = vst.msk [vmem:[%s8 + $0x2c] sm:$0xf] %vm556, %v746
  %763 = vst.msk [vmem:[%s8 + $0x30] sm:$0xf] %vm556, %v747
  %764 = vst.msk [vmem:[%s8 + $0x34] sm:$0xf] %vm556, %v748
  %765 = vst.msk [vmem:[%s8 + $0x38] sm:$0xf] %vm556, %v749
  %766 = vst.msk [vmem:[%s8 + $0x3c] sm:$0xf] %vm556, %v750
  // Predicated region
  $region26: #{fused_block_forward.4} parent=0 // pred_check
    _
  $region27: #{fused_block_forward.4} parent=0 // pred_check_branch
    %768 = sbr.rel (0) target = $region29
  $region28: #{fused_block_forward.4} parent=0 // pred_region
    _
  $region29: #{fused_block_forward.4} parent=0 // pred_fallthru
    _
  // Predicated region
  $region30: #{fused_block_forward.4} parent=0 // pred_check
    _
  $region31: #{fused_block_forward.4} parent=0 // pred_check_branch
    %770 = sbr.rel (0) target = $region33
  $region32: #{fused_block_forward.4} parent=0 // pred_region
    _
  $region33: #{fused_block_forward.4} parent=0 // pred_fallthru
    _
  // Predicated region
  $region34: #{fused_block_forward.4} parent=0 // pred_check
    _
  $region35: #{fused_block_forward.4} parent=0 // pred_check_branch
    %772 = sbr.rel (0) target = $region37
  $region36: #{fused_block_forward.4} parent=0 // pred_region
    _
  $region37: #{fused_block_forward.4} parent=0 // pred_fallthru
    _
  // Predicated region
  $region38: #{fused_block_forward.4} parent=0 // pred_check
    _
  $region39: #{fused_block_forward.4} parent=0 // pred_check_branch
    %774 = sbr.rel (0) target = $region41
  $region40: #{fused_block_forward.4} parent=0 // pred_region
    _
  $region41: #{fused_block_forward.4} parent=0 // pred_fallthru
    _
  // Predicated region
  $region42: #{fused_block_forward.4} parent=0 // pred_check
    _
  $region43: #{fused_block_forward.4} parent=0 // pred_check_branch
    %776 = sbr.rel (0) target = $region45
  $region44: #{fused_block_forward.4} parent=0 // pred_region
    _
  $region45: #{fused_block_forward.4} parent=0 // pred_fallthru
    _
  // Predicated region
  $region46: #{fused_block_forward.4} parent=0 // pred_check
    _
  $region47: #{fused_block_forward.4} parent=0 // pred_check_branch
    %778 = sbr.rel (0) target = $region49
  $region48: #{fused_block_forward.4} parent=0 // pred_region
    _
  $region49: #{fused_block_forward.4} parent=0 // pred_fallthru
    _

// kernel: fused_block_forward.6
$region0: #{fused_block_forward.6}
  #allocation0 [shape = 'u32[]', space=smem, size = 0x4, offset = 0x4, fixed_abs, tag = 'smem constant byte address 0x4 - core index']
  #allocation1 [shape = 'u32[72,128]{1,0:T(1,128)}', space=vmem, size = 0x9000, scoped, tag = 'internal scratch']
  %s0 = inlined_call_operand.vmem [shape: bf16[2,64,32], index: 0, kind: input, shape index: {}]
  %s1 = inlined_call_operand.vmem [shape: bf16[2,64,32], index: 1, kind: input, shape index: {}]
  %s2 = inlined_call_operand.vmem [shape: bf16[2,64,32], index: 2, kind: input, shape index: {}]
  %s3 = inlined_call_operand.vmem [shape: bf16[2,64,32], index: 3, kind: input, shape index: {}]
  %s4 = inlined_call_operand.vmem [shape: f32[2,64,32], index: 4, kind: input, shape index: {}]
  %s5 = inlined_call_operand.vmem [shape: bf16[4,64], index: 5, kind: input, shape index: {}]
  %s6 = inlined_call_operand.vmem [shape: bf16[2,4,64], index: 6, kind: input, shape index: {}]
  %s7 = inlined_call_operand.vmem [shape: bf16[2,4,64], index: 7, kind: input, shape index: {}]
  %s8 = inlined_call_operand.vmem [shape: bf16[32,32], index: 8, kind: input, shape index: {}]
  %s9 = inlined_call_operand.vmem [shape: f32[1,32], index: 9, kind: input, shape index: {}]
  %s10 = inlined_call_operand.vmem [shape: f32[2,64,32], index: 10, kind: output, shape index: {}]
  %s11 = sld [smem:[#allocation0]]
  $region73: #{fused_block_forward.6} parent=0
    _
  %s13 = ssub.s32 1, %s11
  %s14 = scalar_select 0, %s13, %s11
  loop: start=0, step=1, limit=4
  $region2: #{fused_block_forward.6} parent=0 // loop_pre_header
    _
  $region3: #{fused_block_forward.6} parent=0 // loop_header
    %s16 = sphi 0, %s20
    %p17 = scmp.ge.s32.totalorder %s16, 4
    %s26 = sphi 0, %s28
    %s29 = sphi 0, %s26
    %s30 = sphi 0, %s29
    %s46 = sphi 0, %s30
    %s52 = sphi 0, %s54
    %s55 = sphi 0, %s52
    %s56 = sphi 0, %s55
    %s72 = sphi 0, %s56
    %s78 = sphi 0, %s80
    %s81 = sphi 0, %s78
    %s82 = sphi 0, %s81
    %s98 = sphi 0, %s82
    %s104 = sphi 0, %s106
    %s107 = sphi 0, %s104
    %s108 = sphi 0, %s107
    %s124 = sphi 0, %s108
    %s130 = sphi 0, %s132
    %s133 = sphi 0, %s130
    %s134 = sphi 0, %s133
    %s150 = sphi 0, %s134
    %s154 = sphi 0, %s154
    %s156 = sphi 0, %s154
    %s157 = sphi 0, %s156
    %s171 = sphi 0, %s157
    %s175 = sphi 0, %s175
    %s177 = sphi 0, %s175
    %s178 = sphi 0, %s177
    %s192 = sphi 0, %s178
    %s196 = sphi 0, %s196
    %s198 = sphi 0, %s196
    %s199 = sphi 0, %s198
    %s213 = sphi 0, %s199
    %s217 = sphi 0, %s217
    %s219 = sphi 0, %s217
    %s220 = sphi 0, %s219
    %s234 = sphi 0, %s220
    %s238 = sphi 0, %s238
    %s240 = sphi 0, %s238
    %s241 = sphi 0, %s240
    %s255 = sphi 0, %s241
    %s261 = sphi 0, %s263
    %s264 = sphi 0, %s261
    %s265 = sphi 0, %s264
    %s281 = sphi 0, %s265
  $region4: #{fused_block_forward.6} parent=0 // loop_header_branch
    %19 = sbr.rel (%p17) target = $region8
  $region5: #{fused_block_forward.6} parent=0 // loop_body
    %s21 = ssub.s32 %s16, 1
    %s22 = ssub.s32 %s16, 2
    %s23 = sadd.s32 %s16, 1
    %s24 = ssub.s32 %s16, %s23
    %p25 = scmp.eq.s32.totalorder %s24, 0
    %s27 = sadd.s32 %s26, 1
    %s28 = scalar_select %p25, %s26, %s27
    %p31 = pneg %p25
    %p32 = scmp.eq.s32.totalorder %s16, 1
    %p33 = por %p31, %p32
    %p34 = scmp.ne.s32.totalorder %s26, %s29
    %p35 = scmp.eq.s32.totalorder %s16, 0
    %p36 = por %p34, %p35
    %p37 = scmp.ne.s32.totalorder %s26, %s29
    %p38 = scmp.eq.s32.totalorder %s21, 1
    %p39 = por %p37, %p38
    %p40 = scmp.ne.s32.totalorder %s29, %s30
    %p41 = scmp.eq.s32.totalorder %s21, 0
    %p42 = por %p40, %p41
    %p43 = scmp.ne.s32.totalorder %s29, %s30
    %p44 = scmp.eq.s32.totalorder %s22, 1
    %p45 = por %p43, %p44
    %p47 = scmp.ne.s32.totalorder %s30, %s46
    %p48 = scmp.eq.s32.totalorder %s22, 0
    %p49 = por %p47, %p48
    %s50 = ssub.s32 %s16, %s23
    %p51 = scmp.eq.s32.totalorder %s50, 0
    %s53 = sadd.s32 %s52, 1
    %s54 = scalar_select %p51, %s52, %s53
    %p57 = pneg %p51
    %p58 = scmp.eq.s32.totalorder %s16, 1
    %p59 = por %p57, %p58
    %p60 = scmp.ne.s32.totalorder %s52, %s55
    %p61 = scmp.eq.s32.totalorder %s16, 0
    %p62 = por %p60, %p61
    %p63 = scmp.ne.s32.totalorder %s52, %s55
    %p64 = scmp.eq.s32.totalorder %s21, 1
    %p65 = por %p63, %p64
    %p66 = scmp.ne.s32.totalorder %s55, %s56
    %p67 = scmp.eq.s32.totalorder %s21, 0
    %p68 = por %p66, %p67
    %p69 = scmp.ne.s32.totalorder %s55, %s56
    %p70 = scmp.eq.s32.totalorder %s22, 1
    %p71 = por %p69, %p70
    %p73 = scmp.ne.s32.totalorder %s56, %s72
    %p74 = scmp.eq.s32.totalorder %s22, 0
    %p75 = por %p73, %p74
    %s76 = ssub.s32 %s16, %s23
    %p77 = scmp.eq.s32.totalorder %s76, 0
    %s79 = sadd.s32 %s78, 1
    %s80 = scalar_select %p77, %s78, %s79
    %p83 = pneg %p77
    %p84 = scmp.eq.s32.totalorder %s16, 1
    %p85 = por %p83, %p84
    %p86 = scmp.ne.s32.totalorder %s78, %s81
    %p87 = scmp.eq.s32.totalorder %s16, 0
    %p88 = por %p86, %p87
    %p89 = scmp.ne.s32.totalorder %s78, %s81
    %p90 = scmp.eq.s32.totalorder %s21, 1
    %p91 = por %p89, %p90
    %p92 = scmp.ne.s32.totalorder %s81, %s82
    %p93 = scmp.eq.s32.totalorder %s21, 0
    %p94 = por %p92, %p93
    %p95 = scmp.ne.s32.totalorder %s81, %s82
    %p96 = scmp.eq.s32.totalorder %s22, 1
    %p97 = por %p95, %p96
    %p99 = scmp.ne.s32.totalorder %s82, %s98
    %p100 = scmp.eq.s32.totalorder %s22, 0
    %p101 = por %p99, %p100
    %s102 = ssub.s32 %s16, %s23
    %p103 = scmp.eq.s32.totalorder %s102, 0
    %s105 = sadd.s32 %s104, 1
    %s106 = scalar_select %p103, %s104, %s105
    %p109 = pneg %p103
    %p110 = scmp.eq.s32.totalorder %s16, 1
    %p111 = por %p109, %p110
    %p112 = scmp.ne.s32.totalorder %s104, %s107
    %p113 = scmp.eq.s32.totalorder %s16, 0
    %p114 = por %p112, %p113
    %p115 = scmp.ne.s32.totalorder %s104, %s107
    %p116 = scmp.eq.s32.totalorder %s21, 1
    %p117 = por %p115, %p116
    %p118 = scmp.ne.s32.totalorder %s107, %s108
    %p119 = scmp.eq.s32.totalorder %s21, 0
    %p120 = por %p118, %p119
    %p121 = scmp.ne.s32.totalorder %s107, %s108
    %p122 = scmp.eq.s32.totalorder %s22, 1
    %p123 = por %p121, %p122
    %p125 = scmp.ne.s32.totalorder %s108, %s124
    %p126 = scmp.eq.s32.totalorder %s22, 0
    %p127 = por %p125, %p126
    %s128 = ssub.s32 %s16, %s23
    %p129 = scmp.eq.s32.totalorder %s128, 0
    %s131 = sadd.s32 %s130, 1
    %s132 = scalar_select %p129, %s130, %s131
    %p135 = pneg %p129
    %p136 = scmp.eq.s32.totalorder %s16, 1
    %p137 = por %p135, %p136
    %p138 = scmp.ne.s32.totalorder %s130, %s133
    %p139 = scmp.eq.s32.totalorder %s16, 0
    %p140 = por %p138, %p139
    %p141 = scmp.ne.s32.totalorder %s130, %s133
    %p142 = scmp.eq.s32.totalorder %s21, 1
    %p143 = por %p141, %p142
    %p144 = scmp.ne.s32.totalorder %s133, %s134
    %p145 = scmp.eq.s32.totalorder %s21, 0
    %p146 = por %p144, %p145
    %p147 = scmp.ne.s32.totalorder %s133, %s134
    %p148 = scmp.eq.s32.totalorder %s22, 1
    %p149 = por %p147, %p148
    %p151 = scmp.ne.s32.totalorder %s134, %s150
    %p152 = scmp.eq.s32.totalorder %s22, 0
    %p153 = por %p151, %p152
    %s155 = sadd.s32 %s154, 1
    %p158 = scmp.eq.s32.totalorder %s16, 1
    %p159 = scmp.ne.s32.totalorder %s154, %s156
    %p160 = scmp.eq.s32.totalorder %s16, 0
    %p161 = por %p159, %p160
    %p162 = scmp.ne.s32.totalorder %s154, %s156
    %p163 = scmp.eq.s32.totalorder %s21, 1
    %p164 = por %p162, %p163
    %p165 = scmp.ne.s32.totalorder %s156, %s157
    %p166 = scmp.eq.s32.totalorder %s21, 0
    %p167 = por %p165, %p166
    %p168 = scmp.ne.s32.totalorder %s156, %s157
    %p169 = scmp.eq.s32.totalorder %s22, 1
    %p170 = por %p168, %p169
    %p172 = scmp.ne.s32.totalorder %s157, %s171
    %p173 = scmp.eq.s32.totalorder %s22, 0
    %p174 = por %p172, %p173
    %s176 = sadd.s32 %s175, 1
    %p179 = scmp.eq.s32.totalorder %s16, 1
    %p180 = scmp.ne.s32.totalorder %s175, %s177
    %p181 = scmp.eq.s32.totalorder %s16, 0
    %p182 = por %p180, %p181
    %p183 = scmp.ne.s32.totalorder %s175, %s177
    %p184 = scmp.eq.s32.totalorder %s21, 1
    %p185 = por %p183, %p184
    %p186 = scmp.ne.s32.totalorder %s177, %s178
    %p187 = scmp.eq.s32.totalorder %s21, 0
    %p188 = por %p186, %p187
    %p189 = scmp.ne.s32.totalorder %s177, %s178
    %p190 = scmp.eq.s32.totalorder %s22, 1
    %p191 = por %p189, %p190
    %p193 = scmp.ne.s32.totalorder %s178, %s192
    %p194 = scmp.eq.s32.totalorder %s22, 0
    %p195 = por %p193, %p194
    %s197 = sadd.s32 %s196, 1
    %p200 = scmp.eq.s32.totalorder %s16, 1
    %p201 = scmp.ne.s32.totalorder %s196, %s198
    %p202 = scmp.eq.s32.totalorder %s16, 0
    %p203 = por %p201, %p202
    %p204 = scmp.ne.s32.totalorder %s196, %s198
    %p205 = scmp.eq.s32.totalorder %s21, 1
    %p206 = por %p204, %p205
    %p207 = scmp.ne.s32.totalorder %s198, %s199
    %p208 = scmp.eq.s32.totalorder %s21, 0
    %p209 = por %p207, %p208
    %p210 = scmp.ne.s32.totalorder %s198, %s199
    %p211 = scmp.eq.s32.totalorder %s22, 1
    %p212 = por %p210, %p211
    %p214 = scmp.ne.s32.totalorder %s199, %s213
    %p215 = scmp.eq.s32.totalorder %s22, 0
    %p216 = por %p214, %p215
    %s218 = sadd.s32 %s217, 1
    %p221 = scmp.eq.s32.totalorder %s16, 1
    %p222 = scmp.ne.s32.totalorder %s217, %s219
    %p223 = scmp.eq.s32.totalorder %s16, 0
    %p224 = por %p222, %p223
    %p225 = scmp.ne.s32.totalorder %s217, %s219
    %p226 = scmp.eq.s32.totalorder %s21, 1
    %p227 = por %p225, %p226
    %p228 = scmp.ne.s32.totalorder %s219, %s220
    %p229 = scmp.eq.s32.totalorder %s21, 0
    %p230 = por %p228, %p229
    %p231 = scmp.ne.s32.totalorder %s219, %s220
    %p232 = scmp.eq.s32.totalorder %s22, 1
    %p233 = por %p231, %p232
    %p235 = scmp.ne.s32.totalorder %s220, %s234
    %p236 = scmp.eq.s32.totalorder %s22, 0
    %p237 = por %p235, %p236
    %s239 = sadd.s32 %s238, 1
    %p242 = scmp.eq.s32.totalorder %s16, 1
    %p243 = scmp.ne.s32.totalorder %s238, %s240
    %p244 = scmp.eq.s32.totalorder %s16, 0
    %p245 = por %p243, %p244
    %p246 = scmp.ne.s32.totalorder %s238, %s240
    %p247 = scmp.eq.s32.totalorder %s21, 1
    %p248 = por %p246, %p247
    %p249 = scmp.ne.s32.totalorder %s240, %s241
    %p250 = scmp.eq.s32.totalorder %s21, 0
    %p251 = por %p249, %p250
    %p252 = scmp.ne.s32.totalorder %s240, %s241
    %p253 = scmp.eq.s32.totalorder %s22, 1
    %p254 = por %p252, %p253
    %p256 = scmp.ne.s32.totalorder %s241, %s255
    %p257 = scmp.eq.s32.totalorder %s22, 0
    %p258 = por %p256, %p257
    %s259 = ssub.s32 %s16, %s23
    %p260 = scmp.eq.s32.totalorder %s259, 0
    %s262 = sadd.s32 %s261, 1
    %s263 = scalar_select %p260, %s261, %s262
    %p266 = pneg %p260
    %p267 = scmp.eq.s32.totalorder %s16, 1
    %p268 = por %p266, %p267
    %p269 = scmp.ne.s32.totalorder %s261, %s264
    %p270 = scmp.eq.s32.totalorder %s16, 0
    %p271 = por %p269, %p270
    %p272 = scmp.ne.s32.totalorder %s261, %s264
    %p273 = scmp.eq.s32.totalorder %s21, 1
    %p274 = por %p272, %p273
    %p275 = scmp.ne.s32.totalorder %s264, %s265
    %p276 = scmp.eq.s32.totalorder %s21, 0
    %p277 = por %p275, %p276
    %p278 = scmp.ne.s32.totalorder %s264, %s265
    %p279 = scmp.eq.s32.totalorder %s22, 1
    %p280 = por %p278, %p279
    %p282 = scmp.ne.s32.totalorder %s265, %s281
    %p283 = scmp.eq.s32.totalorder %s22, 0
    %p284 = por %p282, %p283
    %p285 = scmp.le.s32.totalorder 1, %s16
    %p286 = scmp.lt.s32.totalorder %s16, 3
    %p287 = pnand %p285, %p286
    %p288 = pneg %p287
    // Predicated region
    $region9: #{fused_block_forward.6} parent=5 // pred_check
      _
    $region10: #{fused_block_forward.6} parent=5 // pred_check_branch
      %290 = sbr.rel (%p287) target = $region12
    $region11: #{fused_block_forward.6} parent=5 // pred_region
      %s291 = ssub.s32 %s16, 1
      // Predicated region
      $region13: #{fused_block_forward.6} parent=11 // pred_check
        %p292 = pneg %p167
      $region14: #{fused_block_forward.6} parent=11 // pred_check_branch
        %294 = sbr.rel (%p292) target = $region16
      $region15: #{fused_block_forward.6} parent=11 // pred_region
        _
      $region16: #{fused_block_forward.6} parent=11 // pred_fallthru
        _
      // Predicated region
      $region17: #{fused_block_forward.6} parent=11 // pred_check
        %p295 = pneg %p188
      $region18: #{fused_block_forward.6} parent=11 // pred_check_branch
        %297 = sbr.rel (%p295) target = $region20
      $region19: #{fused_block_forward.6} parent=11 // pred_region
        _
      $region20: #{fused_block_forward.6} parent=11 // pred_fallthru
        _
      // Predicated region
      $region21: #{fused_block_forward.6} parent=11 // pred_check
        %p298 = pneg %p209
      $region22: #{fused_block_forward.6} parent=11 // pred_check_branch
        %300 = sbr.rel (%p298) target = $region24
      $region23: #{fused_block_forward.6} parent=11 // pred_region
        _
      $region24: #{fused_block_forward.6} parent=11 // pred_fallthru
        _
      // Predicated region
      $region25: #{fused_block_forward.6} parent=11 // pred_check
        %p301 = pneg %p230
      $region26: #{fused_block_forward.6} parent=11 // pred_check_branch
        %303 = sbr.rel (%p301) target = $region28
      $region27: #{fused_block_forward.6} parent=11 // pred_region
        _
      $region28: #{fused_block_forward.6} parent=11 // pred_fallthru
        _
      // Predicated region
      $region29: #{fused_block_forward.6} parent=11 // pred_check
        %p304 = pneg %p251
      $region30: #{fused_block_forward.6} parent=11 // pred_check_branch
        %306 = sbr.rel (%p304) target = $region32
      $region31: #{fused_block_forward.6} parent=11 // pred_region
        _
      $region32: #{fused_block_forward.6} parent=11 // pred_fallthru
        _
    $region12: #{fused_block_forward.6} parent=5 // pred_fallthru
      _
    %p307 = scmp.lt.s32.totalorder %s16, 2
    // Predicated region
    $region33: #{fused_block_forward.6} parent=5 // pred_check
      %p308 = pneg %p307
    $region34: #{fused_block_forward.6} parent=5 // pred_check_branch
      %310 = sbr.rel (%p308) target = $region36
    $region35: #{fused_block_forward.6} parent=5 // pred_region
      // Predicated region
      $region37: #{fused_block_forward.6} parent=35 // pred_check
        %p311 = pneg %p36
      $region38: #{fused_block_forward.6} parent=35 // pred_check_branch
        %313 = sbr.rel (%p311) target = $region40
      $region39: #{fused_block_forward.6} parent=35 // pred_region
        %p314 = scmp.lt.s32.totalorder %s16, 1
        %s315 = scalar_select %p314, %s16, 1
        %s316 = smul.addr %s315, 8
        %s317 = smul.addr %s316, 4
        %s318 = scalar_lea.vmem %s0, %s317
      $region40: #{fused_block_forward.6} parent=35 // pred_fallthru
        _
      // Predicated region
      $region41: #{fused_block_forward.6} parent=35 // pred_check
        %p319 = pneg %p62
      $region42: #{fused_block_forward.6} parent=35 // pred_check_branch
        %321 = sbr.rel (%p319) target = $region44
      $region43: #{fused_block_forward.6} parent=35 // pred_region
        %p322 = scmp.lt.s32.totalorder %s16, 1
        %s323 = scalar_select %p322, %s16, 1
        %s324 = smul.addr %s323, 8
        %s325 = smul.addr %s324, 4
        %s326 = scalar_lea.vmem %s1, %s325
      $region44: #{fused_block_forward.6} parent=35 // pred_fallthru
        _
      // Predicated region
      $region45: #{fused_block_forward.6} parent=35 // pred_check
        %p327 = pneg %p88
      $region46: #{fused_block_forward.6} parent=35 // pred_check_branch
        %329 = sbr.rel (%p327) target = $region48
      $region47: #{fused_block_forward.6} parent=35 // pred_region
        %p330 = scmp.lt.s32.totalorder %s16, 1
        %s331 = scalar_select %p330, %s16, 1
        %s332 = smul.addr %s331, 8
        %s333 = smul.addr %s332, 4
        %s334 = scalar_lea.vmem %s2, %s333
      $region48: #{fused_block_forward.6} parent=35 // pred_fallthru
        _
      // Predicated region
      $region49: #{fused_block_forward.6} parent=35 // pred_check
        %p335 = pneg %p114
      $region50: #{fused_block_forward.6} parent=35 // pred_check_branch
        %337 = sbr.rel (%p335) target = $region52
      $region51: #{fused_block_forward.6} parent=35 // pred_region
        %p338 = scmp.lt.s32.totalorder %s16, 1
        %s339 = scalar_select %p338, %s16, 1
        %s340 = smul.addr %s339, 8
        %s341 = smul.addr %s340, 4
        %s342 = scalar_lea.vmem %s3, %s341
      $region52: #{fused_block_forward.6} parent=35 // pred_fallthru
        _
      // Predicated region
      $region53: #{fused_block_forward.6} parent=35 // pred_check
        %p343 = pneg %p140
      $region54: #{fused_block_forward.6} parent=35 // pred_check_branch
        %345 = sbr.rel (%p343) target = $region56
      $region55: #{fused_block_forward.6} parent=35 // pred_region
        %p346 = scmp.lt.s32.totalorder %s16, 1
        %s347 = scalar_select %p346, %s16, 1
        %s348 = smul.addr %s347, 8
        %s349 = smul.addr %s348, 8
        %s350 = scalar_lea.vmem %s4, %s349
      $region56: #{fused_block_forward.6} parent=35 // pred_fallthru
        _
    $region36: #{fused_block_forward.6} parent=5 // pred_fallthru
      _
    %p351 = scmp.le.s32.totalorder 1, %s16
    %p352 = scmp.lt.s32.totalorder %s16, 3
    %p353 = pnand %p351, %p352
    %p354 = pneg %p353
    // Predicated region
    $region57: #{fused_block_forward.6} parent=5 // pred_check
      _
    $region58: #{fused_block_forward.6} parent=5 // pred_check_branch
      %356 = sbr.rel (%p353) target = $region60
    $region59: #{fused_block_forward.6} parent=5 // pred_region
      %s357 = ssub.s32 %s16, 1
      %p358 = scmp.lt.s32.totalorder %s21, 1
      %s359 = scalar_select %p358, %s21, 1
      %s360 = smul.addr %s359, 8
      %s361 = smul.addr %s360, 4
      %s362 = scalar_lea.vmem %s0, %s361
      %p363 = pneg %p42
      %p364 = pneg %p39
      %p365 = scmp.lt.s32.totalorder %s21, 1
      %s366 = scalar_select %p365, %s21, 1
      %s367 = smul.addr %s366, 8
      %s368 = smul.addr %s367, 4
      %s369 = scalar_lea.vmem %s1, %s368
      %p370 = pneg %p68
      %p371 = pneg %p65
      %p372 = scmp.lt.s32.totalorder %s21, 1
      %s373 = scalar_select %p372, %s21, 1
      %s374 = smul.addr %s373, 8
      %s375 = smul.addr %s374, 4
      %s376 = scalar_lea.vmem %s2, %s375
      %p377 = pneg %p94
      %p378 = pneg %p91
      %p379 = scmp.lt.s32.totalorder %s21, 1
      %s380 = scalar_select %p379, %s21, 1
      %s381 = smul.addr %s380, 8
      %s382 = smul.addr %s381, 4
      %s383 = scalar_lea.vmem %s3, %s382
      %p384 = pneg %p120
      %p385 = pneg %p117
      %p386 = scmp.lt.s32.totalorder %s21, 1
      %s387 = scalar_select %p386, %s21, 1
      %s388 = smul.addr %s387, 8
      %s389 = smul.addr %s388, 8
      %s390 = scalar_lea.vmem %s4, %s389
      %p391 = pneg %p146
      %p392 = pneg %p143
      %p393 = pneg %p167
      %p394 = pneg %p164
      %p395 = pneg %p188
      %p396 = pneg %p185
      %p397 = pneg %p209
      %p398 = pneg %p206
      %p399 = pneg %p230
      %p400 = pneg %p227
      %p401 = pneg %p251
      %p402 = pneg %p248
      %p403 = pneg %p277
      %p404 = pneg %p274
      %p405 = scmp.lt.s32.totalorder %s21, 1
      %s406 = scalar_select %p405, %s21, 1
      %s407 = smul.addr %s406, 8
      %s408 = smul.addr %s407, 8
      %s409 = scalar_lea.vmem %s10, %s408
      %p410 = scmp.lt.s32.totalorder %s21, 1
      %s411 = scalar_select %p410, %s21, 1
      %s412 = smul.addr %s411, 8
      %s413 = smul.addr %s412, 4
      %s414 = scalar_lea.vmem %s0, %s413
      %p415 = scmp.lt.s32.totalorder %s21, 1
      %s416 = scalar_select %p415, %s21, 1
      %s417 = smul.addr %s416, 8
      %s418 = smul.addr %s417, 4
      %s419 = scalar_lea.vmem %s1, %s418
      %p420 = scmp.lt.s32.totalorder %s21, 1
      %s421 = scalar_select %p420, %s21, 1
      %s422 = smul.addr %s421, 8
      %s423 = smul.addr %s422, 4
      %s424 = scalar_lea.vmem %s2, %s423
      %p425 = scmp.lt.s32.totalorder %s21, 1
      %s426 = scalar_select %p425, %s21, 1
      %s427 = smul.addr %s426, 8
      %s428 = smul.addr %s427, 4
      %s429 = scalar_lea.vmem %s3, %s428
      %p430 = scmp.lt.s32.totalorder %s21, 1
      %s431 = scalar_select %p430, %s21, 1
      %s432 = smul.addr %s431, 8
      %s433 = smul.addr %s432, 8
      %s434 = scalar_lea.vmem %s4, %s433
      %p435 = scmp.lt.s32.totalorder %s21, 1
      %s436 = scalar_select %p435, %s21, 1
      %s437 = smul.addr %s436, 8
      %s438 = smul.addr %s437, 8
      %s439 = scalar_lea.vmem %s10, %s438
      %v441 = vld [vmem:[%s414] sm:$0xf]
      %v442 = vld [vmem:[%s414 + $0x4] sm:$0xf]
      %v443 = vld [vmem:[%s414 + $0x8] sm:$0xf]
      %v444 = vld [vmem:[%s414 + $0xc] sm:$0xf]
      %v445 = vld [vmem:[%s414 + $0x10] sm:$0xf]
      %v446 = vld [vmem:[%s414 + $0x14] sm:$0xf]
      %v447 = vld [vmem:[%s414 + $0x18] sm:$0xf]
      %v448 = vld [vmem:[%s414 + $0x1c] sm:$0xf]
      %v449 = vld [vmem:[%s419] sm:$0xf]
      %v450 = vld [vmem:[%s419 + $0x4] sm:$0xf]
      %v451 = vld [vmem:[%s419 + $0x8] sm:$0xf]
      %v452 = vld [vmem:[%s419 + $0xc] sm:$0xf]
      %v453 = vld [vmem:[%s419 + $0x10] sm:$0xf]
      %v454 = vld [vmem:[%s419 + $0x14] sm:$0xf]
      %v455 = vld [vmem:[%s419 + $0x18] sm:$0xf]
      %v456 = vld [vmem:[%s419 + $0x1c] sm:$0xf]
      %v457 = vld [vmem:[%s424] sm:$0xf]
      %v458 = vld [vmem:[%s424 + $0x4] sm:$0xf]
      %v459 = vld [vmem:[%s424 + $0x8] sm:$0xf]
      %v460 = vld [vmem:[%s424 + $0xc] sm:$0xf]
      %v461 = vld [vmem:[%s424 + $0x10] sm:$0xf]
      %v462 = vld [vmem:[%s424 + $0x14] sm:$0xf]
      %v463 = vld [vmem:[%s424 + $0x18] sm:$0xf]
      %v464 = vld [vmem:[%s424 + $0x1c] sm:$0xf]
      %v465 = vld [vmem:[%s5] sm:$0x3]
      %v474 = vunpack.c.l.b16 %v441
      %v475 = vunpack.c.l.b16 %v442
      %v476 = vunpack.c.l.b16 %v443
      %v477 = vunpack.c.l.b16 %v444
      %v478 = vunpack.c.l.b16 %v445
      %v479 = vunpack.c.l.b16 %v446
      %v480 = vunpack.c.l.b16 %v447
      %v481 = vunpack.c.l.b16 %v448
      %v482 = vpack.c.b16 %v475, %v474
      %v483 = vpack.c.b16 %v477, %v476
      %v484 = vpack.c.b16 %v479, %v478
      %v485 = vpack.c.b16 %v481, %v480
      %vm490 = vcmask 523264
      %v492 = vsel %vm490, %v465, 0
      %494 = vmatpush.bf16.msra.mxu0 0
      %495 = vmatpush.bf16.msra.mxu0 0
      %496 = vmatpush.bf16.msra.mxu0 0
      %497 = vmatpush.bf16.msra.mxu0 0
      %498 = vmatpush.bf16.msra.mxu0 %v485
      %499 = vmatpush.bf16.msra.mxu0 %v484
      %500 = vmatpush.bf16.msra.mxu0 %v483
      %501 = vmatpush.bf16.msra.mxu0 %v482
      %502 = vmatmul.bf16.gmra.mxu0 %v492
      %v503 = vpop.f32.mrf.mxu0
      %v504 = vadd.f32 0.0, %v503
      %v505 = vpop.f32.mrf.mxu0
      %506 = vdwg.mxu0
      %v507 = vpack.c.bf16 %v504, %v504
      %v508 = vld [vmem:[%s6] sm:$0x3]
      %v509 = vld [vmem:[%s7] sm:$0x3]
      %v510 = vunpack.c.l.bf16 %v508
      %v519 = vunpack.c.l.b16 %v449
      %v520 = vunpack.c.l.b16 %v450
      %v521 = vunpack.c.l.b16 %v451
      %v522 = vunpack.c.l.b16 %v452
      %v523 = vunpack.c.l.b16 %v453
      %v524 = vunpack.c.l.b16 %v454
      %v525 = vunpack.c.l.b16 %v455
      %v526 = vunpack.c.l.b16 %v456
      %v527 = vpack.c.b16 %v520, %v519
      %v528 = vpack.c.b16 %v522, %v521
      %v529 = vpack.c.b16 %v524, %v523
      %v530 = vpack.c.b16 %v526, %v525
      %vm531 = vcmask 130048
      %v533 = vsel %vm531, %v507, 0
      %v536 = vsel %vm531, %v527, 0
      %v539 = vsel %vm531, %v528, 0
      %v542 = vsel %vm531, %v529, 0
      %v545 = vsel %vm531, %v530, 0
      %547 = vmatpush.bf16.xpose.msra.mxu0 0
      %548 = vmatpush.bf16.xpose.msra.mxu0 0
      %549 = vmatpush.bf16.xpose.msra.mxu0 0
      %550 = vmatpush.bf16.xpose.msra.mxu0 0
      %551 = vmatpush.bf16.xpose.msra.mxu0 %v545
      %552 = vmatpush.bf16.xpose.msra.mxu0 %v542
      %553 = vmatpush.bf16.xpose.msra.mxu0 %v539
      %554 = vmatpush.bf16.xpose.msra.mxu0 %v536
      %555 = vmatmul.bf16.gmra.mxu0 %v533
      %v556 = vpop.f32.mrf.mxu0
      %v557 = vadd.f32 %v510, %v556
      %v558 = vpop.f32.mrf.mxu0
      %559 = vdwg.mxu0
      %vm560 = vcmask 519168
      %v561 = vsel %vm560, %v557, -inf
      %562 = vmax.xlane.f32.xlu0 %v561
      %v563 = vpop.xlane.xlu0 %562
      %v564 = vsub.f32 %v557, %v563
      %v565 = vmul.f32 %v564, 1.442695
      %v566 = vpow.pop %v565
      %v567 = vsel %vm560, %v566, 0.0
      %568 = vadd.xlane.f32.xlu0 %v567
      %v569 = vpop.xlane.xlu0 %568
      %v570 = vrcp.pop %v569
      %v571 = vmul.f32 %v566, %v570
      %v572 = vpack.c.bf16 %v571, %v571
      %v581 = vunpack.c.l.b16 %v457
      %v582 = vunpack.c.l.b16 %v458
      %v583 = vunpack.c.l.b16 %v459
      %v584 = vunpack.c.l.b16 %v460
      %v585 = vunpack.c.l.b16 %v461
      %v586 = vunpack.c.l.b16 %v462
      %v587 = vunpack.c.l.b16 %v463
      %v588 = vunpack.c.l.b16 %v464
      %v589 = vpack.c.b16 %v582, %v581
      %v590 = vpack.c.b16 %v584, %v583
      %v591 = vpack.c.b16 %v586, %v585
      %v592 = vpack.c.b16 %v588, %v587
      %v598 = vsel %vm490, %v572, 0
      %600 = vmatpush.bf16.msra.mxu0 0
      %601 = vmatpush.bf16.msra.mxu0 0
      %602 = vmatpush.bf16.msra.mxu0 0
      %603 = vmatpush.bf16.msra.mxu0 0
      %604 = vmatpush.bf16.msra.mxu0 %v592
      %605 = vmatpush.bf16.msra.mxu0 %v591
      %606 = vmatpush.bf16.msra.mxu0 %v590
      %607 = vmatpush.bf16.msra.mxu0 %v589
      %608 = vmatmul.bf16.gmra.mxu0 %v598
      %v609 = vpop.f32.mrf.mxu0
      %v610 = vadd.f32 0.0, %v609
      %v611 = vpop.f32.mrf.mxu0
      %612 = vdwg.mxu0
      %v613 = vunpack.c.l.bf16 %v509
      %v615 = vsel %vm531, %v482, 0
      %v618 = vsel %vm531, %v483, 0
      %v621 = vsel %vm531, %v484, 0
      %v624 = vsel %vm531, %v485, 0
      %626 = vmatpush.bf16.xpose.msra.mxu0 0
      %627 = vmatpush.bf16.xpose.msra.mxu0 0
      %628 = vmatpush.bf16.xpose.msra.mxu0 0
      %629 = vmatpush.bf16.xpose.msra.mxu0 0
      %630 = vmatpush.bf16.xpose.msra.mxu0 %v624
      %631 = vmatpush.bf16.xpose.msra.mxu0 %v621
      %632 = vmatpush.bf16.xpose.msra.mxu0 %v618
      %633 = vmatpush.bf16.xpose.msra.mxu0 %v615
      %634 = vmatmul.bf16.gmra.mxu0 %v533
      %v635 = vpop.f32.mrf.mxu0
      %v636 = vadd.f32 %v613, %v635
      %v637 = vpop.f32.mrf.mxu0
      %638 = vdwg.mxu0
      %v639 = vsel %vm560, %v636, -inf
      %v640 = vrot.slane %v639, 4
      %v641 = vmax.f32 %v639, %v640
      %v642 = vrot.slane %v641, 2
      %v643 = vmax.f32 %v641, %v642
      %v644 = vrot.slane %v643, 1
      %v645 = vmax.f32 %v643, %v644
      %v646 = vsub.f32 %v636, %v645
      %v647 = vmul.f32 %v646, 1.442695
      %v648 = vpow.pop %v647
      %v649 = vsel %vm560, %v648, 0.0
      %v650 = vrot.slane %v649, 4
      %v651 = vadd.f32 %v649, %v650
      %v652 = vrot.slane %v651, 2
      %v653 = vadd.f32 %v651, %v652
      %v654 = vrot.slane %v653, 1
      %v655 = vadd.f32 %v653, %v654
      %v656 = vrcp.pop %v655
      %v657 = vmul.f32 %v648, %v656
      %v658 = vpack.c.bf16 %v657, %v657
      %v659 = vpack.c.bf16 %v610, %v610
      %660 = vxpose.xlu0.c.b16.start [1/8] %v658, 128
      %661 = vxpose.xlu0.c.b16.cont [2/8] 0, 128
      %662 = vxpose.xlu0.c.b16.cont [3/8] 0, 128
      %663 = vxpose.xlu0.c.b16.cont [4/8] 0, 128
      %664 = vxpose.xlu0.c.b16.cont [5/8] 0, 128
      %665 = vxpose.xlu0.c.b16.cont [6/8] 0, 128
      %666 = vxpose.xlu0.c.b16.cont [7/8] 0, 128
      %667 = vxpose.xlu0.c.b16.end [8/8] 0, 128
      %v668 = vpop.trf.xlu0
      %v669 = vpop.trf.xlu0
      %v670 = vpop.trf.xlu0
      %v671 = vpop.trf.xlu0
      %v672 = vpop.trf.xlu0
      %v673 = vpop.trf.xlu0
      %v674 = vpop.trf.xlu0
      %v675 = vpop.trf.xlu0
      %vm676 = vcmask 31744
      %v678 = vsel %vm676, %v668, 0
      %v681 = vsel %vm676, %v669, 0
      %v684 = vsel %vm676, %v670, 0
      %v687 = vsel %vm676, %v671, 0
      %vm689 = vcmask 1041408
      %v691 = vsel %vm689, %v659, 0
      %693 = vmatpush.bf16.msra.mxu0 0
      %694 = vmatpush.bf16.msra.mxu0 0
      %695 = vmatpush.bf16.msra.mxu0 0
      %696 = vmatpush.bf16.msra.mxu0 0
      %697 = vmatpush.bf16.msra.mxu0 0
      %698 = vmatpush.bf16.msra.mxu0 0
      %699 = vmatpush.bf16.msra.mxu0 0
      %700 = vmatpush.bf16.msra.mxu0 %v691
      %701 = vmatmul.bf16.gmra.mxu0 %v678
      %v702 = vpop.f32.mrf.mxu0
      %v703 = vadd.f32 0.0, %v702
      %v704 = vpop.f32.mrf.mxu0
      %v705 = vadd.f32 0.0, %v704
      %706 = vmatmul.bf16.gmra.mxu0 %v681
      %v707 = vpop.f32.mrf.mxu0
      %v708 = vadd.f32 0.0, %v707
      %v709 = vpop.f32.mrf.mxu0
      %v710 = vadd.f32 0.0, %v709
      %711 = vmatmul.bf16.gmra.mxu0 %v684
      %v712 = vpop.f32.mrf.mxu0
      %v713 = vadd.f32 0.0, %v712
      %v714 = vpop.f32.mrf.mxu0
      %v715 = vadd.f32 0.0, %v714
      %716 = vmatmul.bf16.gmra.mxu0 %v687
      %v717 = vpop.f32.mrf.mxu0
      %v718 = vadd.f32 0.0, %v717
      %v719 = vpop.f32.mrf.mxu0
      %v720 = vadd.f32 0.0, %v719
      %721 = vdwg.mxu0
      %s722 = scalar_lea.vmem %s6, 2
      %v723 = vld [vmem:[%s722] sm:$0x3]
      %s724 = scalar_lea.vmem %s7, 2
      %v725 = vld [vmem:[%s724] sm:$0x3]
      %v726 = vunpack.c.l.bf16 %v723
      %v728 = vunpack.c.l.b16 %v507
      %v729 = vpack.c.b16 %v728, %v728
      %730 = vrot.lane.b32.xlu0 %v729, 112
      %v731 = vpop.permute.xlu0 %730
      %732 = vrot.lane.b32.xlu0 %v527, 112
      %v733 = vpop.permute.xlu0 %732
      %734 = vrot.lane.b32.xlu0 %v528, 112
      %v735 = vpop.permute.xlu0 %734
      %736 = vrot.lane.b32.xlu0 %v529, 112
      %v737 = vpop.permute.xlu0 %736
      %738 = vrot.lane.b32.xlu0 %v530, 112
      %v739 = vpop.permute.xlu0 %738
      %v741 = vsel %vm531, %v731, 0
      %v744 = vsel %vm531, %v733, 0
      %v747 = vsel %vm531, %v735, 0
      %v750 = vsel %vm531, %v737, 0
      %v753 = vsel %vm531, %v739, 0
      %755 = vmatpush.bf16.xpose.msra.mxu0 0
      %756 = vmatpush.bf16.xpose.msra.mxu0 0
      %757 = vmatpush.bf16.xpose.msra.mxu0 0
      %758 = vmatpush.bf16.xpose.msra.mxu0 0
      %759 = vmatpush.bf16.xpose.msra.mxu0 %v753
      %760 = vmatpush.bf16.xpose.msra.mxu0 %v750
      %761 = vmatpush.bf16.xpose.msra.mxu0 %v747
      %762 = vmatpush.bf16.xpose.msra.mxu0 %v744
      %763 = vmatmul.bf16.gmra.mxu0 %v741
      %v764 = vpop.f32.mrf.mxu0
      %v765 = vadd.f32 %v726, %v764
      %v766 = vpop.f32.mrf.mxu0
      %767 = vdwg.mxu0
      %v768 = vsel %vm560, %v765, -inf
      %769 = vmax.xlane.f32.xlu0 %v768
      %v770 = vpop.xlane.xlu0 %769
      %v771 = vsub.f32 %v765, %v770
      %v772 = vmul.f32 %v771, 1.442695
      %v773 = vpow.pop %v772
      %v774 = vsel %vm560, %v773, 0.0
      %775 = vadd.xlane.f32.xlu0 %v774
      %v776 = vpop.xlane.xlu0 %775
      %v777 = vrcp.pop %v776
      %v778 = vmul.f32 %v773, %v777
      %v779 = vpack.c.bf16 %v778, %v778
      %780 = vrot.lane.b32.xlu0 %v589, 112
      %v781 = vpop.permute.xlu0 %780
      %782 = vrot.lane.b32.xlu0 %v590, 112
      %v783 = vpop.permute.xlu0 %782
      %784 = vrot.lane.b32.xlu0 %v591, 112
      %v785 = vpop.permute.xlu0 %784
      %786 = vrot.lane.b32.xlu0 %v592, 112
      %v787 = vpop.permute.xlu0 %786
      %v793 = vsel %vm490, %v779, 0
      %795 = vmatpush.bf16.msra.mxu0 0
      %796 = vmatpush.bf16.msra.mxu0 0
      %797 = vmatpush.bf16.msra.mxu0 0
      %798 = vmatpush.bf16.msra.mxu0 0
      %799 = vmatpush.bf16.msra.mxu0 %v787
      %800 = vmatpush.bf16.msra.mxu0 %v785
      %801 = vmatpush.bf16.msra.mxu0 %v783
      %802 = vmatpush.bf16.msra.mxu0 %v781
      %803 = vmatmul.bf16.gmra.mxu0 %v793
      %v804 = vpop.f32.mrf.mxu0
      %v805 = vadd.f32 0.0, %v804
      %v806 = vpop.f32.mrf.mxu0
      %807 = vdwg.mxu0
      %v808 = vunpack.c.l.bf16 %v725
      %809 = vrot.lane.b32.xlu0 %v482, 112
      %v810 = vpop.permute.xlu0 %809
      %811 = vrot.lane.b32.xlu0 %v483, 112
      %v812 = vpop.permute.xlu0 %811
      %813 = vrot.lane.b32.xlu0 %v484, 112
      %v814 = vpop.permute.xlu0 %813
      %815 = vrot.lane.b32.xlu0 %v485, 112
      %v816 = vpop.permute.xlu0 %815
      %v818 = vsel %vm531, %v810, 0
      %v821 = vsel %vm531, %v812, 0
      %v824 = vsel %vm531, %v814, 0
      %v827 = vsel %vm531, %v816, 0
      %829 = vmatpush.bf16.xpose.msra.mxu0 0
      %830 = vmatpush.bf16.xpose.msra.mxu0 0
      %831 = vmatpush.bf16.xpose.msra.mxu0 0
      %832 = vmatpush.bf16.xpose.msra.mxu0 0
      %833 = vmatpush.bf16.xpose.msra.mxu0 %v827
      %834 = vmatpush.bf16.xpose.msra.mxu0 %v824
      %835 = vmatpush.bf16.xpose.msra.mxu0 %v821
      %836 = vmatpush.bf16.xpose.msra.mxu0 %v818
      %837 = vmatmul.bf16.gmra.mxu0 %v741
      %v838 = vpop.f32.mrf.mxu0
      %v839 = vadd.f32 %v808, %v838
      %v840 = vpop.f32.mrf.mxu0
      %841 = vdwg.mxu0
      %v842 = vsel %vm560, %v839, -inf
      %v843 = vrot.slane %v842, 4
      %v844 = vmax.f32 %v842, %v843
      %v845 = vrot.slane %v844, 2
      %v846 = vmax.f32 %v844, %v845
      %v847 = vrot.slane %v846, 1
      %v848 = vmax.f32 %v846, %v847
      %v849 = vsub.f32 %v839, %v848
      %v850 = vmul.f32 %v849, 1.442695
      %v851 = vpow.pop %v850
      %v852 = vsel %vm560, %v851, 0.0
      %v853 = vrot.slane %v852, 4
      %v854 = vadd.f32 %v852, %v853
      %v855 = vrot.slane %v854, 2
      %v856 = vadd.f32 %v854, %v855
      %v857 = vrot.slane %v856, 1
      %v858 = vadd.f32 %v856, %v857
      %v859 = vrcp.pop %v858
      %v860 = vmul.f32 %v851, %v859
      %v861 = vpack.c.bf16 %v860, %v860
      %v862 = vpack.c.bf16 %v805, %v805
      %863 = vxpose.xlu0.c.b16.start [1/8] %v861, 128
      %864 = vxpose.xlu0.c.b16.cont [2/8] 0, 128
      %865 = vxpose.xlu0.c.b16.cont [3/8] 0, 128
      %866 = vxpose.xlu0.c.b16.cont [4/8] 0, 128
      %867 = vxpose.xlu0.c.b16.cont [5/8] 0, 128
      %868 = vxpose.xlu0.c.b16.cont [6/8] 0, 128
      %869 = vxpose.xlu0.c.b16.cont [7/8] 0, 128
      %870 = vxpose.xlu0.c.b16.end [8/8] 0, 128
      %v871 = vpop.trf.xlu0
      %v872 = vpop.trf.xlu0
      %v873 = vpop.trf.xlu0
      %v874 = vpop.trf.xlu0
      %v875 = vpop.trf.xlu0
      %v876 = vpop.trf.xlu0
      %v877 = vpop.trf.xlu0
      %v878 = vpop.trf.xlu0
      %v880 = vsel %vm676, %v871, 0
      %v883 = vsel %vm676, %v872, 0
      %v886 = vsel %vm676, %v873, 0
      %v889 = vsel %vm676, %v874, 0
      %v892 = vsel %vm689, %v862, 0
      %894 = vmatpush.bf16.msra.mxu0 0
      %895 = vmatpush.bf16.msra.mxu0 0
      %896 = vmatpush.bf16.msra.mxu0 0
      %897 = vmatpush.bf16.msra.mxu0 0
      %898 = vmatpush.bf16.msra.mxu0 0
      %899 = vmatpush.bf16.msra.mxu0 0
      %900 = vmatpush.bf16.msra.mxu0 0
      %901 = vmatpush.bf16.msra.mxu0 %v892
      %902 = vmatmul.bf16.gmra.mxu0 %v880
      %v903 = vpop.f32.mrf.mxu0
      %v904 = vadd.f32 0.0, %v903
      %v905 = vpop.f32.mrf.mxu0
      %v906 = vadd.f32 0.0, %v905
      %907 = vmatmul.bf16.gmra.mxu0 %v883
      %v908 = vpop.f32.mrf.mxu0
      %v909 = vadd.f32 0.0, %v908
      %v910 = vpop.f32.mrf.mxu0
      %v911 = vadd.f32 0.0, %v910
      %912 = vmatmul.bf16.gmra.mxu0 %v886
      %v913 = vpop.f32.mrf.mxu0
      %v914 = vadd.f32 0.0, %v913
      %v915 = vpop.f32.mrf.mxu0
      %v916 = vadd.f32 0.0, %v915
      %917 = vmatmul.bf16.gmra.mxu0 %v889
      %v918 = vpop.f32.mrf.mxu0
      %v919 = vadd.f32 0.0, %v918
      %v920 = vpop.f32.mrf.mxu0
      %v921 = vadd.f32 0.0, %v920
      %922 = vdwg.mxu0
      %931 = vrot.lane.b32.xlu0 %v904, 16
      %v932 = vpop.permute.xlu0 %931
      %933 = vrot.lane.b32.xlu0 %v906, 16
      %v934 = vpop.permute.xlu0 %933
      %935 = vrot.lane.b32.xlu0 %v909, 16
      %v936 = vpop.permute.xlu0 %935
      %937 = vrot.lane.b32.xlu0 %v911, 16
      %v938 = vpop.permute.xlu0 %937
      %939 = vrot.lane.b32.xlu0 %v914, 16
      %v940 = vpop.permute.xlu0 %939
      %941 = vrot.lane.b32.xlu0 %v916, 16
      %v942 = vpop.permute.xlu0 %941
      %943 = vrot.lane.b32.xlu0 %v919, 16
      %v944 = vpop.permute.xlu0 %943
      %945 = vrot.lane.b32.xlu0 %v921, 16
      %v946 = vpop.permute.xlu0 %945
      %v955 = vsel %vm531, %v703, %v932
      %v956 = vsel %vm531, %v705, %v934
      %v957 = vsel %vm531, %v708, %v936
      %v958 = vsel %vm531, %v710, %v938
      %v959 = vsel %vm531, %v713, %v940
      %v960 = vsel %vm531, %v715, %v942
      %v961 = vsel %vm531, %v718, %v944
      %v962 = vsel %vm531, %v720, %v946
      %v963 = vld [vmem:[%s429] sm:$0xf]
      %v964 = vld [vmem:[%s429 + $0x4] sm:$0xf]
      %v965 = vld [vmem:[%s429 + $0x8] sm:$0xf]
      %v966 = vld [vmem:[%s429 + $0xc] sm:$0xf]
      %v967 = vld [vmem:[%s429 + $0x10] sm:$0xf]
      %v968 = vld [vmem:[%s429 + $0x14] sm:$0xf]
      %v969 = vld [vmem:[%s429 + $0x18] sm:$0xf]
      %v970 = vld [vmem:[%s429 + $0x1c] sm:$0xf]
      %v971 = vunpack.c.l.bf16 %v963
      %v972 = vunpack.c.l.bf16 %v964
      %v973 = vunpack.c.l.bf16 %v965
      %v974 = vunpack.c.l.bf16 %v966
      %v975 = vunpack.c.l.bf16 %v967
      %v976 = vunpack.c.l.bf16 %v968
      %v977 = vunpack.c.l.bf16 %v969
      %v978 = vunpack.c.l.bf16 %v970
      %v979 = vadd.f32 %v955, %v971
      %v980 = vadd.f32 %v956, %v972
      %v981 = vadd.f32 %v957, %v973
      %v982 = vadd.f32 %v958, %v974
      %v983 = vadd.f32 %v959, %v975
      %v984 = vadd.f32 %v960, %v976
      %v985 = vadd.f32 %v961, %v977
      %v986 = vadd.f32 %v962, %v978
      %v987 = vpack.c.bf16 %v980, %v979
      %v988 = vpack.c.bf16 %v982, %v981
      %v989 = vpack.c.bf16 %v984, %v983
      %v990 = vpack.c.bf16 %v986, %v985
      %v991 = vld [vmem:[%s8] sm:$0xf]
      %v992 = vld [vmem:[%s8 + $0x4] sm:$0xf]
      %v993 = vld [vmem:[%s8 + $0x8] sm:$0xf]
      %v994 = vld [vmem:[%s8 + $0xc] sm:$0xf]
      %v995 = vld [vmem:[%s9] sm:$0x1]
      %v997 = vperm.slane %v995, 0
      %v1003 = vunpack.c.l.b16 %v991
      %v1004 = vunpack.c.l.b16 %v992
      %v1005 = vunpack.c.l.b16 %v993
      %v1006 = vunpack.c.l.b16 %v994
      %v1007 = vpack.c.b16 %v1004, %v1003
      %v1008 = vpack.c.b16 %v1006, %v1005
      %vm1011 = vcmask 261120
      %v1013 = vsel %vm1011, %v987, 0
      %v1016 = vsel %vm1011, %v988, 0
      %v1019 = vsel %vm1011, %v989, 0
      %v1022 = vsel %vm1011, %v990, 0
      %1024 = vmatpush.bf16.msra.mxu0 0
      %1025 = vmatpush.bf16.msra.mxu0 0
      %1026 = vmatpush.bf16.msra.mxu0 0
      %1027 = vmatpush.bf16.msra.mxu0 0
      %1028 = vmatpush.bf16.msra.mxu0 0
      %1029 = vmatpush.bf16.msra.mxu0 0
      %1030 = vmatpush.bf16.msra.mxu0 %v1008
      %1031 = vmatpush.bf16.msra.mxu0 %v1007
      %1032 = vmatmul.bf16.gmra.mxu0 %v1013
      %v1033 = vpop.f32.mrf.mxu0
      %v1034 = vadd.f32 %v997, %v1033
      %v1035 = vpop.f32.mrf.mxu0
      %v1036 = vadd.f32 %v997, %v1035
      %1037 = vmatmul.bf16.gmra.mxu0 %v1016
      %v1038 = vpop.f32.mrf.mxu0
      %v1039 = vadd.f32 %v997, %v1038
      %v1040 = vpop.f32.mrf.mxu0
      %v1041 = vadd.f32 %v997, %v1040
      %1042 = vmatmul.bf16.gmra.mxu0 %v1019
      %v1043 = vpop.f32.mrf.mxu0
      %v1044 = vadd.f32 %v997, %v1043
      %v1045 = vpop.f32.mrf.mxu0
      %v1046 = vadd.f32 %v997, %v1045
      %1047 = vmatmul.bf16.gmra.mxu0 %v1022
      %v1048 = vpop.f32.mrf.mxu0
      %v1049 = vadd.f32 %v997, %v1048
      %v1050 = vpop.f32.mrf.mxu0
      %v1051 = vadd.f32 %v997, %v1050
      %1052 = vdwg.mxu0
      %v1053 = vld [vmem:[%s434] sm:$0xff]
      %v1054 = vld [vmem:[%s434 + $0x8] sm:$0xff]
      %v1055 = vld [vmem:[%s434 + $0x10] sm:$0xff]
      %v1056 = vld [vmem:[%s434 + $0x18] sm:$0xff]
      %v1057 = vld [vmem:[%s434 + $0x20] sm:$0xff]
      %v1058 = vld [vmem:[%s434 + $0x28] sm:$0xff]
      %v1059 = vld [vmem:[%s434 + $0x30] sm:$0xff]
      %v1060 = vld [vmem:[%s434 + $0x38] sm:$0xff]
      %v1061 = vadd.f32 %v1034, %v1053
      %v1062 = vadd.f32 %v1036, %v1054
      %v1063 = vadd.f32 %v1039, %v1055
      %v1064 = vadd.f32 %v1041, %v1056
      %v1065 = vadd.f32 %v1044, %v1057
      %v1066 = vadd.f32 %v1046, %v1058
      %v1067 = vadd.f32 %v1049, %v1059
      %v1068 = vadd.f32 %v1051, %v1060
      %1069 = vst.msk [vmem:[%s439] sm:$0xff] %vm1011, %v1061
      %1070 = vst.msk [vmem:[%s439 + $0x8] sm:$0xff] %vm1011, %v1062
      %1071 = vst.msk [vmem:[%s439 + $0x10] sm:$0xff] %vm1011, %v1063
      %1072 = vst.msk [vmem:[%s439 + $0x18] sm:$0xff] %vm1011, %v1064
      %1073 = vst.msk [vmem:[%s439 + $0x20] sm:$0xff] %vm1011, %v1065
      %1074 = vst.msk [vmem:[%s439 + $0x28] sm:$0xff] %vm1011, %v1066
      %1075 = vst.msk [vmem:[%s439 + $0x30] sm:$0xff] %vm1011, %v1067
      %1076 = vst.msk [vmem:[%s439 + $0x38] sm:$0xff] %vm1011, %v1068
      %p1077 = scmp.lt.s32.totalorder %s21, 1
      %s1078 = scalar_select %p1077, %s21, 1
      %s1079 = smul.addr %s1078, 8
      %s1080 = smul.addr %s1079, 8
      %s1081 = scalar_lea.vmem %s10, %s1080
      // Predicated region
      $region61: #{fused_block_forward.6} parent=59 // pred_check
        %p1082 = pneg %p274
      $region62: #{fused_block_forward.6} parent=59 // pred_check_branch
        %1084 = sbr.rel (%p1082) target = $region64
      $region63: #{fused_block_forward.6} parent=59 // pred_region
        _
      $region64: #{fused_block_forward.6} parent=59 // pred_fallthru
        _
    $region60: #{fused_block_forward.6} parent=5 // pred_fallthru
      _
    %p1085 = scmp.le.s32.totalorder 2, %s16
    // Predicated region
    $region65: #{fused_block_forward.6} parent=5 // pred_check
      %p1086 = pneg %p1085
    $region66: #{fused_block_forward.6} parent=5 // pred_check_branch
      %1088 = sbr.rel (%p1086) target = $region68
    $region67: #{fused_block_forward.6} parent=5 // pred_region
      %s1089 = ssub.s32 %s16, 2
      // Predicated region
      $region69: #{fused_block_forward.6} parent=67 // pred_check
        %p1090 = pneg %p280
      $region70: #{fused_block_forward.6} parent=67 // pred_check_branch
        %1092 = sbr.rel (%p1090) target = $region72
      $region71: #{fused_block_forward.6} parent=67 // pred_region
        %p1093 = scmp.lt.s32.totalorder %s22, 1
        %s1094 = scalar_select %p1093, %s22, 1
        %s1095 = smul.addr %s1094, 8
        %s1096 = smul.addr %s1095, 8
        %s1097 = scalar_lea.vmem %s10, %s1096
      $region72: #{fused_block_forward.6} parent=67 // pred_fallthru
        _
    $region68: #{fused_block_forward.6} parent=5 // pred_fallthru
      _
  $region6: #{fused_block_forward.6} parent=0 // loop_footer
    %s20 = sadd.s32 1, %s16
  $region7: #{fused_block_forward.6} parent=0 // loop_footer_branch
    %15 = sbr.rel target = $region3
  $region8: #{fused_block_forward.6} parent=0 // loop_exit
    _

// kernel: fused_block_forward.7
$region0: #{fused_block_forward.7}
  #allocation0 [shape = 'u32[]', space=smem, size = 0x4, offset = 0x4, fixed_abs, tag = 'smem constant byte address 0x4 - core index']
  #allocation1 [shape = 'u32[72,128]{1,0:T(1,128)}', space=vmem, size = 0x9000, scoped, tag = 'internal scratch']
  %s0 = inlined_call_operand.vmem [shape: f32[128,32], index: 0, kind: input, shape index: {}]
  %s1 = inlined_call_operand.vmem [shape: f32[1,32], index: 1, kind: input, shape index: {}]
  %s2 = inlined_call_operand.vmem [shape: f32[1,32], index: 2, kind: input, shape index: {}]
  %s3 = inlined_call_operand.vmem [shape: bf16[32,128], index: 3, kind: input, shape index: {}]
  %s4 = inlined_call_operand.vmem [shape: f32[1,128], index: 4, kind: input, shape index: {}]
  %s5 = inlined_call_operand.vmem [shape: bf16[128,32], index: 5, kind: input, shape index: {}]
  %s6 = inlined_call_operand.vmem [shape: f32[1,32], index: 6, kind: input, shape index: {}]
  %s7 = inlined_call_operand.vmem [shape: f32[128,32], index: 7, kind: output, shape index: {}]
  %s8 = sld [smem:[#allocation0]]
  $region38: #{fused_block_forward.7} parent=0
    _
  %s10 = ssub.s32 1, %s8
  %s11 = scalar_select 0, %s10, %s8
  // Predicated region
  $region2: #{fused_block_forward.7} parent=0 // pred_check
    _
  $region3: #{fused_block_forward.7} parent=0 // pred_check_branch
    %13 = sbr.rel (0) target = $region5
  $region4: #{fused_block_forward.7} parent=0 // pred_region
    _
  $region5: #{fused_block_forward.7} parent=0 // pred_fallthru
    _
  // Predicated region
  $region6: #{fused_block_forward.7} parent=0 // pred_check
    _
  $region7: #{fused_block_forward.7} parent=0 // pred_check_branch
    %15 = sbr.rel (0) target = $region9
  $region8: #{fused_block_forward.7} parent=0 // pred_region
    _
  $region9: #{fused_block_forward.7} parent=0 // pred_fallthru
    _
  // Predicated region
  $region10: #{fused_block_forward.7} parent=0 // pred_check
    _
  $region11: #{fused_block_forward.7} parent=0 // pred_check_branch
    %17 = sbr.rel (0) target = $region13
  $region12: #{fused_block_forward.7} parent=0 // pred_region
    _
  $region13: #{fused_block_forward.7} parent=0 // pred_fallthru
    _
  // Predicated region
  $region14: #{fused_block_forward.7} parent=0 // pred_check
    _
  $region15: #{fused_block_forward.7} parent=0 // pred_check_branch
    %19 = sbr.rel (0) target = $region17
  $region16: #{fused_block_forward.7} parent=0 // pred_region
    _
  $region17: #{fused_block_forward.7} parent=0 // pred_fallthru
    _
  // Predicated region
  $region18: #{fused_block_forward.7} parent=0 // pred_check
    _
  $region19: #{fused_block_forward.7} parent=0 // pred_check_branch
    %21 = sbr.rel (0) target = $region21
  $region20: #{fused_block_forward.7} parent=0 // pred_region
    _
  $region21: #{fused_block_forward.7} parent=0 // pred_fallthru
    _
  // Predicated region
  $region22: #{fused_block_forward.7} parent=0 // pred_check
    _
  $region23: #{fused_block_forward.7} parent=0 // pred_check_branch
    %23 = sbr.rel (0) target = $region25
  $region24: #{fused_block_forward.7} parent=0 // pred_region
    _
  $region25: #{fused_block_forward.7} parent=0 // pred_fallthru
    _
  // Predicated region
  $region26: #{fused_block_forward.7} parent=0 // pred_check
    _
  $region27: #{fused_block_forward.7} parent=0 // pred_check_branch
    %25 = sbr.rel (0) target = $region29
  $region28: #{fused_block_forward.7} parent=0 // pred_region
    _
  $region29: #{fused_block_forward.7} parent=0 // pred_fallthru
    _
  %v27 = vld [vmem:[%s0] sm:$0xff]
  %v28 = vld [vmem:[%s0 + $0x8] sm:$0xff]
  %v29 = vld [vmem:[%s0 + $0x10] sm:$0xff]
  %v30 = vld [vmem:[%s0 + $0x18] sm:$0xff]
  %v31 = vld [vmem:[%s0 + $0x20] sm:$0xff]
  %v32 = vld [vmem:[%s0 + $0x28] sm:$0xff]
  %v33 = vld [vmem:[%s0 + $0x30] sm:$0xff]
  %v34 = vld [vmem:[%s0 + $0x38] sm:$0xff]
  %v35 = vld [vmem:[%s0 + $0x40] sm:$0xff]
  %v36 = vld [vmem:[%s0 + $0x48] sm:$0xff]
  %v37 = vld [vmem:[%s0 + $0x50] sm:$0xff]
  %v38 = vld [vmem:[%s0 + $0x58] sm:$0xff]
  %v39 = vld [vmem:[%s0 + $0x60] sm:$0xff]
  %v40 = vld [vmem:[%s0 + $0x68] sm:$0xff]
  %v41 = vld [vmem:[%s0 + $0x70] sm:$0xff]
  %v42 = vld [vmem:[%s0 + $0x78] sm:$0xff]
  %v43 = vld [vmem:[%s1] sm:$0x1]
  %v44 = vld [vmem:[%s2] sm:$0x1]
  %vm45 = vcmask 261120
  %v46 = vsel %vm45, %v27, 0.0
  %47 = vadd.xlane.f32.xlu0 %v46
  %v48 = vpop.xlane.xlu0 %47
  %v49 = vsel %vm45, %v28, 0.0
  %50 = vadd.xlane.f32.xlu0 %v49
  %v51 = vpop.xlane.xlu0 %50
  %v52 = vsel %vm45, %v29, 0.0
  %53 = vadd.xlane.f32.xlu0 %v52
  %v54 = vpop.xlane.xlu0 %53
  %v55 = vsel %vm45, %v30, 0.0
  %56 = vadd.xlane.f32.xlu0 %v55
  %v57 = vpop.xlane.xlu0 %56
  %v58 = vsel %vm45, %v31, 0.0
  %59 = vadd.xlane.f32.xlu0 %v58
  %v60 = vpop.xlane.xlu0 %59
  %v61 = vsel %vm45, %v32, 0.0
  %62 = vadd.xlane.f32.xlu0 %v61
  %v63 = vpop.xlane.xlu0 %62
  %v64 = vsel %vm45, %v33, 0.0
  %65 = vadd.xlane.f32.xlu0 %v64
  %v66 = vpop.xlane.xlu0 %65
  %v67 = vsel %vm45, %v34, 0.0
  %68 = vadd.xlane.f32.xlu0 %v67
  %v69 = vpop.xlane.xlu0 %68
  %v70 = vsel %vm45, %v35, 0.0
  %71 = vadd.xlane.f32.xlu0 %v70
  %v72 = vpop.xlane.xlu0 %71
  %v73 = vsel %vm45, %v36, 0.0
  %74 = vadd.xlane.f32.xlu0 %v73
  %v75 = vpop.xlane.xlu0 %74
  %v76 = vsel %vm45, %v37, 0.0
  %77 = vadd.xlane.f32.xlu0 %v76
  %v78 = vpop.xlane.xlu0 %77
  %v79 = vsel %vm45, %v38, 0.0
  %80 = vadd.xlane.f32.xlu0 %v79
  %v81 = vpop.xlane.xlu0 %80
  %v82 = vsel %vm45, %v39, 0.0
  %83 = vadd.xlane.f32.xlu0 %v82
  %v84 = vpop.xlane.xlu0 %83
  %v85 = vsel %vm45, %v40, 0.0
  %86 = vadd.xlane.f32.xlu0 %v85
  %v87 = vpop.xlane.xlu0 %86
  %v88 = vsel %vm45, %v41, 0.0
  %89 = vadd.xlane.f32.xlu0 %v88
  %v90 = vpop.xlane.xlu0 %89
  %v91 = vsel %vm45, %v42, 0.0
  %92 = vadd.xlane.f32.xlu0 %v91
  %v93 = vpop.xlane.xlu0 %92
  %v94 = vrcp.pop 32.0
  %v95 = vmul.f32 32.0, %v94
  %v96 = vsub.f32 1.0, %v95
  %v97 = vmul.f32 %v94, %v96
  %v98 = vadd.f32 %v94, %v97
  %vm99 = vweird.f32 %v94
  %v100 = vsel %vm99, %v94, %v98
  %v101 = vmul.f32 %v48, %v100
  %v102 = vmul.f32 %v51, %v100
  %v103 = vmul.f32 %v54, %v100
  %v104 = vmul.f32 %v57, %v100
  %v105 = vmul.f32 %v60, %v100
  %v106 = vmul.f32 %v63, %v100
  %v107 = vmul.f32 %v66, %v100
  %v108 = vmul.f32 %v69, %v100
  %v109 = vmul.f32 %v72, %v100
  %v110 = vmul.f32 %v75, %v100
  %v111 = vmul.f32 %v78, %v100
  %v112 = vmul.f32 %v81, %v100
  %v113 = vmul.f32 %v84, %v100
  %v114 = vmul.f32 %v87, %v100
  %v115 = vmul.f32 %v90, %v100
  %v116 = vmul.f32 %v93, %v100
  %v117 = vsub.f32 %v27, %v101
  %v118 = vsub.f32 %v28, %v102
  %v119 = vsub.f32 %v29, %v103
  %v120 = vsub.f32 %v30, %v104
  %v121 = vsub.f32 %v31, %v105
  %v122 = vsub.f32 %v32, %v106
  %v123 = vsub.f32 %v33, %v107
  %v124 = vsub.f32 %v34, %v108
  %v125 = vsub.f32 %v35, %v109
  %v126 = vsub.f32 %v36, %v110
  %v127 = vsub.f32 %v37, %v111
  %v128 = vsub.f32 %v38, %v112
  %v129 = vsub.f32 %v39, %v113
  %v130 = vsub.f32 %v40, %v114
  %v131 = vsub.f32 %v41, %v115
  %v132 = vsub.f32 %v42, %v116
  %v133 = vmul.f32 %v117, %v117
  %v134 = vmul.f32 %v118, %v118
  %v135 = vmul.f32 %v119, %v119
  %v136 = vmul.f32 %v120, %v120
  %v137 = vmul.f32 %v121, %v121
  %v138 = vmul.f32 %v122, %v122
  %v139 = vmul.f32 %v123, %v123
  %v140 = vmul.f32 %v124, %v124
  %v141 = vmul.f32 %v125, %v125
  %v142 = vmul.f32 %v126, %v126
  %v143 = vmul.f32 %v127, %v127
  %v144 = vmul.f32 %v128, %v128
  %v145 = vmul.f32 %v129, %v129
  %v146 = vmul.f32 %v130, %v130
  %v147 = vmul.f32 %v131, %v131
  %v148 = vmul.f32 %v132, %v132
  %v149 = vsel %vm45, %v133, 0.0
  %150 = vadd.xlane.f32.xlu0 %v149
  %v151 = vpop.xlane.xlu0 %150
  %v152 = vsel %vm45, %v134, 0.0
  %153 = vadd.xlane.f32.xlu0 %v152
  %v154 = vpop.xlane.xlu0 %153
  %v155 = vsel %vm45, %v135, 0.0
  %156 = vadd.xlane.f32.xlu0 %v155
  %v157 = vpop.xlane.xlu0 %156
  %v158 = vsel %vm45, %v136, 0.0
  %159 = vadd.xlane.f32.xlu0 %v158
  %v160 = vpop.xlane.xlu0 %159
  %v161 = vsel %vm45, %v137, 0.0
  %162 = vadd.xlane.f32.xlu0 %v161
  %v163 = vpop.xlane.xlu0 %162
  %v164 = vsel %vm45, %v138, 0.0
  %165 = vadd.xlane.f32.xlu0 %v164
  %v166 = vpop.xlane.xlu0 %165
  %v167 = vsel %vm45, %v139, 0.0
  %168 = vadd.xlane.f32.xlu0 %v167
  %v169 = vpop.xlane.xlu0 %168
  %v170 = vsel %vm45, %v140, 0.0
  %171 = vadd.xlane.f32.xlu0 %v170
  %v172 = vpop.xlane.xlu0 %171
  %v173 = vsel %vm45, %v141, 0.0
  %174 = vadd.xlane.f32.xlu0 %v173
  %v175 = vpop.xlane.xlu0 %174
  %v176 = vsel %vm45, %v142, 0.0
  %177 = vadd.xlane.f32.xlu0 %v176
  %v178 = vpop.xlane.xlu0 %177
  %v179 = vsel %vm45, %v143, 0.0
  %180 = vadd.xlane.f32.xlu0 %v179
  %v181 = vpop.xlane.xlu0 %180
  %v182 = vsel %vm45, %v144, 0.0
  %183 = vadd.xlane.f32.xlu0 %v182
  %v184 = vpop.xlane.xlu0 %183
  %v185 = vsel %vm45, %v145, 0.0
  %186 = vadd.xlane.f32.xlu0 %v185
  %v187 = vpop.xlane.xlu0 %186
  %v188 = vsel %vm45, %v146, 0.0
  %189 = vadd.xlane.f32.xlu0 %v188
  %v190 = vpop.xlane.xlu0 %189
  %v191 = vsel %vm45, %v147, 0.0
  %192 = vadd.xlane.f32.xlu0 %v191
  %v193 = vpop.xlane.xlu0 %192
  %v194 = vsel %vm45, %v148, 0.0
  %195 = vadd.xlane.f32.xlu0 %v194
  %v196 = vpop.xlane.xlu0 %195
  %v197 = vmul.f32 %v151, %v100
  %v198 = vmul.f32 %v154, %v100
  %v199 = vmul.f32 %v157, %v100
  %v200 = vmul.f32 %v160, %v100
  %v201 = vmul.f32 %v163, %v100
  %v202 = vmul.f32 %v166, %v100
  %v203 = vmul.f32 %v169, %v100
  %v204 = vmul.f32 %v172, %v100
  %v205 = vmul.f32 %v175, %v100
  %v206 = vmul.f32 %v178, %v100
  %v207 = vmul.f32 %v181, %v100
  %v208 = vmul.f32 %v184, %v100
  %v209 = vmul.f32 %v187, %v100
  %v210 = vmul.f32 %v190, %v100
  %v211 = vmul.f32 %v193, %v100
  %v212 = vmul.f32 %v196, %v100
  %v213 = vadd.f32 %v197, 1e-05
  %v214 = vadd.f32 %v198, 1e-05
  %v215 = vadd.f32 %v199, 1e-05
  %v216 = vadd.f32 %v200, 1e-05
  %v217 = vadd.f32 %v201, 1e-05
  %v218 = vadd.f32 %v202, 1e-05
  %v219 = vadd.f32 %v203, 1e-05
  %v220 = vadd.f32 %v204, 1e-05
  %v221 = vadd.f32 %v205, 1e-05
  %v222 = vadd.f32 %v206, 1e-05
  %v223 = vadd.f32 %v207, 1e-05
  %v224 = vadd.f32 %v208, 1e-05
  %v225 = vadd.f32 %v209, 1e-05
  %v226 = vadd.f32 %v210, 1e-05
  %v227 = vadd.f32 %v211, 1e-05
  %v228 = vadd.f32 %v212, 1e-05
  %v229 = vrsqrt.pop %v213
  %v230 = vmul.f32 %v229, %v213
  %v231 = vmul.f32 %v230, %v229
  %v232 = vmul.f32 0.5, %v231
  %v233 = vsub.f32 1.5, %v232
  %v234 = vmul.f32 %v229, %v233
  %vm235 = vweird.f32 %v213
  %vm236 = vweird.f32 %v229
  %vm237 = vmor %vm235, %vm236
  %v238 = vsel %vm237, %v229, %v234
  %v239 = vrsqrt.pop %v214
  %v240 = vmul.f32 %v239, %v214
  %v241 = vmul.f32 %v240, %v239
  %v242 = vmul.f32 0.5, %v241
  %v243 = vsub.f32 1.5, %v242
  %v244 = vmul.f32 %v239, %v243
  %vm245 = vweird.f32 %v214
  %vm246 = vweird.f32 %v239
  %vm247 = vmor %vm245, %vm246
  %v248 = vsel %vm247, %v239, %v244
  %v249 = vrsqrt.pop %v215
  %v250 = vmul.f32 %v249, %v215
  %v251 = vmul.f32 %v250, %v249
  %v252 = vmul.f32 0.5, %v251
  %v253 = vsub.f32 1.5, %v252
  %v254 = vmul.f32 %v249, %v253
  %vm255 = vweird.f32 %v215
  %vm256 = vweird.f32 %v249
  %vm257 = vmor %vm255, %vm256
  %v258 = vsel %vm257, %v249, %v254
  %v259 = vrsqrt.pop %v216
  %v260 = vmul.f32 %v259, %v216
  %v261 = vmul.f32 %v260, %v259
  %v262 = vmul.f32 0.5, %v261
  %v263 = vsub.f32 1.5, %v262
  %v264 = vmul.f32 %v259, %v263
  %vm265 = vweird.f32 %v216
  %vm266 = vweird.f32 %v259
  %vm267 = vmor %vm265, %vm266
  %v268 = vsel %vm267, %v259, %v264
  %v269 = vrsqrt.pop %v217
  %v270 = vmul.f32 %v269, %v217
  %v271 = vmul.f32 %v270, %v269
  %v272 = vmul.f32 0.5, %v271
  %v273 = vsub.f32 1.5, %v272
  %v274 = vmul.f32 %v269, %v273
  %vm275 = vweird.f32 %v217
  %vm276 = vweird.f32 %v269
  %vm277 = vmor %vm275, %vm276
  %v278 = vsel %vm277, %v269, %v274
  %v279 = vrsqrt.pop %v218
  %v280 = vmul.f32 %v279, %v218
  %v281 = vmul.f32 %v280, %v279
  %v282 = vmul.f32 0.5, %v281
  %v283 = vsub.f32 1.5, %v282
  %v284 = vmul.f32 %v279, %v283
  %vm285 = vweird.f32 %v218
  %vm286 = vweird.f32 %v279
  %vm287 = vmor %vm285, %vm286
  %v288 = vsel %vm287, %v279, %v284
  %v289 = vrsqrt.pop %v219
  %v290 = vmul.f32 %v289, %v219
  %v291 = vmul.f32 %v290, %v289
  %v292 = vmul.f32 0.5, %v291
  %v293 = vsub.f32 1.5, %v292
  %v294 = vmul.f32 %v289, %v293
  %vm295 = vweird.f32 %v219
  %vm296 = vweird.f32 %v289
  %vm297 = vmor %vm295, %vm296
  %v298 = vsel %vm297, %v289, %v294
  %v299 = vrsqrt.pop %v220
  %v300 = vmul.f32 %v299, %v220
  %v301 = vmul.f32 %v300, %v299
  %v302 = vmul.f32 0.5, %v301
  %v303 = vsub.f32 1.5, %v302
  %v304 = vmul.f32 %v299, %v303
  %vm305 = vweird.f32 %v220
  %vm306 = vweird.f32 %v299
  %vm307 = vmor %vm305, %vm306
  %v308 = vsel %vm307, %v299, %v304
  %v309 = vrsqrt.pop %v221
  %v310 = vmul.f32 %v309, %v221
  %v311 = vmul.f32 %v310, %v309
  %v312 = vmul.f32 0.5, %v311
  %v313 = vsub.f32 1.5, %v312
  %v314 = vmul.f32 %v309, %v313
  %vm315 = vweird.f32 %v221
  %vm316 = vweird.f32 %v309
  %vm317 = vmor %vm315, %vm316
  %v318 = vsel %vm317, %v309, %v314
  %v319 = vrsqrt.pop %v222
  %v320 = vmul.f32 %v319, %v222
  %v321 = vmul.f32 %v320, %v319
  %v322 = vmul.f32 0.5, %v321
  %v323 = vsub.f32 1.5, %v322
  %v324 = vmul.f32 %v319, %v323
  %vm325 = vweird.f32 %v222
  %vm326 = vweird.f32 %v319
  %vm327 = vmor %vm325, %vm326
  %v328 = vsel %vm327, %v319, %v324
  %v329 = vrsqrt.pop %v223
  %v330 = vmul.f32 %v329, %v223
  %v331 = vmul.f32 %v330, %v329
  %v332 = vmul.f32 0.5, %v331
  %v333 = vsub.f32 1.5, %v332
  %v334 = vmul.f32 %v329, %v333
  %vm335 = vweird.f32 %v223
  %vm336 = vweird.f32 %v329
  %vm337 = vmor %vm335, %vm336
  %v338 = vsel %vm337, %v329, %v334
  %v339 = vrsqrt.pop %v224
  %v340 = vmul.f32 %v339, %v224
  %v341 = vmul.f32 %v340, %v339
  %v342 = vmul.f32 0.5, %v341
  %v343 = vsub.f32 1.5, %v342
  %v344 = vmul.f32 %v339, %v343
  %vm345 = vweird.f32 %v224
  %vm346 = vweird.f32 %v339
  %vm347 = vmor %vm345, %vm346
  %v348 = vsel %vm347, %v339, %v344
  %v349 = vrsqrt.pop %v225
  %v350 = vmul.f32 %v349, %v225
  %v351 = vmul.f32 %v350, %v349
  %v352 = vmul.f32 0.5, %v351
  %v353 = vsub.f32 1.5, %v352
  %v354 = vmul.f32 %v349, %v353
  %vm355 = vweird.f32 %v225
  %vm356 = vweird.f32 %v349
  %vm357 = vmor %vm355, %vm356
  %v358 = vsel %vm357, %v349, %v354
  %v359 = vrsqrt.pop %v226
  %v360 = vmul.f32 %v359, %v226
  %v361 = vmul.f32 %v360, %v359
  %v362 = vmul.f32 0.5, %v361
  %v363 = vsub.f32 1.5, %v362
  %v364 = vmul.f32 %v359, %v363
  %vm365 = vweird.f32 %v226
  %vm366 = vweird.f32 %v359
  %vm367 = vmor %vm365, %vm366
  %v368 = vsel %vm367, %v359, %v364
  %v369 = vrsqrt.pop %v227
  %v370 = vmul.f32 %v369, %v227
  %v371 = vmul.f32 %v370, %v369
  %v372 = vmul.f32 0.5, %v371
  %v373 = vsub.f32 1.5, %v372
  %v374 = vmul.f32 %v369, %v373
  %vm375 = vweird.f32 %v227
  %vm376 = vweird.f32 %v369
  %vm377 = vmor %vm375, %vm376
  %v378 = vsel %vm377, %v369, %v374
  %v379 = vrsqrt.pop %v228
  %v380 = vmul.f32 %v379, %v228
  %v381 = vmul.f32 %v380, %v379
  %v382 = vmul.f32 0.5, %v381
  %v383 = vsub.f32 1.5, %v382
  %v384 = vmul.f32 %v379, %v383
  %vm385 = vweird.f32 %v228
  %vm386 = vweird.f32 %v379
  %vm387 = vmor %vm385, %vm386
  %v388 = vsel %vm387, %v379, %v384
  %v389 = vmul.f32 %v117, %v238
  %v390 = vmul.f32 %v118, %v248
  %v391 = vmul.f32 %v119, %v258
  %v392 = vmul.f32 %v120, %v268
  %v393 = vmul.f32 %v121, %v278
  %v394 = vmul.f32 %v122, %v288
  %v395 = vmul.f32 %v123, %v298
  %v396 = vmul.f32 %v124, %v308
  %v397 = vmul.f32 %v125, %v318
  %v398 = vmul.f32 %v126, %v328
  %v399 = vmul.f32 %v127, %v338
  %v400 = vmul.f32 %v128, %v348
  %v401 = vmul.f32 %v129, %v358
  %v402 = vmul.f32 %v130, %v368
  %v403 = vmul.f32 %v131, %v378
  %v404 = vmul.f32 %v132, %v388
  %v406 = vperm.slane %v43, 0
  %v408 = vmul.f32 %v389, %v406
  %v409 = vmul.f32 %v390, %v406
  %v410 = vmul.f32 %v391, %v406
  %v411 = vmul.f32 %v392, %v406
  %v412 = vmul.f32 %v393, %v406
  %v413 = vmul.f32 %v394, %v406
  %v414 = vmul.f32 %v395, %v406
  %v415 = vmul.f32 %v396, %v406
  %v416 = vmul.f32 %v397, %v406
  %v417 = vmul.f32 %v398, %v406
  %v418 = vmul.f32 %v399, %v406
  %v419 = vmul.f32 %v400, %v406
  %v420 = vmul.f32 %v401, %v406
  %v421 = vmul.f32 %v402, %v406
  %v422 = vmul.f32 %v403, %v406
  %v423 = vmul.f32 %v404, %v406
  %v425 = vperm.slane %v44, 0
  %v427 = vadd.f32 %v408, %v425
  %v428 = vadd.f32 %v409, %v425
  %v429 = vadd.f32 %v410, %v425
  %v430 = vadd.f32 %v411, %v425
  %v431 = vadd.f32 %v412, %v425
  %v432 = vadd.f32 %v413, %v425
  %v433 = vadd.f32 %v414, %v425
  %v434 = vadd.f32 %v415, %v425
  %v435 = vadd.f32 %v416, %v425
  %v436 = vadd.f32 %v417, %v425
  %v437 = vadd.f32 %v418, %v425
  %v438 = vadd.f32 %v419, %v425
  %v439 = vadd.f32 %v420, %v425
  %v440 = vadd.f32 %v421, %v425
  %v441 = vadd.f32 %v422, %v425
  %v442 = vadd.f32 %v423, %v425
  %v443 = vpack.c.bf16 %v428, %v427
  %v444 = vpack.c.bf16 %v430, %v429
  %v445 = vpack.c.bf16 %v432, %v431
  %v446 = vpack.c.bf16 %v434, %v433
  %v447 = vpack.c.bf16 %v436, %v435
  %v448 = vpack.c.bf16 %v438, %v437
  %v449 = vpack.c.bf16 %v440, %v439
  %v450 = vpack.c.bf16 %v442, %v441
  %v451 = vld [vmem:[%s3] sm:$0xf]
  %v452 = vld [vmem:[%s3 + $0x4] sm:$0xf]
  %v453 = vld [vmem:[%s3 + $0x8] sm:$0xf]
  %v454 = vld [vmem:[%s3 + $0xc] sm:$0xf]
  %v455 = vld [vmem:[%s4] sm:$0x1]
  %v457 = vperm.slane %v455, 0
  %v463 = vunpack.c.l.b16 %v451
  %v464 = vunpack.c.l.b16 %v452
  %v465 = vunpack.c.l.b16 %v453
  %v466 = vunpack.c.l.b16 %v454
  %v467 = vpack.c.b16 %v464, %v463
  %v468 = vpack.c.b16 %v466, %v465
  %v472 = vsel %vm45, %v443, 0
  %v475 = vsel %vm45, %v444, 0
  %v478 = vsel %vm45, %v445, 0
  %v481 = vsel %vm45, %v446, 0
  %v484 = vsel %vm45, %v447, 0
  %v487 = vsel %vm45, %v448, 0
  %v490 = vsel %vm45, %v449, 0
  %v493 = vsel %vm45, %v450, 0
  %495 = vmatpush.bf16.msra.mxu0 0
  %496 = vmatpush.bf16.msra.mxu0 0
  %497 = vmatpush.bf16.msra.mxu0 0
  %498 = vmatpush.bf16.msra.mxu0 0
  %499 = vmatpush.bf16.msra.mxu0 0
  %500 = vmatpush.bf16.msra.mxu0 0
  %501 = vmatpush.bf16.msra.mxu0 %v468
  %502 = vmatpush.bf16.msra.mxu0 %v467
  %503 = vmatmul.bf16.gmra.mxu0 %v472
  %v504 = vpop.f32.mrf.mxu0
  %v505 = vadd.f32 %v457, %v504
  %v506 = vpop.f32.mrf.mxu0
  %v507 = vadd.f32 %v457, %v506
  %508 = vmatmul.bf16.gmra.mxu0 %v475
  %v509 = vpop.f32.mrf.mxu0
  %v510 = vadd.f32 %v457, %v509
  %v511 = vpop.f32.mrf.mxu0
  %v512 = vadd.f32 %v457, %v511
  %513 = vmatmul.bf16.gmra.mxu0 %v478
  %v514 = vpop.f32.mrf.mxu0
  %v515 = vadd.f32 %v457, %v514
  %v516 = vpop.f32.mrf.mxu0
  %v517 = vadd.f32 %v457, %v516
  %518 = vmatmul.bf16.gmra.mxu0 %v481
  %v519 = vpop.f32.mrf.mxu0
  %v520 = vadd.f32 %v457, %v519
  %v521 = vpop.f32.mrf.mxu0
  %v522 = vadd.f32 %v457, %v521
  %523 = vmatmul.bf16.gmra.mxu0 %v484
  %v524 = vpop.f32.mrf.mxu0
  %v525 = vadd.f32 %v457, %v524
  %v526 = vpop.f32.mrf.mxu0
  %v527 = vadd.f32 %v457, %v526
  %528 = vmatmul.bf16.gmra.mxu0 %v487
  %v529 = vpop.f32.mrf.mxu0
  %v530 = vadd.f32 %v457, %v529
  %v531 = vpop.f32.mrf.mxu0
  %v532 = vadd.f32 %v457, %v531
  %533 = vmatmul.bf16.gmra.mxu0 %v490
  %v534 = vpop.f32.mrf.mxu0
  %v535 = vadd.f32 %v457, %v534
  %v536 = vpop.f32.mrf.mxu0
  %v537 = vadd.f32 %v457, %v536
  %538 = vmatmul.bf16.gmra.mxu0 %v493
  %v539 = vpop.f32.mrf.mxu0
  %v540 = vadd.f32 %v457, %v539
  %v541 = vpop.f32.mrf.mxu0
  %v542 = vadd.f32 %v457, %v541
  %543 = vdwg.mxu0
  %v544 = vmul.f32 %v505, 0.5
  %v545 = vmul.f32 %v507, 0.5
  %v546 = vmul.f32 %v510, 0.5
  %v547 = vmul.f32 %v512, 0.5
  %v548 = vmul.f32 %v515, 0.5
  %v549 = vmul.f32 %v517, 0.5
  %v550 = vmul.f32 %v520, 0.5
  %v551 = vmul.f32 %v522, 0.5
  %v552 = vmul.f32 %v525, 0.5
  %v553 = vmul.f32 %v527, 0.5
  %v554 = vmul.f32 %v530, 0.5
  %v555 = vmul.f32 %v532, 0.5
  %v556 = vmul.f32 %v535, 0.5
  %v557 = vmul.f32 %v537, 0.5
  %v558 = vmul.f32 %v540, 0.5
  %v559 = vmul.f32 %v542, 0.5
  %v560 = vmul.f32 %v505, 0.70710677
  %v561 = vmul.f32 %v507, 0.70710677
  %v562 = vmul.f32 %v510, 0.70710677
  %v563 = vmul.f32 %v512, 0.70710677
  %v564 = vmul.f32 %v515, 0.70710677
  %v565 = vmul.f32 %v517, 0.70710677
  %v566 = vmul.f32 %v520, 0.70710677
  %v567 = vmul.f32 %v522, 0.70710677
  %v568 = vmul.f32 %v525, 0.70710677
  %v569 = vmul.f32 %v527, 0.70710677
  %v570 = vmul.f32 %v530, 0.70710677
  %v571 = vmul.f32 %v532, 0.70710677
  %v572 = vmul.f32 %v535, 0.70710677
  %v573 = vmul.f32 %v537, 0.70710677
  %v574 = vmul.f32 %v540, 0.70710677
  %v575 = vmul.f32 %v542, 0.70710677
  %vm576 = vcmp.ge.f32.partialorder %v560, 0.0
  %vm577 = vcmp.ge.f32.partialorder %v561, 0.0
  %vm578 = vcmp.ge.f32.partialorder %v562, 0.0
  %vm579 = vcmp.ge.f32.partialorder %v563, 0.0
  %vm580 = vcmp.ge.f32.partialorder %v564, 0.0
  %vm581 = vcmp.ge.f32.partialorder %v565, 0.0
  %vm582 = vcmp.ge.f32.partialorder %v566, 0.0
  %vm583 = vcmp.ge.f32.partialorder %v567, 0.0
  %vm584 = vcmp.ge.f32.partialorder %v568, 0.0
  %vm585 = vcmp.ge.f32.partialorder %v569, 0.0
  %vm586 = vcmp.ge.f32.partialorder %v570, 0.0
  %vm587 = vcmp.ge.f32.partialorder %v571, 0.0
  %vm588 = vcmp.ge.f32.partialorder %v572, 0.0
  %vm589 = vcmp.ge.f32.partialorder %v573, 0.0
  %vm590 = vcmp.ge.f32.partialorder %v574, 0.0
  %vm591 = vcmp.ge.f32.partialorder %v575, 0.0
  %v592 = vsel %vm576, 1.0, -1.0
  %v593 = vsel %vm577, 1.0, -1.0
  %v594 = vsel %vm578, 1.0, -1.0
  %v595 = vsel %vm579, 1.0, -1.0
  %v596 = vsel %vm580, 1.0, -1.0
  %v597 = vsel %vm581, 1.0, -1.0
  %v598 = vsel %vm582, 1.0, -1.0
  %v599 = vsel %vm583, 1.0, -1.0
  %v600 = vsel %vm584, 1.0, -1.0
  %v601 = vsel %vm585, 1.0, -1.0
  %v602 = vsel %vm586, 1.0, -1.0
  %v603 = vsel %vm587, 1.0, -1.0
  %v604 = vsel %vm588, 1.0, -1.0
  %v605 = vsel %vm589, 1.0, -1.0
  %v606 = vsel %vm590, 1.0, -1.0
  %v607 = vsel %vm591, 1.0, -1.0
  %v608 = vand.u32 2147483647, %v560
  %v609 = vand.u32 2147483647, %v561
  %v610 = vand.u32 2147483647, %v562
  %v611 = vand.u32 2147483647, %v563
  %v612 = vand.u32 2147483647, %v564
  %v613 = vand.u32 2147483647, %v565
  %v614 = vand.u32 2147483647, %v566
  %v615 = vand.u32 2147483647, %v567
  %v616 = vand.u32 2147483647, %v568
  %v617 = vand.u32 2147483647, %v569
  %v618 = vand.u32 2147483647, %v570
  %v619 = vand.u32 2147483647, %v571
  %v620 = vand.u32 2147483647, %v572
  %v621 = vand.u32 2147483647, %v573
  %v622 = vand.u32 2147483647, %v574
  %v623 = vand.u32 2147483647, %v575
  %v624 = vmul.f32 %v608, 0.3275911
  %v625 = vmul.f32 %v609, 0.3275911
  %v626 = vmul.f32 %v610, 0.3275911
  %v627 = vmul.f32 %v611, 0.3275911
  %v628 = vmul.f32 %v612, 0.3275911
  %v629 = vmul.f32 %v613, 0.3275911
  %v630 = vmul.f32 %v614, 0.3275911
  %v631 = vmul.f32 %v615, 0.3275911
  %v632 = vmul.f32 %v616, 0.3275911
  %v633 = vmul.f32 %v617, 0.3275911
  %v634 = vmul.f32 %v618, 0.3275911
  %v635 = vmul.f32 %v619, 0.3275911
  %v636 = vmul.f32 %v620, 0.3275911
  %v637 = vmul.f32 %v621, 0.3275911
  %v638 = vmul.f32 %v622, 0.3275911
  %v639 = vmul.f32 %v623, 0.3275911
  %v640 = vadd.f32 %v624, 1.0
  %v641 = vadd.f32 %v625, 1.0
  %v642 = vadd.f32 %v626, 1.0
  %v643 = vadd.f32 %v627, 1.0
  %v644 = vadd.f32 %v628, 1.0
  %v645 = vadd.f32 %v629, 1.0
  %v646 = vadd.f32 %v630, 1.0
  %v647 = vadd.f32 %v631, 1.0
  %v648 = vadd.f32 %v632, 1.0
  %v649 = vadd.f32 %v633, 1.0
  %v650 = vadd.f32 %v634, 1.0
  %v651 = vadd.f32 %v635, 1.0
  %v652 = vadd.f32 %v636, 1.0
  %v653 = vadd.f32 %v637, 1.0
  %v654 = vadd.f32 %v638, 1.0
  %v655 = vadd.f32 %v639, 1.0
  %v656 = vrcp.pop %v640
  %v657 = vmul.f32 %v640, %v656
  %v658 = vsub.f32 1.0, %v657
  %v659 = vmul.f32 %v656, %v658
  %v660 = vadd.f32 %v656, %v659
  %vm661 = vweird.f32 %v640
  %vm662 = vweird.f32 %v656
  %vm663 = vmor %vm661, %vm662
  %v664 = vsel %vm663, %v656, %v660
  %v665 = vand.u32 2147483647, %v640
  %vm666 = vcmp.eq.f32.partialorder %v665, 8.507059e+37
  %v667 = vand.u32 %v640, 2147483648
  %v668 = vor.u32 1.1754944e-38, %v667
  %v669 = vsel %vm666, %v668, %v664
  %v670 = vmul.f32 1.0, %v669
  %v671 = vrcp.pop %v641
  %v672 = vmul.f32 %v641, %v671
  %v673 = vsub.f32 1.0, %v672
  %v674 = vmul.f32 %v671, %v673
  %v675 = vadd.f32 %v671, %v674
  %vm676 = vweird.f32 %v641
  %vm677 = vweird.f32 %v671
  %vm678 = vmor %vm676, %vm677
  %v679 = vsel %vm678, %v671, %v675
  %v680 = vand.u32 2147483647, %v641
  %vm681 = vcmp.eq.f32.partialorder %v680, 8.507059e+37
  %v682 = vand.u32 %v641, 2147483648
  %v683 = vor.u32 1.1754944e-38, %v682
  %v684 = vsel %vm681, %v683, %v679
  %v685 = vmul.f32 1.0, %v684
  %v686 = vrcp.pop %v642
  %v687 = vmul.f32 %v642, %v686
  %v688 = vsub.f32 1.0, %v687
  %v689 = vmul.f32 %v686, %v688
  %v690 = vadd.f32 %v686, %v689
  %vm691 = vweird.f32 %v642
  %vm692 = vweird.f32 %v686
  %vm693 = vmor %vm691, %vm692
  %v694 = vsel %vm693, %v686, %v690
  %v695 = vand.u32 2147483647, %v642
  %vm696 = vcmp.eq.f32.partialorder %v695, 8.507059e+37
  %v697 = vand.u32 %v642, 2147483648
  %v698 = vor.u32 1.1754944e-38, %v697
  %v699 = vsel %vm696, %v698, %v694
  %v700 = vmul.f32 1.0, %v699
  %v701 = vrcp.pop %v643
  %v702 = vmul.f32 %v643, %v701
  %v703 = vsub.f32 1.0, %v702
  %v704 = vmul.f32 %v701, %v703
  %v705 = vadd.f32 %v701, %v704
  %vm706 = vweird.f32 %v643
  %vm707 = vweird.f32 %v701
  %vm708 = vmor %vm706, %vm707
  %v709 = vsel %vm708, %v701, %v705
  %v710 = vand.u32 2147483647, %v643
  %vm711 = vcmp.eq.f32.partialorder %v710, 8.507059e+37
  %v712 = vand.u32 %v643, 2147483648
  %v713 = vor.u32 1.1754944e-38, %v712
  %v714 = vsel %vm711, %v713, %v709
  %v715 = vmul.f32 1.0, %v714
  %v716 = vrcp.pop %v644
  %v717 = vmul.f32 %v644, %v716
  %v718 = vsub.f32 1.0, %v717
  %v719 = vmul.f32 %v716, %v718
  %v720 = vadd.f32 %v716, %v719
  %vm721 = vweird.f32 %v644
  %vm722 = vweird.f32 %v716
  %vm723 = vmor %vm721, %vm722
  %v724 = vsel %vm723, %v716, %v720
  %v725 = vand.u32 2147483647, %v644
  %vm726 = vcmp.eq.f32.partialorder %v725, 8.507059e+37
  %v727 = vand.u32 %v644, 2147483648
  %v728 = vor.u32 1.1754944e-38, %v727
  %v729 = vsel %vm726, %v728, %v724
  %v730 = vmul.f32 1.0, %v729
  %v731 = vrcp.pop %v645
  %v732 = vmul.f32 %v645, %v731
  %v733 = vsub.f32 1.0, %v732
  %v734 = vmul.f32 %v731, %v733
  %v735 = vadd.f32 %v731, %v734
  %vm736 = vweird.f32 %v645
  %vm737 = vweird.f32 %v731
  %vm738 = vmor %vm736, %vm737
  %v739 = vsel %vm738, %v731, %v735
  %v740 = vand.u32 2147483647, %v645
  %vm741 = vcmp.eq.f32.partialorder %v740, 8.507059e+37
  %v742 = vand.u32 %v645, 2147483648
  %v743 = vor.u32 1.1754944e-38, %v742
  %v744 = vsel %vm741, %v743, %v739
  %v745 = vmul.f32 1.0, %v744
  %v746 = vrcp.pop %v646
  %v747 = vmul.f32 %v646, %v746
  %v748 = vsub.f32 1.0, %v747
  %v749 = vmul.f32 %v746, %v748
  %v750 = vadd.f32 %v746, %v749
  %vm751 = vweird.f32 %v646
  %vm752 = vweird.f32 %v746
  %vm753 = vmor %vm751, %vm752
  %v754 = vsel %vm753, %v746, %v750
  %v755 = vand.u32 2147483647, %v646
  %vm756 = vcmp.eq.f32.partialorder %v755, 8.507059e+37
  %v757 = vand.u32 %v646, 2147483648
  %v758 = vor.u32 1.1754944e-38, %v757
  %v759 = vsel %vm756, %v758, %v754
  %v760 = vmul.f32 1.0, %v759
  %v761 = vrcp.pop %v647
  %v762 = vmul.f32 %v647, %v761
  %v763 = vsub.f32 1.0, %v762
  %v764 = vmul.f32 %v761, %v763
  %v765 = vadd.f32 %v761, %v764
  %vm766 = vweird.f32 %v647
  %vm767 = vweird.f32 %v761
  %vm768 = vmor %vm766, %vm767
  %v769 = vsel %vm768, %v761, %v765
  %v770 = vand.u32 2147483647, %v647
  %vm771 = vcmp.eq.f32.partialorder %v770, 8.507059e+37
  %v772 = vand.u32 %v647, 2147483648
  %v773 = vor.u32 1.1754944e-38, %v772
  %v774 = vsel %vm771, %v773, %v769
  %v775 = vmul.f32 1.0, %v774
  %v776 = vrcp.pop %v648
  %v777 = vmul.f32 %v648, %v776
  %v778 = vsub.f32 1.0, %v777
  %v779 = vmul.f32 %v776, %v778
  %v780 = vadd.f32 %v776, %v779
  %vm781 = vweird.f32 %v648
  %vm782 = vweird.f32 %v776
  %vm783 = vmor %vm781, %vm782
  %v784 = vsel %vm783, %v776, %v780
  %v785 = vand.u32 2147483647, %v648
  %vm786 = vcmp.eq.f32.partialorder %v785, 8.507059e+37
  %v787 = vand.u32 %v648, 2147483648
  %v788 = vor.u32 1.1754944e-38, %v787
  %v789 = vsel %vm786, %v788, %v784
  %v790 = vmul.f32 1.0, %v789
  %v791 = vrcp.pop %v649
  %v792 = vmul.f32 %v649, %v791
  %v793 = vsub.f32 1.0, %v792
  %v794 = vmul.f32 %v791, %v793
  %v795 = vadd.f32 %v791, %v794
  %vm796 = vweird.f32 %v649
  %vm797 = vweird.f32 %v791
  %vm798 = vmor %vm796, %vm797
  %v799 = vsel %vm798, %v791, %v795
  %v800 = vand.u32 2147483647, %v649
  %vm801 = vcmp.eq.f32.partialorder %v800, 8.507059e+37
  %v802 = vand.u32 %v649, 2147483648
  %v803 = vor.u32 1.1754944e-38, %v802
  %v804 = vsel %vm801, %v803, %v799
  %v805 = vmul.f32 1.0, %v804
  %v806 = vrcp.pop %v650
  %v807 = vmul.f32 %v650, %v806
  %v808 = vsub.f32 1.0, %v807
  %v809 = vmul.f32 %v806, %v808
  %v810 = vadd.f32 %v806, %v809
  %vm811 = vweird.f32 %v650
  %vm812 = vweird.f32 %v806
  %vm813 = vmor %vm811, %vm812
  %v814 = vsel %vm813, %v806, %v810
  %v815 = vand.u32 2147483647, %v650
  %vm816 = vcmp.eq.f32.partialorder %v815, 8.507059e+37
  %v817 = vand.u32 %v650, 2147483648
  %v818 = vor.u32 1.1754944e-38, %v817
  %v819 = vsel %vm816, %v818, %v814
  %v820 = vmul.f32 1.0, %v819
  %v821 = vrcp.pop %v651
  %v822 = vmul.f32 %v651, %v821
  %v823 = vsub.f32 1.0, %v822
  %v824 = vmul.f32 %v821, %v823
  %v825 = vadd.f32 %v821, %v824
  %vm826 = vweird.f32 %v651
  %vm827 = vweird.f32 %v821
  %vm828 = vmor %vm826, %vm827
  %v829 = vsel %vm828, %v821, %v825
  %v830 = vand.u32 2147483647, %v651
  %vm831 = vcmp.eq.f32.partialorder %v830, 8.507059e+37
  %v832 = vand.u32 %v651, 2147483648
  %v833 = vor.u32 1.1754944e-38, %v832
  %v834 = vsel %vm831, %v833, %v829
  %v835 = vmul.f32 1.0, %v834
  %v836 = vrcp.pop %v652
  %v837 = vmul.f32 %v652, %v836
  %v838 = vsub.f32 1.0, %v837
  %v839 = vmul.f32 %v836, %v838
  %v840 = vadd.f32 %v836, %v839
  %vm841 = vweird.f32 %v652
  %vm842 = vweird.f32 %v836
  %vm843 = vmor %vm841, %vm842
  %v844 = vsel %vm843, %v836, %v840
  %v845 = vand.u32 2147483647, %v652
  %vm846 = vcmp.eq.f32.partialorder %v845, 8.507059e+37
  %v847 = vand.u32 %v652, 2147483648
  %v848 = vor.u32 1.1754944e-38, %v847
  %v849 = vsel %vm846, %v848, %v844
  %v850 = vmul.f32 1.0, %v849
  %v851 = vrcp.pop %v653
  %v852 = vmul.f32 %v653, %v851
  %v853 = vsub.f32 1.0, %v852
  %v854 = vmul.f32 %v851, %v853
  %v855 = vadd.f32 %v851, %v854
  %vm856 = vweird.f32 %v653
  %vm857 = vweird.f32 %v851
  %vm858 = vmor %vm856, %vm857
  %v859 = vsel %vm858, %v851, %v855
  %v860 = vand.u32 2147483647, %v653
  %vm861 = vcmp.eq.f32.partialorder %v860, 8.507059e+37
  %v862 = vand.u32 %v653, 2147483648
  %v863 = vor.u32 1.1754944e-38, %v862
  %v864 = vsel %vm861, %v863, %v859
  %v865 = vmul.f32 1.0, %v864
  %v866 = vrcp.pop %v654
  %v867 = vmul.f32 %v654, %v866
  %v868 = vsub.f32 1.0, %v867
  %v869 = vmul.f32 %v866, %v868
  %v870 = vadd.f32 %v866, %v869
  %vm871 = vweird.f32 %v654
  %vm872 = vweird.f32 %v866
  %vm873 = vmor %vm871, %vm872
  %v874 = vsel %vm873, %v866, %v870
  %v875 = vand.u32 2147483647, %v654
  %vm876 = vcmp.eq.f32.partialorder %v875, 8.507059e+37
  %v877 = vand.u32 %v654, 2147483648
  %v878 = vor.u32 1.1754944e-38, %v877
  %v879 = vsel %vm876, %v878, %v874
  %v880 = vmul.f32 1.0, %v879
  %v881 = vrcp.pop %v655
  %v882 = vmul.f32 %v655, %v881
  %v883 = vsub.f32 1.0, %v882
  %v884 = vmul.f32 %v881, %v883
  %v885 = vadd.f32 %v881, %v884
  %vm886 = vweird.f32 %v655
  %vm887 = vweird.f32 %v881
  %vm888 = vmor %vm886, %vm887
  %v889 = vsel %vm888, %v881, %v885
  %v890 = vand.u32 2147483647, %v655
  %vm891 = vcmp.eq.f32.partialorder %v890, 8.507059e+37
  %v892 = vand.u32 %v655, 2147483648
  %v893 = vor.u32 1.1754944e-38, %v892
  %v894 = vsel %vm891, %v893, %v889
  %v895 = vmul.f32 1.0, %v894
  %v896 = vmul.f32 %v670, 1.0614054
  %v897 = vmul.f32 %v685, 1.0614054
  %v898 = vmul.f32 %v700, 1.0614054
  %v899 = vmul.f32 %v715, 1.0614054
  %v900 = vmul.f32 %v730, 1.0614054
  %v901 = vmul.f32 %v745, 1.0614054
  %v902 = vmul.f32 %v760, 1.0614054
  %v903 = vmul.f32 %v775, 1.0614054
  %v904 = vmul.f32 %v790, 1.0614054
  %v905 = vmul.f32 %v805, 1.0614054
  %v906 = vmul.f32 %v820, 1.0614054
  %v907 = vmul.f32 %v835, 1.0614054
  %v908 = vmul.f32 %v850, 1.0614054
  %v909 = vmul.f32 %v865, 1.0614054
  %v910 = vmul.f32 %v880, 1.0614054
  %v911 = vmul.f32 %v895, 1.0614054
  %v912 = vadd.f32 %v896, -1.4531521
  %v913 = vadd.f32 %v897, -1.4531521
  %v914 = vadd.f32 %v898, -1.4531521
  %v915 = vadd.f32 %v899, -1.4531521
  %v916 = vadd.f32 %v900, -1.4531521
  %v917 = vadd.f32 %v901, -1.4531521
  %v918 = vadd.f32 %v902, -1.4531521
  %v919 = vadd.f32 %v903, -1.4531521
  %v920 = vadd.f32 %v904, -1.4531521
  %v921 = vadd.f32 %v905, -1.4531521
  %v922 = vadd.f32 %v906, -1.4531521
  %v923 = vadd.f32 %v907, -1.4531521
  %v924 = vadd.f32 %v908, -1.4531521
  %v925 = vadd.f32 %v909, -1.4531521
  %v926 = vadd.f32 %v910, -1.4531521
  %v927 = vadd.f32 %v911, -1.4531521
  %v928 = vmul.f32 %v912, %v670
  %v929 = vmul.f32 %v913, %v685
  %v930 = vmul.f32 %v914, %v700
  %v931 = vmul.f32 %v915, %v715
  %v932 = vmul.f32 %v916, %v730
  %v933 = vmul.f32 %v917, %v745
  %v934 = vmul.f32 %v918, %v760
  %v935 = vmul.f32 %v919, %v775
  %v936 = vmul.f32 %v920, %v790
  %v937 = vmul.f32 %v921, %v805
  %v938 = vmul.f32 %v922, %v820
  %v939 = vmul.f32 %v923, %v835
  %v940 = vmul.f32 %v924, %v850
  %v941 = vmul.f32 %v925, %v865
  %v942 = vmul.f32 %v926, %v880
  %v943 = vmul.f32 %v927, %v895
  %v944 = vadd.f32 %v928, 1.4214138
  %v945 = vadd.f32 %v929, 1.4214138
  %v946 = vadd.f32 %v930, 1.4214138
  %v947 = vadd.f32 %v931, 1.4214138
  %v948 = vadd.f32 %v932, 1.4214138
  %v949 = vadd.f32 %v933, 1.4214138
  %v950 = vadd.f32 %v934, 1.4214138
  %v951 = vadd.f32 %v935, 1.4214138
  %v952 = vadd.f32 %v936, 1.4214138
  %v953 = vadd.f32 %v937, 1.4214138
  %v954 = vadd.f32 %v938, 1.4214138
  %v955 = vadd.f32 %v939, 1.4214138
  %v956 = vadd.f32 %v940, 1.4214138
  %v957 = vadd.f32 %v941, 1.4214138
  %v958 = vadd.f32 %v942, 1.4214138
  %v959 = vadd.f32 %v943, 1.4214138
  %v960 = vmul.f32 %v944, %v670
  %v961 = vmul.f32 %v945, %v685
  %v962 = vmul.f32 %v946, %v700
  %v963 = vmul.f32 %v947, %v715
  %v964 = vmul.f32 %v948, %v730
  %v965 = vmul.f32 %v949, %v745
  %v966 = vmul.f32 %v950, %v760
  %v967 = vmul.f32 %v951, %v775
  %v968 = vmul.f32 %v952, %v790
  %v969 = vmul.f32 %v953, %v805
  %v970 = vmul.f32 %v954, %v820
  %v971 = vmul.f32 %v955, %v835
  %v972 = vmul.f32 %v956, %v850
  %v973 = vmul.f32 %v957, %v865
  %v974 = vmul.f32 %v958, %v880
  %v975 = vmul.f32 %v959, %v895
  %v976 = vadd.f32 %v960, -0.28449672
  %v977 = vadd.f32 %v961, -0.28449672
  %v978 = vadd.f32 %v962, -0.28449672
  %v979 = vadd.f32 %v963, -0.28449672
  %v980 = vadd.f32 %v964, -0.28449672
  %v981 = vadd.f32 %v965, -0.28449672
  %v982 = vadd.f32 %v966, -0.28449672
  %v983 = vadd.f32 %v967, -0.28449672
  %v984 = vadd.f32 %v968, -0.28449672
  %v985 = vadd.f32 %v969, -0.28449672
  %v986 = vadd.f32 %v970, -0.28449672
  %v987 = vadd.f32 %v971, -0.28449672
  %v988 = vadd.f32 %v972, -0.28449672
  %v989 = vadd.f32 %v973, -0.28449672
  %v990 = vadd.f32 %v974, -0.28449672
  %v991 = vadd.f32 %v975, -0.28449672
  %v992 = vmul.f32 %v976, %v670
  %v993 = vmul.f32 %v977, %v685
  %v994 = vmul.f32 %v978, %v700
  %v995 = vmul.f32 %v979, %v715
  %v996 = vmul.f32 %v980, %v730
  %v997 = vmul.f32 %v981, %v745
  %v998 = vmul.f32 %v982, %v760
  %v999 = vmul.f32 %v983, %v775
  %v1000 = vmul.f32 %v984, %v790
  %v1001 = vmul.f32 %v985, %v805
  %v1002 = vmul.f32 %v986, %v820
  %v1003 = vmul.f32 %v987, %v835
  %v1004 = vmul.f32 %v988, %v850
  %v1005 = vmul.f32 %v989, %v865
  %v1006 = vmul.f32 %v990, %v880
  %v1007 = vmul.f32 %v991, %v895
  %v1008 = vadd.f32 %v992, 0.2548296
  %v1009 = vadd.f32 %v993, 0.2548296
  %v1010 = vadd.f32 %v994, 0.2548296
  %v1011 = vadd.f32 %v995, 0.2548296
  %v1012 = vadd.f32 %v996, 0.2548296
  %v1013 = vadd.f32 %v997, 0.2548296
  %v1014 = vadd.f32 %v998, 0.2548296
  %v1015 = vadd.f32 %v999, 0.2548296
  %v1016 = vadd.f32 %v1000, 0.2548296
  %v1017 = vadd.f32 %v1001, 0.2548296
  %v1018 = vadd.f32 %v1002, 0.2548296
  %v1019 = vadd.f32 %v1003, 0.2548296
  %v1020 = vadd.f32 %v1004, 0.2548296
  %v1021 = vadd.f32 %v1005, 0.2548296
  %v1022 = vadd.f32 %v1006, 0.2548296
  %v1023 = vadd.f32 %v1007, 0.2548296
  %v1024 = vmul.f32 %v1008, %v670
  %v1025 = vmul.f32 %v1009, %v685
  %v1026 = vmul.f32 %v1010, %v700
  %v1027 = vmul.f32 %v1011, %v715
  %v1028 = vmul.f32 %v1012, %v730
  %v1029 = vmul.f32 %v1013, %v745
  %v1030 = vmul.f32 %v1014, %v760
  %v1031 = vmul.f32 %v1015, %v775
  %v1032 = vmul.f32 %v1016, %v790
  %v1033 = vmul.f32 %v1017, %v805
  %v1034 = vmul.f32 %v1018, %v820
  %v1035 = vmul.f32 %v1019, %v835
  %v1036 = vmul.f32 %v1020, %v850
  %v1037 = vmul.f32 %v1021, %v865
  %v1038 = vmul.f32 %v1022, %v880
  %v1039 = vmul.f32 %v1023, %v895
  %v1040 = vsub.f32 0.0, %v608
  %v1041 = vsub.f32 0.0, %v609
  %v1042 = vsub.f32 0.0, %v610
  %v1043 = vsub.f32 0.0, %v611
  %v1044 = vsub.f32 0.0, %v612
  %v1045 = vsub.f32 0.0, %v613
  %v1046 = vsub.f32 0.0, %v614
  %v1047 = vsub.f32 0.0, %v615
  %v1048 = vsub.f32 0.0, %v616
  %v1049 = vsub.f32 0.0, %v617
  %v1050 = vsub.f32 0.0, %v618
  %v1051 = vsub.f32 0.0, %v619
  %v1052 = vsub.f32 0.0, %v620
  %v1053 = vsub.f32 0.0, %v621
  %v1054 = vsub.f32 0.0, %v622
  %v1055 = vsub.f32 0.0, %v623
  %v1056 = vmul.f32 %v1040, %v608
  %v1057 = vmul.f32 %v1041, %v609
  %v1058 = vmul.f32 %v1042, %v610
  %v1059 = vmul.f32 %v1043, %v611
  %v1060 = vmul.f32 %v1044, %v612
  %v1061 = vmul.f32 %v1045, %v613
  %v1062 = vmul.f32 %v1046, %v614
  %v1063 = vmul.f32 %v1047, %v615
  %v1064 = vmul.f32 %v1048, %v616
  %v1065 = vmul.f32 %v1049, %v617
  %v1066 = vmul.f32 %v1050, %v618
  %v1067 = vmul.f32 %v1051, %v619
  %v1068 = vmul.f32 %v1052, %v620
  %v1069 = vmul.f32 %v1053, %v621
  %v1070 = vmul.f32 %v1054, %v622
  %v1071 = vmul.f32 %v1055, %v623
  %v1072 = vmul.f32 %v1056, 1.442695
  %v1073 = vpow.pop %v1072
  %v1074 = vmul.f32 %v1057, 1.442695
  %v1075 = vpow.pop %v1074
  %v1076 = vmul.f32 %v1058, 1.442695
  %v1077 = vpow.pop %v1076
  %v1078 = vmul.f32 %v1059, 1.442695
  %v1079 = vpow.pop %v1078
  %v1080 = vmul.f32 %v1060, 1.442695
  %v1081 = vpow.pop %v1080
  %v1082 = vmul.f32 %v1061, 1.442695
  %v1083 = vpow.pop %v1082
  %v1084 = vmul.f32 %v1062, 1.442695
  %v1085 = vpow.pop %v1084
  %v1086 = vmul.f32 %v1063, 1.442695
  %v1087 = vpow.pop %v1086
  %v1088 = vmul.f32 %v1064, 1.442695
  %v1089 = vpow.pop %v1088
  %v1090 = vmul.f32 %v1065, 1.442695
  %v1091 = vpow.pop %v1090
  %v1092 = vmul.f32 %v1066, 1.442695
  %v1093 = vpow.pop %v1092
  %v1094 = vmul.f32 %v1067, 1.442695
  %v1095 = vpow.pop %v1094
  %v1096 = vmul.f32 %v1068, 1.442695
  %v1097 = vpow.pop %v1096
  %v1098 = vmul.f32 %v1069, 1.442695
  %v1099 = vpow.pop %v1098
  %v1100 = vmul.f32 %v1070, 1.442695
  %v1101 = vpow.pop %v1100
  %v1102 = vmul.f32 %v1071, 1.442695
  %v1103 = vpow.pop %v1102
  %v1104 = vmul.f32 %v1024, %v1073
  %v1105 = vmul.f32 %v1025, %v1075
  %v1106 = vmul.f32 %v1026, %v1077
  %v1107 = vmul.f32 %v1027, %v1079
  %v1108 = vmul.f32 %v1028, %v1081
  %v1109 = vmul.f32 %v1029, %v1083
  %v1110 = vmul.f32 %v1030, %v1085
  %v1111 = vmul.f32 %v1031, %v1087
  %v1112 = vmul.f32 %v1032, %v1089
  %v1113 = vmul.f32 %v1033, %v1091
  %v1114 = vmul.f32 %v1034, %v1093
  %v1115 = vmul.f32 %v1035, %v1095
  %v1116 = vmul.f32 %v1036, %v1097
  %v1117 = vmul.f32 %v1037, %v1099
  %v1118 = vmul.f32 %v1038, %v1101
  %v1119 = vmul.f32 %v1039, %v1103
  %v1120 = vsub.f32 1.0, %v1104
  %v1121 = vsub.f32 1.0, %v1105
  %v1122 = vsub.f32 1.0, %v1106
  %v1123 = vsub.f32 1.0, %v1107
  %v1124 = vsub.f32 1.0, %v1108
  %v1125 = vsub.f32 1.0, %v1109
  %v1126 = vsub.f32 1.0, %v1110
  %v1127 = vsub.f32 1.0, %v1111
  %v1128 = vsub.f32 1.0, %v1112
  %v1129 = vsub.f32 1.0, %v1113
  %v1130 = vsub.f32 1.0, %v1114
  %v1131 = vsub.f32 1.0, %v1115
  %v1132 = vsub.f32 1.0, %v1116
  %v1133 = vsub.f32 1.0, %v1117
  %v1134 = vsub.f32 1.0, %v1118
  %v1135 = vsub.f32 1.0, %v1119
  %v1136 = vmul.f32 %v592, %v1120
  %v1137 = vmul.f32 %v593, %v1121
  %v1138 = vmul.f32 %v594, %v1122
  %v1139 = vmul.f32 %v595, %v1123
  %v1140 = vmul.f32 %v596, %v1124
  %v1141 = vmul.f32 %v597, %v1125
  %v1142 = vmul.f32 %v598, %v1126
  %v1143 = vmul.f32 %v599, %v1127
  %v1144 = vmul.f32 %v600, %v1128
  %v1145 = vmul.f32 %v601, %v1129
  %v1146 = vmul.f32 %v602, %v1130
  %v1147 = vmul.f32 %v603, %v1131
  %v1148 = vmul.f32 %v604, %v1132
  %v1149 = vmul.f32 %v605, %v1133
  %v1150 = vmul.f32 %v606, %v1134
  %v1151 = vmul.f32 %v607, %v1135
  %v1152 = vadd.f32 %v1136, 1.0
  %v1153 = vadd.f32 %v1137, 1.0
  %v1154 = vadd.f32 %v1138, 1.0
  %v1155 = vadd.f32 %v1139, 1.0
  %v1156 = vadd.f32 %v1140, 1.0
  %v1157 = vadd.f32 %v1141, 1.0
  %v1158 = vadd.f32 %v1142, 1.0
  %v1159 = vadd.f32 %v1143, 1.0
  %v1160 = vadd.f32 %v1144, 1.0
  %v1161 = vadd.f32 %v1145, 1.0
  %v1162 = vadd.f32 %v1146, 1.0
  %v1163 = vadd.f32 %v1147, 1.0
  %v1164 = vadd.f32 %v1148, 1.0
  %v1165 = vadd.f32 %v1149, 1.0
  %v1166 = vadd.f32 %v1150, 1.0
  %v1167 = vadd.f32 %v1151, 1.0
  %v1168 = vmul.f32 %v544, %v1152
  %v1169 = vmul.f32 %v545, %v1153
  %v1170 = vmul.f32 %v546, %v1154
  %v1171 = vmul.f32 %v547, %v1155
  %v1172 = vmul.f32 %v548, %v1156
  %v1173 = vmul.f32 %v549, %v1157
  %v1174 = vmul.f32 %v550, %v1158
  %v1175 = vmul.f32 %v551, %v1159
  %v1176 = vmul.f32 %v552, %v1160
  %v1177 = vmul.f32 %v553, %v1161
  %v1178 = vmul.f32 %v554, %v1162
  %v1179 = vmul.f32 %v555, %v1163
  %v1180 = vmul.f32 %v556, %v1164
  %v1181 = vmul.f32 %v557, %v1165
  %v1182 = vmul.f32 %v558, %v1166
  %v1183 = vmul.f32 %v559, %v1167
  %v1184 = vpack.c.bf16 %v1169, %v1168
  %v1185 = vpack.c.bf16 %v1171, %v1170
  %v1186 = vpack.c.bf16 %v1173, %v1172
  %v1187 = vpack.c.bf16 %v1175, %v1174
  %v1188 = vpack.c.bf16 %v1177, %v1176
  %v1189 = vpack.c.bf16 %v1179, %v1178
  %v1190 = vpack.c.bf16 %v1181, %v1180
  %v1191 = vpack.c.bf16 %v1183, %v1182
  %v1192 = vld [vmem:[%s5] sm:$0xf]
  %v1193 = vld [vmem:[%s5 + $0x4] sm:$0xf]
  %v1194 = vld [vmem:[%s5 + $0x8] sm:$0xf]
  %v1195 = vld [vmem:[%s5 + $0xc] sm:$0xf]
  %v1196 = vld [vmem:[%s5 + $0x10] sm:$0xf]
  %v1197 = vld [vmem:[%s5 + $0x14] sm:$0xf]
  %v1198 = vld [vmem:[%s5 + $0x18] sm:$0xf]
  %v1199 = vld [vmem:[%s5 + $0x1c] sm:$0xf]
  %v1200 = vld [vmem:[%s5 + $0x20] sm:$0xf]
  %v1201 = vld [vmem:[%s5 + $0x24] sm:$0xf]
  %v1202 = vld [vmem:[%s5 + $0x28] sm:$0xf]
  %v1203 = vld [vmem:[%s5 + $0x2c] sm:$0xf]
  %v1204 = vld [vmem:[%s5 + $0x30] sm:$0xf]
  %v1205 = vld [vmem:[%s5 + $0x34] sm:$0xf]
  %v1206 = vld [vmem:[%s5 + $0x38] sm:$0xf]
  %v1207 = vld [vmem:[%s5 + $0x3c] sm:$0xf]
  %v1208 = vld [vmem:[%s6] sm:$0x1]
  %v1210 = vperm.slane %v1208, 0
  %v1228 = vunpack.c.l.b16 %v1192
  %v1229 = vunpack.c.l.b16 %v1193
  %v1230 = vunpack.c.l.b16 %v1194
  %v1231 = vunpack.c.l.b16 %v1195
  %v1232 = vunpack.c.l.b16 %v1196
  %v1233 = vunpack.c.l.b16 %v1197
  %v1234 = vunpack.c.l.b16 %v1198
  %v1235 = vunpack.c.l.b16 %v1199
  %v1236 = vunpack.c.l.b16 %v1200
  %v1237 = vunpack.c.l.b16 %v1201
  %v1238 = vunpack.c.l.b16 %v1202
  %v1239 = vunpack.c.l.b16 %v1203
  %v1240 = vunpack.c.l.b16 %v1204
  %v1241 = vunpack.c.l.b16 %v1205
  %v1242 = vunpack.c.l.b16 %v1206
  %v1243 = vunpack.c.l.b16 %v1207
  %v1244 = vpack.c.b16 %v1229, %v1228
  %v1245 = vpack.c.b16 %v1231, %v1230
  %v1246 = vpack.c.b16 %v1233, %v1232
  %v1247 = vpack.c.b16 %v1235, %v1234
  %v1248 = vpack.c.b16 %v1237, %v1236
  %v1249 = vpack.c.b16 %v1239, %v1238
  %v1250 = vpack.c.b16 %v1241, %v1240
  %v1251 = vpack.c.b16 %v1243, %v1242
  %1260 = vmatpush.bf16.msra.mxu0 %v1251
  %1261 = vmatpush.bf16.msra.mxu0 %v1250
  %1262 = vmatpush.bf16.msra.mxu0 %v1249
  %1263 = vmatpush.bf16.msra.mxu0 %v1248
  %1264 = vmatpush.bf16.msra.mxu0 %v1247
  %1265 = vmatpush.bf16.msra.mxu0 %v1246
  %1266 = vmatpush.bf16.msra.mxu0 %v1245
  %1267 = vmatpush.bf16.msra.mxu0 %v1244
  %1268 = vmatmul.bf16.gmra.mxu0 %v1184
  %v1269 = vpop.f32.mrf.mxu0
  %v1270 = vadd.f32 %v1210, %v1269
  %v1271 = vpop.f32.mrf.mxu0
  %v1272 = vadd.f32 %v1210, %v1271
  %1273 = vmatmul.bf16.gmra.mxu0 %v1185
  %v1274 = vpop.f32.mrf.mxu0
  %v1275 = vadd.f32 %v1210, %v1274
  %v1276 = vpop.f32.mrf.mxu0
  %v1277 = vadd.f32 %v1210, %v1276
  %1278 = vmatmul.bf16.gmra.mxu0 %v1186
  %v1279 = vpop.f32.mrf.mxu0
  %v1280 = vadd.f32 %v1210, %v1279
  %v1281 = vpop.f32.mrf.mxu0
  %v1282 = vadd.f32 %v1210, %v1281
  %1283 = vmatmul.bf16.gmra.mxu0 %v1187
  %v1284 = vpop.f32.mrf.mxu0
  %v1285 = vadd.f32 %v1210, %v1284
  %v1286 = vpop.f32.mrf.mxu0
  %v1287 = vadd.f32 %v1210, %v1286
  %1288 = vmatmul.bf16.gmra.mxu0 %v1188
  %v1289 = vpop.f32.mrf.mxu0
  %v1290 = vadd.f32 %v1210, %v1289
  %v1291 = vpop.f32.mrf.mxu0
  %v1292 = vadd.f32 %v1210, %v1291
  %1293 = vmatmul.bf16.gmra.mxu0 %v1189
  %v1294 = vpop.f32.mrf.mxu0
  %v1295 = vadd.f32 %v1210, %v1294
  %v1296 = vpop.f32.mrf.mxu0
  %v1297 = vadd.f32 %v1210, %v1296
  %1298 = vmatmul.bf16.gmra.mxu0 %v1190
  %v1299 = vpop.f32.mrf.mxu0
  %v1300 = vadd.f32 %v1210, %v1299
  %v1301 = vpop.f32.mrf.mxu0
  %v1302 = vadd.f32 %v1210, %v1301
  %1303 = vmatmul.bf16.gmra.mxu0 %v1191
  %v1304 = vpop.f32.mrf.mxu0
  %v1305 = vadd.f32 %v1210, %v1304
  %v1306 = vpop.f32.mrf.mxu0
  %v1307 = vadd.f32 %v1210, %v1306
  %1308 = vdwg.mxu0
  %v1309 = vadd.f32 %v1270, %v27
  %v1310 = vadd.f32 %v1272, %v28
  %v1311 = vadd.f32 %v1275, %v29
  %v1312 = vadd.f32 %v1277, %v30
  %v1313 = vadd.f32 %v1280, %v31
  %v1314 = vadd.f32 %v1282, %v32
  %v1315 = vadd.f32 %v1285, %v33
  %v1316 = vadd.f32 %v1287, %v34
  %v1317 = vadd.f32 %v1290, %v35
  %v1318 = vadd.f32 %v1292, %v36
  %v1319 = vadd.f32 %v1295, %v37
  %v1320 = vadd.f32 %v1297, %v38
  %v1321 = vadd.f32 %v1300, %v39
  %v1322 = vadd.f32 %v1302, %v40
  %v1323 = vadd.f32 %v1305, %v41
  %v1324 = vadd.f32 %v1307, %v42
  %1325 = vst.msk [vmem:[%s7] sm:$0xff] %vm45, %v1309
  %1326 = vst.msk [vmem:[%s7 + $0x8] sm:$0xff] %vm45, %v1310
  %1327 = vst.msk [vmem:[%s7 + $0x10] sm:$0xff] %vm45, %v1311
  %1328 = vst.msk [vmem:[%s7 + $0x18] sm:$0xff] %vm45, %v1312
  %1329 = vst.msk [vmem:[%s7 + $0x20] sm:$0xff] %vm45, %v1313
  %1330 = vst.msk [vmem:[%s7 + $0x28] sm:$0xff] %vm45, %v1314
  %1331 = vst.msk [vmem:[%s7 + $0x30] sm:$0xff] %vm45, %v1315
  %1332 = vst.msk [vmem:[%s7 + $0x38] sm:$0xff] %vm45, %v1316
  %1333 = vst.msk [vmem:[%s7 + $0x40] sm:$0xff] %vm45, %v1317
  %1334 = vst.msk [vmem:[%s7 + $0x48] sm:$0xff] %vm45, %v1318
  %1335 = vst.msk [vmem:[%s7 + $0x50] sm:$0xff] %vm45, %v1319
  %1336 = vst.msk [vmem:[%s7 + $0x58] sm:$0xff] %vm45, %v1320
  %1337 = vst.msk [vmem:[%s7 + $0x60] sm:$0xff] %vm45, %v1321
  %1338 = vst.msk [vmem:[%s7 + $0x68] sm:$0xff] %vm45, %v1322
  %1339 = vst.msk [vmem:[%s7 + $0x70] sm:$0xff] %vm45, %v1323
  %1340 = vst.msk [vmem:[%s7 + $0x78] sm:$0xff] %vm45, %v1324
  // Predicated region
  $region30: #{fused_block_forward.7} parent=0 // pred_check
    _
  $region31: #{fused_block_forward.7} parent=0 // pred_check_branch
    %1342 = sbr.rel (0) target = $region33
  $region32: #{fused_block_forward.7} parent=0 // pred_region
    _
  $region33: #{fused_block_forward.7} parent=0 // pred_fallthru
    _
  // Predicated region
  $region34: #{fused_block_forward.7} parent=0 // pred_check
    _
  $region35: #{fused_block_forward.7} parent=0 // pred_check_branch
    %1344 = sbr.rel (0) target = $region37
  $region36: #{fused_block_forward.7} parent=0 // pred_region
    _
  $region37: #{fused_block_forward.7} parent=0 // pred_fallthru
    _

</llo_original>
